<compile_context>
chip_gen: v5e
topology: v5e:2x2
jax: 0.10.0
libtpu: 0.0.40
codegen_flags: <defaults>
</compile_context>

<pallas_src>
import functools

import jax
import jax.numpy as jnp
from jax.experimental import pallas as pl
from jax.experimental.pallas import tpu as pltpu

EPS = 1e-12


def _fused_kernel(x_ref, w1_ref, b1_ref, res_ref, g_ref, beta_ref, w2_ref, b2_ref, o_ref):
    # Linear 1: [tm, 1024] @ [1024, 256]  — bf16 operands, f32 accumulation (MXU).
    x_bf = x_ref[...].astype(jnp.bfloat16)
    h = jnp.dot(x_bf, w1_ref[...], preferred_element_type=jnp.float32)
    h = h + b1_ref[...]

    # Dropout(p=0.1) in eval/inference mode is the identity.
    # TODO(synk): training-mode dropout (pltpu.prng_random_bits mask) not implemented.

    # Residual add (f32).
    z = h + res_ref[...]

    # LayerNorm over last dim (256), eps=1e-12, affine — single-pass sum-based stats in f32.
    inv_n = 1.0 / z.shape[-1]
    s = jnp.sum(z, axis=-1, keepdims=True)
    ss = jnp.sum(z * z, axis=-1, keepdims=True)
    mean = s * inv_n
    var = jnp.maximum(ss * inv_n - mean * mean, 0.0)
    zn = (z - mean) * jax.lax.rsqrt(var + EPS)
    zn = zn * g_ref[...] + beta_ref[...]

    # Linear 2: [tm, 256] @ [256, 256] — bf16 operands, f32 accumulation (MXU).
    out = jnp.dot(zn.astype(jnp.bfloat16), w2_ref[...], preferred_element_type=jnp.float32)
    out = out + b2_ref[...]
    o_ref[...] = out.astype(o_ref.dtype)


def prepare_params(w1, b1, gamma, beta, w2, b2):
    """One-time weight prep (outside the hot path): transpose to (in, out), cast to bf16."""
    h_mid = w1.shape[0]
    return (
        jnp.asarray(w1.T, dtype=jnp.bfloat16),                      # (1024, 256)
        jnp.asarray(b1, dtype=jnp.float32).reshape(1, h_mid),
        jnp.asarray(gamma, dtype=jnp.float32).reshape(1, h_mid),
        jnp.asarray(beta, dtype=jnp.float32).reshape(1, h_mid),
        jnp.asarray(w2.T, dtype=jnp.bfloat16),                      # (256, 256)
        jnp.asarray(b2, dtype=jnp.float32).reshape(1, h_mid),
    )


@functools.partial(jax.jit, static_argnames=("tm",))
def fused_forward(x319, x317, params, *, tm=192):
    # x319: [B, S, 1024], x317: [B, S, 256]  (B=1 in the module spec)
    w1_t, b1, gamma, beta, w2_t, b2 = params
    B, S, H_in = x319.shape
    H_mid = x317.shape[-1]

    rows = B * S
    x = x319.reshape(rows, H_in)
    res = x317.reshape(rows, H_mid)

    # Pad the row dim to a multiple of tm so no tail rows are dropped.
    n_blocks = pl.cdiv(rows, tm)
    rows_p = n_blocks * tm
    if rows_p != rows:
        pad = rows_p - rows
        x = jnp.pad(x, ((0, pad), (0, 0)))
        res = jnp.pad(res, ((0, pad), (0, 0)))

    cost = pl.CostEstimate(
        flops=2 * rows * H_in * H_mid + 2 * rows * H_mid * H_mid,
        transcendentals=rows,  # one rsqrt per row
        bytes_accessed=(
            rows * H_in * 4            # x (f32)
            + 2 * rows * H_mid * 4     # residual + output (f32)
            + H_in * H_mid * 2         # W1^T (bf16)
            + H_mid * H_mid * 2        # W2^T (bf16)
            + 4 * H_mid * 4            # b1, gamma, beta, b2
        ),
    )

    out = pl.pallas_call(
        _fused_kernel,
        out_shape=jax.ShapeDtypeStruct((rows_p, H_mid), x319.dtype),
        grid_spec=pltpu.PrefetchScalarGridSpec(
            num_scalar_prefetch=0,
            grid=(n_blocks,),
            in_specs=[
                pl.BlockSpec((tm, H_in), lambda i: (i, 0)),      # x tile
                pl.BlockSpec((H_in, H_mid), lambda i: (0, 0)),   # W1^T (bf16, grid-invariant)
                pl.BlockSpec((1, H_mid), lambda i: (0, 0)),      # b1
                pl.BlockSpec((tm, H_mid), lambda i: (i, 0)),     # residual tile
                pl.BlockSpec((1, H_mid), lambda i: (0, 0)),      # gamma
                pl.BlockSpec((1, H_mid), lambda i: (0, 0)),      # beta
                pl.BlockSpec((H_mid, H_mid), lambda i: (0, 0)),  # W2^T (bf16, grid-invariant)
                pl.BlockSpec((1, H_mid), lambda i: (0, 0)),      # b2
            ],
            out_specs=pl.BlockSpec((tm, H_mid), lambda i: (i, 0)),
        ),
        compiler_params=pltpu.CompilerParams(
            dimension_semantics=("parallel",),
        ),
        cost_estimate=cost,
    )(x, w1_t, b1, res, gamma, beta, w2_t, b2)

    out = out[:rows]
    return out.reshape(B, S, H_mid)


def reference_forward(x319, x317, w1, b1, gamma, beta, w2, b2):
    # Pure f32 reference mirroring the PyTorch module (dropout in eval = identity).
    h = jnp.einsum("bsh,oh->bso", x319, w1) + b1
    z = h + x317
    mean = jnp.mean(z, axis=-1, keepdims=True)
    var = jnp.mean((z - mean) ** 2, axis=-1, keepdims=True)
    zn = (z - mean) / jnp.sqrt(var + EPS)
    zn = zn * gamma + beta
    return jnp.einsum("bso,po->bsp", zn, w2) + b2


if __name__ == "__main__":
    key = jax.random.PRNGKey(0)
    ks = jax.random.split(key, 8)

    S, H_IN, H_MID = 384, 1024, 256  # hidden dims fixed by the module's Linear layers

    x319 = jax.random.normal(ks[0], (1, S, H_IN), dtype=jnp.float32)
    x317 = jax.random.normal(ks[1], (1, S, H_MID), dtype=jnp.float32)

    # Deterministic synthetic parameters (shapes from the module's __init__).
    w1 = jax.random.normal(ks[2], (H_MID, H_IN), dtype=jnp.float32) * 0.02   # Linear42 weight
    b1 = jax.random.normal(ks[3], (H_MID,), dtype=jnp.float32) * 0.02        # Linear42 bias
    gamma = jnp.ones((H_MID,), dtype=jnp.float32) + 0.01 * jax.random.normal(ks[4], (H_MID,))
    beta = 0.01 * jax.random.normal(ks[5], (H_MID,), dtype=jnp.float32)
    w2 = jax.random.normal(ks[6], (H_MID, H_MID), dtype=jnp.float32) * 0.02  # Linear43 weight
    b2 = jax.random.normal(ks[7], (H_MID,), dtype=jnp.float32) * 0.02        # Linear43 bias

    params = prepare_params(w1, b1, gamma, beta, w2, b2)   # one-time weight prep
    jax.block_until_ready(params)

    out = fused_forward(x319, x317, params)
    jax.block_until_ready(out)

    ref = reference_forward(x319, x317, w1, b1, gamma, beta, w2, b2)
    assert out.shape == (1, S, H_MID), out.shape
    # bf16 matmul operands with f32 accumulation -> ~1e-3-relative error vs f32 reference.
    assert jnp.allclose(out, ref, atol=5e-2, rtol=5e-2), float(jnp.max(jnp.abs(out - ref)))

    print("KERNEL_OK")
</pallas_src>

<mosaic_0001>
module attributes {stable_mosaic.version = 11 : i64} {
  func.func @_fused_kernel(%arg0: i32, %arg1: memref<192x1024xf32, #tpu.memory_space<vmem>>, %arg2: memref<1024x256xbf16, #tpu.memory_space<vmem>>, %arg3: memref<1x256xf32, #tpu.memory_space<vmem>>, %arg4: memref<192x256xf32, #tpu.memory_space<vmem>>, %arg5: memref<1x256xf32, #tpu.memory_space<vmem>>, %arg6: memref<1x256xf32, #tpu.memory_space<vmem>>, %arg7: memref<256x256xbf16, #tpu.memory_space<vmem>>, %arg8: memref<1x256xf32, #tpu.memory_space<vmem>>, %arg9: memref<192x256xf32, #tpu.memory_space<vmem>>) attributes {dimension_semantics = [#tpu.dimension_semantics<parallel>], iteration_bounds = array<i64: 2>, scalar_prefetch = 0 : i64, scratch_operands = 0 : i64, tpu.core_type = #tpu.core_type<tc>, window_params = [{transform_indices = @transform_0, window_bounds = array<i64: 192, 1024>}, {pipeline_mode = #tpu.pipeline_mode<synchronous>, transform_indices = @transform_1, window_bounds = array<i64: 1024, 256>}, {pipeline_mode = #tpu.pipeline_mode<synchronous>, transform_indices = @transform_2, window_bounds = array<i64: 1, 256>}, {transform_indices = @transform_3, window_bounds = array<i64: 192, 256>}, {pipeline_mode = #tpu.pipeline_mode<synchronous>, transform_indices = @transform_4, window_bounds = array<i64: 1, 256>}, {pipeline_mode = #tpu.pipeline_mode<synchronous>, transform_indices = @transform_5, window_bounds = array<i64: 1, 256>}, {pipeline_mode = #tpu.pipeline_mode<synchronous>, transform_indices = @transform_6, window_bounds = array<i64: 256, 256>}, {pipeline_mode = #tpu.pipeline_mode<synchronous>, transform_indices = @transform_7, window_bounds = array<i64: 1, 256>}, {transform_indices = @transform_8, window_bounds = array<i64: 192, 256>}]} {
    %c0 = arith.constant 0 : index
    %c0_0 = arith.constant 0 : index
    %0 = vector.load %arg1[%c0, %c0_0] : memref<192x1024xf32, #tpu.memory_space<vmem>>, vector<192x1024xf32>
    %1 = arith.truncf %0 : vector<192x1024xf32> to vector<192x1024xbf16>
    %c0_1 = arith.constant 0 : index
    %c0_2 = arith.constant 0 : index
    %2 = vector.load %arg2[%c0_1, %c0_2] : memref<1024x256xbf16, #tpu.memory_space<vmem>>, vector<1024x256xbf16>
    %cst = arith.constant dense<0.000000e+00> : vector<192x256xf32>
    %3 = tpu.matmul %1, %2, %cst {dimension_numbers = #tpu.dot_dimension_numbers<[1], [0], [0], [1], [0, 0, 1, 1], [], []>} : vector<192x1024xbf16>, vector<1024x256xbf16>, vector<192x256xf32> -> vector<192x256xf32>
    %c0_3 = arith.constant 0 : index
    %c0_4 = arith.constant 0 : index
    %4 = vector.load %arg3[%c0_3, %c0_4] : memref<1x256xf32, #tpu.memory_space<vmem>>, vector<1x256xf32>
    %5 = vector.broadcast %4 : vector<1x256xf32> to vector<192x256xf32>
    %6 = arith.addf %3, %5 : vector<192x256xf32>
    %c0_5 = arith.constant 0 : index
    %c0_6 = arith.constant 0 : index
    %7 = vector.load %arg4[%c0_5, %c0_6] : memref<192x256xf32, #tpu.memory_space<vmem>>, vector<192x256xf32>
    %8 = arith.addf %6, %7 : vector<192x256xf32>
    %cst_7 = arith.constant dense<0.000000e+00> : vector<192xf32>
    %9 = vector.multi_reduction <add>, %8, %cst_7 [1] : vector<192x256xf32> to vector<192xf32>
    %10 = vector.shape_cast %9 : vector<192xf32> to vector<192x1xf32>
    %11 = arith.mulf %8, %8 : vector<192x256xf32>
    %cst_8 = arith.constant dense<0.000000e+00> : vector<192xf32>
    %12 = vector.multi_reduction <add>, %11, %cst_8 [1] : vector<192x256xf32> to vector<192xf32>
    %13 = vector.shape_cast %12 : vector<192xf32> to vector<192x1xf32>
    %cst_9 = arith.constant 3.906250e-03 : f32
    %14 = vector.broadcast %cst_9 : f32 to vector<192x1xf32>
    %15 = arith.mulf %10, %14 : vector<192x1xf32>
    %cst_10 = arith.constant 3.906250e-03 : f32
    %16 = vector.broadcast %cst_10 : f32 to vector<192x1xf32>
    %17 = arith.mulf %13, %16 : vector<192x1xf32>
    %18 = arith.mulf %15, %15 : vector<192x1xf32>
    %19 = arith.subf %17, %18 : vector<192x1xf32>
    %cst_11 = arith.constant 0.000000e+00 : f32
    %20 = vector.broadcast %cst_11 : f32 to vector<192x1xf32>
    %21 = arith.maximumf %19, %20 : vector<192x1xf32>
    %22 = vector.broadcast %15 : vector<192x1xf32> to vector<192x256xf32>
    %23 = arith.subf %8, %22 : vector<192x256xf32>
    %cst_12 = arith.constant 9.99999996E-13 : f32
    %24 = vector.broadcast %cst_12 : f32 to vector<192x1xf32>
    %25 = arith.addf %21, %24 : vector<192x1xf32>
    %26 = math.rsqrt %25 : vector<192x1xf32>
    %27 = vector.broadcast %26 : vector<192x1xf32> to vector<192x256xf32>
    %28 = arith.mulf %23, %27 : vector<192x256xf32>
    %c0_13 = arith.constant 0 : index
    %c0_14 = arith.constant 0 : index
    %29 = vector.load %arg5[%c0_13, %c0_14] : memref<1x256xf32, #tpu.memory_space<vmem>>, vector<1x256xf32>
    %30 = vector.broadcast %29 : vector<1x256xf32> to vector<192x256xf32>
    %31 = arith.mulf %28, %30 : vector<192x256xf32>
    %c0_15 = arith.constant 0 : index
    %c0_16 = arith.constant 0 : index
    %32 = vector.load %arg6[%c0_15, %c0_16] : memref<1x256xf32, #tpu.memory_space<vmem>>, vector<1x256xf32>
    %33 = vector.broadcast %32 : vector<1x256xf32> to vector<192x256xf32>
    %34 = arith.addf %31, %33 : vector<192x256xf32>
    %35 = arith.truncf %34 : vector<192x256xf32> to vector<192x256xbf16>
    %c0_17 = arith.constant 0 : index
    %c0_18 = arith.constant 0 : index
    %36 = vector.load %arg7[%c0_17, %c0_18] : memref<256x256xbf16, #tpu.memory_space<vmem>>, vector<256x256xbf16>
    %cst_19 = arith.constant dense<0.000000e+00> : vector<192x256xf32>
    %37 = tpu.matmul %35, %36, %cst_19 {dimension_numbers = #tpu.dot_dimension_numbers<[1], [0], [0], [1], [0, 0, 1, 1], [], []>} : vector<192x256xbf16>, vector<256x256xbf16>, vector<192x256xf32> -> vector<192x256xf32>
    %c0_20 = arith.constant 0 : index
    %c0_21 = arith.constant 0 : index
    %38 = vector.load %arg8[%c0_20, %c0_21] : memref<1x256xf32, #tpu.memory_space<vmem>>, vector<1x256xf32>
    %39 = vector.broadcast %38 : vector<1x256xf32> to vector<192x256xf32>
    %40 = arith.addf %37, %39 : vector<192x256xf32>
    %c0_22 = arith.constant 0 : index
    %c0_23 = arith.constant 0 : index
    %41 = vector.load %arg9[%c0_22, %c0_23] : memref<192x256xf32, #tpu.memory_space<vmem>>, vector<192x256xf32>
    tpu.vector_store %arg9[%c0_22, %c0_23], %40 {strides = array<i32>} : memref<192x256xf32, #tpu.memory_space<vmem>>, vector<192x256xf32>,
    return
  }
  func.func @transform_0(%arg0: i32) -> (i32, i32) {
    %c0_i32 = arith.constant 0 : i32
    %c0_i32_0 = arith.constant 0 : i32
    return %arg0, %c0_i32 : i32, i32
  }
  func.func @transform_1(%arg0: i32) -> (i32, i32) {
    %c0_i32 = arith.constant 0 : i32
    %c0_i32_0 = arith.constant 0 : i32
    %c0_i32_1 = arith.constant 0 : i32
    return %c0_i32, %c0_i32_0 : i32, i32
  }
  func.func @transform_2(%arg0: i32) -> (i32, i32) {
    %c0_i32 = arith.constant 0 : i32
    %c0_i32_0 = arith.constant 0 : i32
    %c0_i32_1 = arith.constant 0 : i32
    return %c0_i32, %c0_i32_0 : i32, i32
  }
  func.func @transform_3(%arg0: i32) -> (i32, i32) {
    %c0_i32 = arith.constant 0 : i32
    %c0_i32_0 = arith.constant 0 : i32
    return %arg0, %c0_i32 : i32, i32
  }
  func.func @transform_4(%arg0: i32) -> (i32, i32) {
    %c0_i32 = arith.constant 0 : i32
    %c0_i32_0 = arith.constant 0 : i32
    %c0_i32_1 = arith.constant 0 : i32
    return %c0_i32, %c0_i32_0 : i32, i32
  }
  func.func @transform_5(%arg0: i32) -> (i32, i32) {
    %c0_i32 = arith.constant 0 : i32
    %c0_i32_0 = arith.constant 0 : i32
    %c0_i32_1 = arith.constant 0 : i32
    return %c0_i32, %c0_i32_0 : i32, i32
  }
  func.func @transform_6(%arg0: i32) -> (i32, i32) {
    %c0_i32 = arith.constant 0 : i32
    %c0_i32_0 = arith.constant 0 : i32
    %c0_i32_1 = arith.constant 0 : i32
    return %c0_i32, %c0_i32_0 : i32, i32
  }
  func.func @transform_7(%arg0: i32) -> (i32, i32) {
    %c0_i32 = arith.constant 0 : i32
    %c0_i32_0 = arith.constant 0 : i32
    %c0_i32_1 = arith.constant 0 : i32
    return %c0_i32, %c0_i32_0 : i32, i32
  }
  func.func @transform_8(%arg0: i32) -> (i32, i32) {
    %c0_i32 = arith.constant 0 : i32
    %c0_i32_0 = arith.constant 0 : i32
    return %arg0, %c0_i32 : i32, i32
  }
}

</mosaic_0001>

<llo_original>
// kernel: fused_forward.1
$region0: #{fused_forward.1}
  #allocation0 [shape = 'u32[]', space=smem, size = 0x4, offset = 0x4, fixed_abs, tag = 'smem constant byte address 0x4 - core index']
  #allocation1 [shape = 'u32[72,128]{1,0:T(1,128)}', space=vmem, size = 0x9000, scoped, tag = 'internal scratch']
  %s0 = inlined_call_operand.hbm [shape: f32[384,1024], index: 0, kind: input, shape index: {}]
  %s1 = inlined_call_operand.hbm [shape: bf16[1024,256], index: 1, kind: input, shape index: {}]
  %s2 = inlined_call_operand.hbm [shape: f32[1,256], index: 2, kind: input, shape index: {}]
  %s3 = inlined_call_operand.hbm [shape: f32[384,256], index: 3, kind: input, shape index: {}]
  %s4 = inlined_call_operand.hbm [shape: f32[1,256], index: 4, kind: input, shape index: {}]
  %s5 = inlined_call_operand.hbm [shape: f32[1,256], index: 5, kind: input, shape index: {}]
  %s6 = inlined_call_operand.hbm [shape: bf16[256,256], index: 6, kind: input, shape index: {}]
  %s7 = inlined_call_operand.hbm [shape: f32[1,256], index: 7, kind: input, shape index: {}]
  %s8 = inlined_call_operand.hbm [shape: f32[384,256], index: 8, kind: output, shape index: {}]
  %s9 = sld [smem:[#allocation0]]
  $region97: #{fused_forward.1} parent=0
    _
  %s11 = ssub.s32 1, %s9
  %s12 = scalar_select 0, %s11, %s9
  $region1: #{fused_forward.1} parent=0
    #allocation2 [shape = 'u8[1572864]{0}', space=vmem, size = 0x180000, scoped, tag = 'input window, operand 0']
    #allocation3 [shape = 's32[2]{0}', space=sflag, size = 0x8, scoped, tag = 'scoped memory for fused_forward.1']
    #allocation4 [shape = 's32[2]{0}', space=sflag, size = 0x8, scoped, tag = 'scoped memory for fused_forward.1']
    #allocation5 [shape = 'u8[524288]{0}', space=vmem, size = 0x80000, scoped, tag = 'input window, operand 1, single buffered']
    #allocation6 [shape = 's32[1]{0}', space=sflag, size = 0x4, scoped, tag = 'scoped memory for fused_forward.1']
    #allocation7 [shape = 'u8[1024]{0}', space=vmem, size = 0x400, scoped, tag = 'input window, operand 2, single buffered']
    #allocation8 [shape = 'u8[393216]{0}', space=vmem, size = 0x60000, scoped, tag = 'input window, operand 3']
    #allocation9 [shape = 's32[2]{0}', space=sflag, size = 0x8, scoped, tag = 'scoped memory for fused_forward.1']
    #allocation10 [shape = 'u8[1024]{0}', space=vmem, size = 0x400, scoped, tag = 'input window, operand 4, single buffered']
    #allocation11 [shape = 'u8[1024]{0}', space=vmem, size = 0x400, scoped, tag = 'input window, operand 5, single buffered']
    #allocation12 [shape = 's32[1]{0}', space=sflag, size = 0x4, scoped, tag = 'scoped memory for fused_forward.1']
    #allocation13 [shape = 'u8[131072]{0}', space=vmem, size = 0x20000, scoped, tag = 'input window, operand 6, single buffered']
    #allocation14 [shape = 'u8[1024]{0}', space=vmem, size = 0x400, scoped, tag = 'input window, operand 7, single buffered']
    #allocation15 [shape = 's32[1]{0}', space=sflag, size = 0x4, scoped, tag = 'scoped memory for fused_forward.1']
    #allocation16 [shape = 'u8[393216]{0}', space=vmem, size = 0x60000, scoped, tag = 'output window, operand 0']
    %13 = vsyncpa [#allocation3], 0
    %s14 = scalar_lea.sflag [#allocation3], 1
    %15 = vsyncpa %s14, 0
    %16 = vsyncpa [#allocation6], 0
    %17 = vsyncpa [#allocation9], 0
    %s18 = scalar_lea.sflag [#allocation9], 1
    %19 = vsyncpa %s18, 0
    %20 = vsyncpa [#allocation12], 0
    %21 = vsyncpa [#allocation15], 0
    %22 = vsyncpa [#allocation4], 0
    %s23 = scalar_lea.sflag [#allocation4], 1
    %24 = vsyncpa %s23, 0
    loop: start=0, step=1, limit=4
    $region2: #{fused_forward.1} parent=1 // loop_pre_header
      _
    $region3: #{fused_forward.1} parent=1 // loop_header
      %s26 = sphi 0, %s30
      %p27 = scmp.ge.s32.totalorder %s26, 4
      %s36 = sphi 0, %s38
      %s39 = sphi 0, %s36
      %s40 = sphi 0, %s39
      %s56 = sphi 0, %s40
      %s60 = sphi 0, %s60
      %s62 = sphi 0, %s60
      %s63 = sphi 0, %s62
      %s77 = sphi 0, %s63
      %s81 = sphi 0, %s81
      %s83 = sphi 0, %s81
      %s84 = sphi 0, %s83
      %s98 = sphi 0, %s84
      %s104 = sphi 0, %s106
      %s107 = sphi 0, %s104
      %s108 = sphi 0, %s107
      %s124 = sphi 0, %s108
      %s128 = sphi 0, %s128
      %s130 = sphi 0, %s128
      %s131 = sphi 0, %s130
      %s145 = sphi 0, %s131
      %s149 = sphi 0, %s149
      %s151 = sphi 0, %s149
      %s152 = sphi 0, %s151
      %s166 = sphi 0, %s152
      %s170 = sphi 0, %s170
      %s172 = sphi 0, %s170
      %s173 = sphi 0, %s172
      %s187 = sphi 0, %s173
      %s191 = sphi 0, %s191
      %s193 = sphi 0, %s191
      %s194 = sphi 0, %s193
      %s208 = sphi 0, %s194
      %s214 = sphi 0, %s216
      %s217 = sphi 0, %s214
      %s218 = sphi 0, %s217
      %s234 = sphi 0, %s218
    $region4: #{fused_forward.1} parent=1 // loop_header_branch
      %29 = sbr.rel (%p27) target = $region8
    $region5: #{fused_forward.1} parent=1 // loop_body
      %s31 = ssub.s32 %s26, 1
      %s32 = ssub.s32 %s26, 2
      %s33 = sadd.s32 %s26, 1
      %s34 = ssub.s32 %s26, %s33
      %p35 = scmp.eq.s32.totalorder %s34, 0
      %s37 = sadd.s32 %s36, 1
      %s38 = scalar_select %p35, %s36, %s37
      %p41 = pneg %p35
      %p42 = scmp.eq.s32.totalorder %s26, 1
      %p43 = por %p41, %p42
      %p44 = scmp.ne.s32.totalorder %s36, %s39
      %p45 = scmp.eq.s32.totalorder %s26, 0
      %p46 = por %p44, %p45
      %p47 = scmp.ne.s32.totalorder %s36, %s39
      %p48 = scmp.eq.s32.totalorder %s31, 1
      %p49 = por %p47, %p48
      %p50 = scmp.ne.s32.totalorder %s39, %s40
      %p51 = scmp.eq.s32.totalorder %s31, 0
      %p52 = por %p50, %p51
      %p53 = scmp.ne.s32.totalorder %s39, %s40
      %p54 = scmp.eq.s32.totalorder %s32, 1
      %p55 = por %p53, %p54
      %p57 = scmp.ne.s32.totalorder %s40, %s56
      %p58 = scmp.eq.s32.totalorder %s32, 0
      %p59 = por %p57, %p58
      %s61 = sadd.s32 %s60, 1
      %p64 = scmp.eq.s32.totalorder %s26, 1
      %p65 = scmp.ne.s32.totalorder %s60, %s62
      %p66 = scmp.eq.s32.totalorder %s26, 0
      %p67 = por %p65, %p66
      %p68 = scmp.ne.s32.totalorder %s60, %s62
      %p69 = scmp.eq.s32.totalorder %s31, 1
      %p70 = por %p68, %p69
      %p71 = scmp.ne.s32.totalorder %s62, %s63
      %p72 = scmp.eq.s32.totalorder %s31, 0
      %p73 = por %p71, %p72
      %p74 = scmp.ne.s32.totalorder %s62, %s63
      %p75 = scmp.eq.s32.totalorder %s32, 1
      %p76 = por %p74, %p75
      %p78 = scmp.ne.s32.totalorder %s63, %s77
      %p79 = scmp.eq.s32.totalorder %s32, 0
      %p80 = por %p78, %p79
      %s82 = sadd.s32 %s81, 1
      %p85 = scmp.eq.s32.totalorder %s26, 1
      %p86 = scmp.ne.s32.totalorder %s81, %s83
      %p87 = scmp.eq.s32.totalorder %s26, 0
      %p88 = por %p86, %p87
      %p89 = scmp.ne.s32.totalorder %s81, %s83
      %p90 = scmp.eq.s32.totalorder %s31, 1
      %p91 = por %p89, %p90
      %p92 = scmp.ne.s32.totalorder %s83, %s84
      %p93 = scmp.eq.s32.totalorder %s31, 0
      %p94 = por %p92, %p93
      %p95 = scmp.ne.s32.totalorder %s83, %s84
      %p96 = scmp.eq.s32.totalorder %s32, 1
      %p97 = por %p95, %p96
      %p99 = scmp.ne.s32.totalorder %s84, %s98
      %p100 = scmp.eq.s32.totalorder %s32, 0
      %p101 = por %p99, %p100
      %s102 = ssub.s32 %s26, %s33
      %p103 = scmp.eq.s32.totalorder %s102, 0
      %s105 = sadd.s32 %s104, 1
      %s106 = scalar_select %p103, %s104, %s105
      %p109 = pneg %p103
      %p110 = scmp.eq.s32.totalorder %s26, 1
      %p111 = por %p109, %p110
      %p112 = scmp.ne.s32.totalorder %s104, %s107
      %p113 = scmp.eq.s32.totalorder %s26, 0
      %p114 = por %p112, %p113
      %p115 = scmp.ne.s32.totalorder %s104, %s107
      %p116 = scmp.eq.s32.totalorder %s31, 1
      %p117 = por %p115, %p116
      %p118 = scmp.ne.s32.totalorder %s107, %s108
      %p119 = scmp.eq.s32.totalorder %s31, 0
      %p120 = por %p118, %p119
      %p121 = scmp.ne.s32.totalorder %s107, %s108
      %p122 = scmp.eq.s32.totalorder %s32, 1
      %p123 = por %p121, %p122
      %p125 = scmp.ne.s32.totalorder %s108, %s124
      %p126 = scmp.eq.s32.totalorder %s32, 0
      %p127 = por %p125, %p126
      %s129 = sadd.s32 %s128, 1
      %p132 = scmp.eq.s32.totalorder %s26, 1
      %p133 = scmp.ne.s32.totalorder %s128, %s130
      %p134 = scmp.eq.s32.totalorder %s26, 0
      %p135 = por %p133, %p134
      %p136 = scmp.ne.s32.totalorder %s128, %s130
      %p137 = scmp.eq.s32.totalorder %s31, 1
      %p138 = por %p136, %p137
      %p139 = scmp.ne.s32.totalorder %s130, %s131
      %p140 = scmp.eq.s32.totalorder %s31, 0
      %p141 = por %p139, %p140
      %p142 = scmp.ne.s32.totalorder %s130, %s131
      %p143 = scmp.eq.s32.totalorder %s32, 1
      %p144 = por %p142, %p143
      %p146 = scmp.ne.s32.totalorder %s131, %s145
      %p147 = scmp.eq.s32.totalorder %s32, 0
      %p148 = por %p146, %p147
      %s150 = sadd.s32 %s149, 1
      %p153 = scmp.eq.s32.totalorder %s26, 1
      %p154 = scmp.ne.s32.totalorder %s149, %s151
      %p155 = scmp.eq.s32.totalorder %s26, 0
      %p156 = por %p154, %p155
      %p157 = scmp.ne.s32.totalorder %s149, %s151
      %p158 = scmp.eq.s32.totalorder %s31, 1
      %p159 = por %p157, %p158
      %p160 = scmp.ne.s32.totalorder %s151, %s152
      %p161 = scmp.eq.s32.totalorder %s31, 0
      %p162 = por %p160, %p161
      %p163 = scmp.ne.s32.totalorder %s151, %s152
      %p164 = scmp.eq.s32.totalorder %s32, 1
      %p165 = por %p163, %p164
      %p167 = scmp.ne.s32.totalorder %s152, %s166
      %p168 = scmp.eq.s32.totalorder %s32, 0
      %p169 = por %p167, %p168
      %s171 = sadd.s32 %s170, 1
      %p174 = scmp.eq.s32.totalorder %s26, 1
      %p175 = scmp.ne.s32.totalorder %s170, %s172
      %p176 = scmp.eq.s32.totalorder %s26, 0
      %p177 = por %p175, %p176
      %p178 = scmp.ne.s32.totalorder %s170, %s172
      %p179 = scmp.eq.s32.totalorder %s31, 1
      %p180 = por %p178, %p179
      %p181 = scmp.ne.s32.totalorder %s172, %s173
      %p182 = scmp.eq.s32.totalorder %s31, 0
      %p183 = por %p181, %p182
      %p184 = scmp.ne.s32.totalorder %s172, %s173
      %p185 = scmp.eq.s32.totalorder %s32, 1
      %p186 = por %p184, %p185
      %p188 = scmp.ne.s32.totalorder %s173, %s187
      %p189 = scmp.eq.s32.totalorder %s32, 0
      %p190 = por %p188, %p189
      %s192 = sadd.s32 %s191, 1
      %p195 = scmp.eq.s32.totalorder %s26, 1
      %p196 = scmp.ne.s32.totalorder %s191, %s193
      %p197 = scmp.eq.s32.totalorder %s26, 0
      %p198 = por %p196, %p197
      %p199 = scmp.ne.s32.totalorder %s191, %s193
      %p200 = scmp.eq.s32.totalorder %s31, 1
      %p201 = por %p199, %p200
      %p202 = scmp.ne.s32.totalorder %s193, %s194
      %p203 = scmp.eq.s32.totalorder %s31, 0
      %p204 = por %p202, %p203
      %p205 = scmp.ne.s32.totalorder %s193, %s194
      %p206 = scmp.eq.s32.totalorder %s32, 1
      %p207 = por %p205, %p206
      %p209 = scmp.ne.s32.totalorder %s194, %s208
      %p210 = scmp.eq.s32.totalorder %s32, 0
      %p211 = por %p209, %p210
      %s212 = ssub.s32 %s26, %s33
      %p213 = scmp.eq.s32.totalorder %s212, 0
      %s215 = sadd.s32 %s214, 1
      %s216 = scalar_select %p213, %s214, %s215
      %p219 = pneg %p213
      %p220 = scmp.eq.s32.totalorder %s26, 1
      %p221 = por %p219, %p220
      %p222 = scmp.ne.s32.totalorder %s214, %s217
      %p223 = scmp.eq.s32.totalorder %s26, 0
      %p224 = por %p222, %p223
      %p225 = scmp.ne.s32.totalorder %s214, %s217
      %p226 = scmp.eq.s32.totalorder %s31, 1
      %p227 = por %p225, %p226
      %p228 = scmp.ne.s32.totalorder %s217, %s218
      %p229 = scmp.eq.s32.totalorder %s31, 0
      %p230 = por %p228, %p229
      %p231 = scmp.ne.s32.totalorder %s217, %s218
      %p232 = scmp.eq.s32.totalorder %s32, 1
      %p233 = por %p231, %p232
      %p235 = scmp.ne.s32.totalorder %s218, %s234
      %p236 = scmp.eq.s32.totalorder %s32, 0
      %p237 = por %p235, %p236
      %p238 = scmp.le.s32.totalorder 1, %s26
      %p239 = scmp.lt.s32.totalorder %s26, 3
      %p240 = pnand %p238, %p239
      %p241 = pneg %p240
      // Predicated region
      $region9: #{fused_forward.1} parent=5 // pred_check
        _
      $region10: #{fused_forward.1} parent=5 // pred_check_branch
        %243 = sbr.rel (%p240) target = $region12
      $region11: #{fused_forward.1} parent=5 // pred_region
        %s244 = ssub.s32 %s26, 1
        // Predicated region
        $region13: #{fused_forward.1} parent=11 // pred_check
          %p245 = pneg %p73
        $region14: #{fused_forward.1} parent=11 // pred_check_branch
          %247 = sbr.rel (%p245) target = $region16
        $region15: #{fused_forward.1} parent=11 // pred_region
          %249 = vsyncadd [#allocation6], 0
          %s250 = sshll.u32 %s1, 4
          %s251 = int_to_ptr.hbm [resolvable:$true] %s250
          %s252 = sshll.u32 [#allocation5], 4
          %s253 = int_to_ptr.vmem [resolvable:$true] %s252
          %258 = dma.hbm_to_vmem [thread:$0]  %s251, 16384, %s253, [#allocation6], 128, 128, 8
        $region16: #{fused_forward.1} parent=11 // pred_fallthru
          _
        // Predicated region
        $region17: #{fused_forward.1} parent=11 // pred_check
          %p259 = pneg %p94
        $region18: #{fused_forward.1} parent=11 // pred_check_branch
          %261 = sbr.rel (%p259) target = $region20
        $region19: #{fused_forward.1} parent=11 // pred_region
          %263 = vsyncadd [#allocation6], 0
          %s265 = sshll.u32 %s2, 4
          %s266 = int_to_ptr.hbm [resolvable:$true] %s265
          %s267 = sshll.u32 [#allocation7], 4
          %s268 = int_to_ptr.vmem [resolvable:$true] %s267
          %270 = dma.hbm_to_vmem [thread:$0]  %s266, 32, %s268, [#allocation6]
        $region20: #{fused_forward.1} parent=11 // pred_fallthru
          _
        // Predicated region
        $region21: #{fused_forward.1} parent=11 // pred_check
          %p271 = pneg %p141
        $region22: #{fused_forward.1} parent=11 // pred_check_branch
          %273 = sbr.rel (%p271) target = $region24
        $region23: #{fused_forward.1} parent=11 // pred_region
          %275 = vsyncadd [#allocation9], 0
          %s277 = sshll.u32 %s4, 4
          %s278 = int_to_ptr.hbm [resolvable:$true] %s277
          %s279 = sshll.u32 [#allocation10], 4
          %s280 = int_to_ptr.vmem [resolvable:$true] %s279
          %282 = dma.hbm_to_vmem [thread:$0]  %s278, 32, %s280, [#allocation9]
        $region24: #{fused_forward.1} parent=11 // pred_fallthru
          _
        // Predicated region
        $region25: #{fused_forward.1} parent=11 // pred_check
          %p283 = pneg %p162
        $region26: #{fused_forward.1} parent=11 // pred_check_branch
          %285 = sbr.rel (%p283) target = $region28
        $region27: #{fused_forward.1} parent=11 // pred_region
          %287 = vsyncadd [#allocation12], 0
          %s289 = sshll.u32 %s5, 4
          %s290 = int_to_ptr.hbm [resolvable:$true] %s289
          %s291 = sshll.u32 [#allocation11], 4
          %s292 = int_to_ptr.vmem [resolvable:$true] %s291
          %294 = dma.hbm_to_vmem [thread:$0]  %s290, 32, %s292, [#allocation12]
        $region28: #{fused_forward.1} parent=11 // pred_fallthru
          _
        // Predicated region
        $region29: #{fused_forward.1} parent=11 // pred_check
          %p295 = pneg %p183
        $region30: #{fused_forward.1} parent=11 // pred_check_branch
          %297 = sbr.rel (%p295) target = $region32
        $region31: #{fused_forward.1} parent=11 // pred_region
          %299 = vsyncadd [#allocation12], 0
          %s300 = sshll.u32 %s6, 4
          %s301 = int_to_ptr.hbm [resolvable:$true] %s300
          %s302 = sshll.u32 [#allocation13], 4
          %s303 = int_to_ptr.vmem [resolvable:$true] %s302
          %308 = dma.hbm_to_vmem [thread:$0]  %s301, 4096, %s303, [#allocation12], 128, 128, 8
        $region32: #{fused_forward.1} parent=11 // pred_fallthru
          _
        // Predicated region
        $region33: #{fused_forward.1} parent=11 // pred_check
          %p309 = pneg %p204
        $region34: #{fused_forward.1} parent=11 // pred_check_branch
          %311 = sbr.rel (%p309) target = $region36
        $region35: #{fused_forward.1} parent=11 // pred_region
          %313 = vsyncadd [#allocation15], 0
          %s315 = sshll.u32 %s7, 4
          %s316 = int_to_ptr.hbm [resolvable:$true] %s315
          %s317 = sshll.u32 [#allocation14], 4
          %s318 = int_to_ptr.vmem [resolvable:$true] %s317
          %320 = dma.hbm_to_vmem [thread:$0]  %s316, 32, %s318, [#allocation15]
        $region36: #{fused_forward.1} parent=11 // pred_fallthru
          _
      $region12: #{fused_forward.1} parent=5 // pred_fallthru
        _
      %p321 = scmp.lt.s32.totalorder %s26, 2
      // Predicated region
      $region37: #{fused_forward.1} parent=5 // pred_check
        %p322 = pneg %p321
      $region38: #{fused_forward.1} parent=5 // pred_check_branch
        %324 = sbr.rel (%p322) target = $region40
      $region39: #{fused_forward.1} parent=5 // pred_region
        // Predicated region
        $region41: #{fused_forward.1} parent=39 // pred_check
          %p325 = pneg %p46
        $region42: #{fused_forward.1} parent=39 // pred_check_branch
          %327 = sbr.rel (%p325) target = $region44
        $region43: #{fused_forward.1} parent=39 // pred_region
          %s328 = sand.u32 %s36, 1
          %s329 = scalar_lea.sflag [#allocation3], %s328
          %s330 = sand.u32 %s36, 1
          %s331 = smul.addr %s330, 1536
          %s332 = scalar_lea.vmem [#allocation2], %s331
          %s333 = smul.u32 24, %s26
          %335 = vsyncadd %s329, 0
          %s336 = smul.addr %s333, 8
          %s337 = smul.addr %s336, 8
          %s338 = scalar_lea.hbm %s0, %s337
          %s339 = sshll.u32 %s338, 4
          %s340 = int_to_ptr.hbm [resolvable:$true] %s339
          %s341 = sshll.u32 %s332, 4
          %s342 = int_to_ptr.vmem [resolvable:$true] %s341
          %347 = dma.hbm_to_vmem [thread:$0]  %s340, 24576, %s342, %s329, 1024, 1024, 64
        $region44: #{fused_forward.1} parent=39 // pred_fallthru
          _
        // Predicated region
        $region45: #{fused_forward.1} parent=39 // pred_check
          %p348 = pneg %p114
        $region46: #{fused_forward.1} parent=39 // pred_check_branch
          %350 = sbr.rel (%p348) target = $region48
        $region47: #{fused_forward.1} parent=39 // pred_region
          %s351 = sand.u32 %s26, 1
          %s352 = scalar_lea.sflag [#allocation9], %s351
          %s353 = sand.u32 %s104, 1
          %s354 = smul.addr %s353, 384
          %s355 = scalar_lea.vmem [#allocation8], %s354
          %s356 = smul.u32 24, %s26
          %358 = vsyncadd %s352, 0
          %s359 = smul.addr %s356, 2
          %s360 = smul.addr %s359, 8
          %s361 = scalar_lea.hbm %s3, %s360
          %s362 = sshll.u32 %s361, 4
          %s363 = int_to_ptr.hbm [resolvable:$true] %s362
          %s364 = sshll.u32 %s355, 4
          %s365 = int_to_ptr.vmem [resolvable:$true] %s364
          %370 = dma.hbm_to_vmem [thread:$0]  %s363, 6144, %s365, %s352, 256, 256, 16
        $region48: #{fused_forward.1} parent=39 // pred_fallthru
          _
      $region40: #{fused_forward.1} parent=5 // pred_fallthru
        _
      %p371 = scmp.le.s32.totalorder 1, %s26
      %p372 = scmp.lt.s32.totalorder %s26, 3
      %p373 = pnand %p371, %p372
      %p374 = pneg %p373
      // Predicated region
      $region49: #{fused_forward.1} parent=5 // pred_check
        _
      $region50: #{fused_forward.1} parent=5 // pred_check_branch
        %376 = sbr.rel (%p373) target = $region52
      $region51: #{fused_forward.1} parent=5 // pred_region
        %s377 = ssub.s32 %s26, 1
        %s378 = sand.u32 %s39, 1
        %s379 = scalar_lea.sflag [#allocation3], %s378
        %s380 = sand.u32 %s39, 1
        %s381 = smul.addr %s380, 1536
        %s382 = scalar_lea.vmem [#allocation2], %s381
        // Predicated region
        $region53: #{fused_forward.1} parent=51 // pred_check
          %p383 = pneg %p52
        $region54: #{fused_forward.1} parent=51 // pred_check_branch
          %385 = sbr.rel (%p383) target = $region56
        $region55: #{fused_forward.1} parent=51 // pred_region
          %387 = dma.done %s379, 24576
        $region56: #{fused_forward.1} parent=51 // pred_fallthru
          _
        // Predicated region
        $region57: #{fused_forward.1} parent=51 // pred_check
          %p388 = pneg %p73
        $region58: #{fused_forward.1} parent=51 // pred_check_branch
          %390 = sbr.rel (%p388) target = $region60
        $region59: #{fused_forward.1} parent=51 // pred_region
          %392 = dma.done [#allocation6], 16384
        $region60: #{fused_forward.1} parent=51 // pred_fallthru
          _
        // Predicated region
        $region61: #{fused_forward.1} parent=51 // pred_check
          %p393 = pneg %p94
        $region62: #{fused_forward.1} parent=51 // pred_check_branch
          %395 = sbr.rel (%p393) target = $region64
        $region63: #{fused_forward.1} parent=51 // pred_region
          %397 = dma.done [#allocation6], 32
        $region64: #{fused_forward.1} parent=51 // pred_fallthru
          _
        %s398 = sand.u32 %s31, 1
        %s399 = scalar_lea.sflag [#allocation9], %s398
        %s400 = sand.u32 %s107, 1
        %s401 = smul.addr %s400, 384
        %s402 = scalar_lea.vmem [#allocation8], %s401
        // Predicated region
        $region65: #{fused_forward.1} parent=51 // pred_check
          %p403 = pneg %p120
        $region66: #{fused_forward.1} parent=51 // pred_check_branch
          %405 = sbr.rel (%p403) target = $region68
        $region67: #{fused_forward.1} parent=51 // pred_region
          %407 = dma.done %s399, 6144
        $region68: #{fused_forward.1} parent=51 // pred_fallthru
          _
        // Predicated region
        $region69: #{fused_forward.1} parent=51 // pred_check
          %p408 = pneg %p141
        $region70: #{fused_forward.1} parent=51 // pred_check_branch
          %410 = sbr.rel (%p408) target = $region72
        $region71: #{fused_forward.1} parent=51 // pred_region
          %412 = dma.done [#allocation9], 32
        $region72: #{fused_forward.1} parent=51 // pred_fallthru
          _
        // Predicated region
        $region73: #{fused_forward.1} parent=51 // pred_check
          %p413 = pneg %p162
        $region74: #{fused_forward.1} parent=51 // pred_check_branch
          %415 = sbr.rel (%p413) target = $region76
        $region75: #{fused_forward.1} parent=51 // pred_region
          %417 = dma.done [#allocation12], 32
        $region76: #{fused_forward.1} parent=51 // pred_fallthru
          _
        // Predicated region
        $region77: #{fused_forward.1} parent=51 // pred_check
          %p418 = pneg %p183
        $region78: #{fused_forward.1} parent=51 // pred_check_branch
          %420 = sbr.rel (%p418) target = $region80
        $region79: #{fused_forward.1} parent=51 // pred_region
          %422 = dma.done [#allocation12], 4096
        $region80: #{fused_forward.1} parent=51 // pred_fallthru
          _
        // Predicated region
        $region81: #{fused_forward.1} parent=51 // pred_check
          %p423 = pneg %p204
        $region82: #{fused_forward.1} parent=51 // pred_check_branch
          %425 = sbr.rel (%p423) target = $region84
        $region83: #{fused_forward.1} parent=51 // pred_region
          %427 = dma.done [#allocation15], 32
        $region84: #{fused_forward.1} parent=51 // pred_fallthru
          _
        %s428 = sand.u32 %s39, 1
        %s429 = scalar_lea.sflag [#allocation3], %s428
        %s430 = sand.u32 %s39, 1
        %s431 = smul.addr %s430, 1536
        %s432 = scalar_lea.vmem [#allocation2], %s431
        %p433 = pneg %p52
        %p434 = pneg %p49
        %p435 = pneg %p73
        %p436 = pneg %p70
        %p437 = pneg %p94
        %p438 = pneg %p91
        %s439 = sand.u32 %s31, 1
        %s440 = scalar_lea.sflag [#allocation9], %s439
        %s441 = sand.u32 %s107, 1
        %s442 = smul.addr %s441, 384
        %s443 = scalar_lea.vmem [#allocation8], %s442
        %p444 = pneg %p120
        %p445 = pneg %p117
        %p446 = pneg %p141
        %p447 = pneg %p138
        %p448 = pneg %p162
        %p449 = pneg %p159
        %p450 = pneg %p183
        %p451 = pneg %p180
        %p452 = pneg %p204
        %p453 = pneg %p201
        %p454 = pneg %p230
        %p455 = pneg %p227
        %s456 = sand.u32 %s217, 1
        %s457 = scalar_lea.sflag [#allocation4], %s456
        %s458 = sand.u32 %s217, 1
        %s459 = smul.addr %s458, 384
        %s460 = scalar_lea.vmem [#allocation16], %s459
        %s461 = smul.u32 24, %s31
        %s462 = smul.u32 24, %s31
        %s463 = smul.u32 24, %s31
        %v464 = vld [vmem:[%s382] sm:$0xff]
        %v465 = vld [vmem:[%s382 + $0x8] sm:$0xff]
        %v466 = vld [vmem:[%s382 + $0x10] sm:$0xff]
        %v467 = vld [vmem:[%s382 + $0x18] sm:$0xff]
        %v468 = vld [vmem:[%s382 + $0x20] sm:$0xff]
        %v469 = vld [vmem:[%s382 + $0x28] sm:$0xff]
        %v470 = vld [vmem:[%s382 + $0x30] sm:$0xff]
        %v471 = vld [vmem:[%s382 + $0x38] sm:$0xff]
        %v472 = vld [vmem:[%s382 + $0x40] sm:$0xff]
        %v473 = vld [vmem:[%s382 + $0x48] sm:$0xff]
        %v474 = vld [vmem:[%s382 + $0x50] sm:$0xff]
        %v475 = vld [vmem:[%s382 + $0x58] sm:$0xff]
        %v476 = vld [vmem:[%s382 + $0x60] sm:$0xff]
        %v477 = vld [vmem:[%s382 + $0x68] sm:$0xff]
        %v478 = vld [vmem:[%s382 + $0x70] sm:$0xff]
        %v479 = vld [vmem:[%s382 + $0x78] sm:$0xff]
        %v480 = vld [vmem:[%s382 + $0x80] sm:$0xff]
        %v481 = vld [vmem:[%s382 + $0x88] sm:$0xff]
        %v482 = vld [vmem:[%s382 + $0x90] sm:$0xff]
        %v483 = vld [vmem:[%s382 + $0x98] sm:$0xff]
        %v484 = vld [vmem:[%s382 + $0xa0] sm:$0xff]
        %v485 = vld [vmem:[%s382 + $0xa8] sm:$0xff]
        %v486 = vld [vmem:[%s382 + $0xb0] sm:$0xff]
        %v487 = vld [vmem:[%s382 + $0xb8] sm:$0xff]
        %v488 = vld [vmem:[%s382 + $0xc0] sm:$0xff]
        %v489 = vld [vmem:[%s382 + $0xc8] sm:$0xff]
        %v490 = vld [vmem:[%s382 + $0xd0] sm:$0xff]
        %v491 = vld [vmem:[%s382 + $0xd8] sm:$0xff]
        %v492 = vld [vmem:[%s382 + $0xe0] sm:$0xff]
        %v493 = vld [vmem:[%s382 + $0xe8] sm:$0xff]
        %v494 = vld [vmem:[%s382 + $0xf0] sm:$0xff]
        %v495 = vld [vmem:[%s382 + $0xf8] sm:$0xff]
        %v496 = vld [vmem:[%s382 + $0x100] sm:$0xff]
        %v497 = vld [vmem:[%s382 + $0x108] sm:$0xff]
        %v498 = vld [vmem:[%s382 + $0x110] sm:$0xff]
        %v499 = vld [vmem:[%s382 + $0x118] sm:$0xff]
        %v500 = vld [vmem:[%s382 + $0x120] sm:$0xff]
        %v501 = vld [vmem:[%s382 + $0x128] sm:$0xff]
        %v502 = vld [vmem:[%s382 + $0x130] sm:$0xff]
        %v503 = vld [vmem:[%s382 + $0x138] sm:$0xff]
        %v504 = vld [vmem:[%s382 + $0x140] sm:$0xff]
        %v505 = vld [vmem:[%s382 + $0x148] sm:$0xff]
        %v506 = vld [vmem:[%s382 + $0x150] sm:$0xff]
        %v507 = vld [vmem:[%s382 + $0x158] sm:$0xff]
        %v508 = vld [vmem:[%s382 + $0x160] sm:$0xff]
        %v509 = vld [vmem:[%s382 + $0x168] sm:$0xff]
        %v510 = vld [vmem:[%s382 + $0x170] sm:$0xff]
        %v511 = vld [vmem:[%s382 + $0x178] sm:$0xff]
        %v512 = vld [vmem:[%s382 + $0x180] sm:$0xff]
        %v513 = vld [vmem:[%s382 + $0x188] sm:$0xff]
        %v514 = vld [vmem:[%s382 + $0x190] sm:$0xff]
        %v515 = vld [vmem:[%s382 + $0x198] sm:$0xff]
        %v516 = vld [vmem:[%s382 + $0x1a0] sm:$0xff]
        %v517 = vld [vmem:[%s382 + $0x1a8] sm:$0xff]
        %v518 = vld [vmem:[%s382 + $0x1b0] sm:$0xff]
        %v519 = vld [vmem:[%s382 + $0x1b8] sm:$0xff]
        %v520 = vld [vmem:[%s382 + $0x1c0] sm:$0xff]
        %v521 = vld [vmem:[%s382 + $0x1c8] sm:$0xff]
        %v522 = vld [vmem:[%s382 + $0x1d0] sm:$0xff]
        %v523 = vld [vmem:[%s382 + $0x1d8] sm:$0xff]
        %v524 = vld [vmem:[%s382 + $0x1e0] sm:$0xff]
        %v525 = vld [vmem:[%s382 + $0x1e8] sm:$0xff]
        %v526 = vld [vmem:[%s382 + $0x1f0] sm:$0xff]
        %v527 = vld [vmem:[%s382 + $0x1f8] sm:$0xff]
        %v528 = vld [vmem:[%s382 + $0x200] sm:$0xff]
        %v529 = vld [vmem:[%s382 + $0x208] sm:$0xff]
        %v530 = vld [vmem:[%s382 + $0x210] sm:$0xff]
        %v531 = vld [vmem:[%s382 + $0x218] sm:$0xff]
        %v532 = vld [vmem:[%s382 + $0x220] sm:$0xff]
        %v533 = vld [vmem:[%s382 + $0x228] sm:$0xff]
        %v534 = vld [vmem:[%s382 + $0x230] sm:$0xff]
        %v535 = vld [vmem:[%s382 + $0x238] sm:$0xff]
        %v536 = vld [vmem:[%s382 + $0x240] sm:$0xff]
        %v537 = vld [vmem:[%s382 + $0x248] sm:$0xff]
        %v538 = vld [vmem:[%s382 + $0x250] sm:$0xff]
        %v539 = vld [vmem:[%s382 + $0x258] sm:$0xff]
        %v540 = vld [vmem:[%s382 + $0x260] sm:$0xff]
        %v541 = vld [vmem:[%s382 + $0x268] sm:$0xff]
        %v542 = vld [vmem:[%s382 + $0x270] sm:$0xff]
        %v543 = vld [vmem:[%s382 + $0x278] sm:$0xff]
        %v544 = vld [vmem:[%s382 + $0x280] sm:$0xff]
        %v545 = vld [vmem:[%s382 + $0x288] sm:$0xff]
        %v546 = vld [vmem:[%s382 + $0x290] sm:$0xff]
        %v547 = vld [vmem:[%s382 + $0x298] sm:$0xff]
        %v548 = vld [vmem:[%s382 + $0x2a0] sm:$0xff]
        %v549 = vld [vmem:[%s382 + $0x2a8] sm:$0xff]
        %v550 = vld [vmem:[%s382 + $0x2b0] sm:$0xff]
        %v551 = vld [vmem:[%s382 + $0x2b8] sm:$0xff]
        %v552 = vld [vmem:[%s382 + $0x2c0] sm:$0xff]
        %v553 = vld [vmem:[%s382 + $0x2c8] sm:$0xff]
        %v554 = vld [vmem:[%s382 + $0x2d0] sm:$0xff]
        %v555 = vld [vmem:[%s382 + $0x2d8] sm:$0xff]
        %v556 = vld [vmem:[%s382 + $0x2e0] sm:$0xff]
        %v557 = vld [vmem:[%s382 + $0x2e8] sm:$0xff]
        %v558 = vld [vmem:[%s382 + $0x2f0] sm:$0xff]
        %v559 = vld [vmem:[%s382 + $0x2f8] sm:$0xff]
        %v560 = vld [vmem:[%s382 + $0x300] sm:$0xff]
        %v561 = vld [vmem:[%s382 + $0x308] sm:$0xff]
        %v562 = vld [vmem:[%s382 + $0x310] sm:$0xff]
        %v563 = vld [vmem:[%s382 + $0x318] sm:$0xff]
        %v564 = vld [vmem:[%s382 + $0x320] sm:$0xff]
        %v565 = vld [vmem:[%s382 + $0x328] sm:$0xff]
        %v566 = vld [vmem:[%s382 + $0x330] sm:$0xff]
        %v567 = vld [vmem:[%s382 + $0x338] sm:$0xff]
        %v568 = vld [vmem:[%s382 + $0x340] sm:$0xff]
        %v569 = vld [vmem:[%s382 + $0x348] sm:$0xff]
        %v570 = vld [vmem:[%s382 + $0x350] sm:$0xff]
        %v571 = vld [vmem:[%s382 + $0x358] sm:$0xff]
        %v572 = vld [vmem:[%s382 + $0x360] sm:$0xff]
        %v573 = vld [vmem:[%s382 + $0x368] sm:$0xff]
        %v574 = vld [vmem:[%s382 + $0x370] sm:$0xff]
        %v575 = vld [vmem:[%s382 + $0x378] sm:$0xff]
        %v576 = vld [vmem:[%s382 + $0x380] sm:$0xff]
        %v577 = vld [vmem:[%s382 + $0x388] sm:$0xff]
        %v578 = vld [vmem:[%s382 + $0x390] sm:$0xff]
        %v579 = vld [vmem:[%s382 + $0x398] sm:$0xff]
        %v580 = vld [vmem:[%s382 + $0x3a0] sm:$0xff]
        %v581 = vld [vmem:[%s382 + $0x3a8] sm:$0xff]
        %v582 = vld [vmem:[%s382 + $0x3b0] sm:$0xff]
        %v583 = vld [vmem:[%s382 + $0x3b8] sm:$0xff]
        %v584 = vld [vmem:[%s382 + $0x3c0] sm:$0xff]
        %v585 = vld [vmem:[%s382 + $0x3c8] sm:$0xff]
        %v586 = vld [vmem:[%s382 + $0x3d0] sm:$0xff]
        %v587 = vld [vmem:[%s382 + $0x3d8] sm:$0xff]
        %v588 = vld [vmem:[%s382 + $0x3e0] sm:$0xff]
        %v589 = vld [vmem:[%s382 + $0x3e8] sm:$0xff]
        %v590 = vld [vmem:[%s382 + $0x3f0] sm:$0xff]
        %v591 = vld [vmem:[%s382 + $0x3f8] sm:$0xff]
        %v592 = vld [vmem:[%s382 + $0x400] sm:$0xff]
        %v593 = vld [vmem:[%s382 + $0x408] sm:$0xff]
        %v594 = vld [vmem:[%s382 + $0x410] sm:$0xff]
        %v595 = vld [vmem:[%s382 + $0x418] sm:$0xff]
        %v596 = vld [vmem:[%s382 + $0x420] sm:$0xff]
        %v597 = vld [vmem:[%s382 + $0x428] sm:$0xff]
        %v598 = vld [vmem:[%s382 + $0x430] sm:$0xff]
        %v599 = vld [vmem:[%s382 + $0x438] sm:$0xff]
        %v600 = vld [vmem:[%s382 + $0x440] sm:$0xff]
        %v601 = vld [vmem:[%s382 + $0x448] sm:$0xff]
        %v602 = vld [vmem:[%s382 + $0x450] sm:$0xff]
        %v603 = vld [vmem:[%s382 + $0x458] sm:$0xff]
        %v604 = vld [vmem:[%s382 + $0x460] sm:$0xff]
        %v605 = vld [vmem:[%s382 + $0x468] sm:$0xff]
        %v606 = vld [vmem:[%s382 + $0x470] sm:$0xff]
        %v607 = vld [vmem:[%s382 + $0x478] sm:$0xff]
        %v608 = vld [vmem:[%s382 + $0x480] sm:$0xff]
        %v609 = vld [vmem:[%s382 + $0x488] sm:$0xff]
        %v610 = vld [vmem:[%s382 + $0x490] sm:$0xff]
        %v611 = vld [vmem:[%s382 + $0x498] sm:$0xff]
        %v612 = vld [vmem:[%s382 + $0x4a0] sm:$0xff]
        %v613 = vld [vmem:[%s382 + $0x4a8] sm:$0xff]
        %v614 = vld [vmem:[%s382 + $0x4b0] sm:$0xff]
        %v615 = vld [vmem:[%s382 + $0x4b8] sm:$0xff]
        %v616 = vld [vmem:[%s382 + $0x4c0] sm:$0xff]
        %v617 = vld [vmem:[%s382 + $0x4c8] sm:$0xff]
        %v618 = vld [vmem:[%s382 + $0x4d0] sm:$0xff]
        %v619 = vld [vmem:[%s382 + $0x4d8] sm:$0xff]
        %v620 = vld [vmem:[%s382 + $0x4e0] sm:$0xff]
        %v621 = vld [vmem:[%s382 + $0x4e8] sm:$0xff]
        %v622 = vld [vmem:[%s382 + $0x4f0] sm:$0xff]
        %v623 = vld [vmem:[%s382 + $0x4f8] sm:$0xff]
        %v624 = vld [vmem:[%s382 + $0x500] sm:$0xff]
        %v625 = vld [vmem:[%s382 + $0x508] sm:$0xff]
        %v626 = vld [vmem:[%s382 + $0x510] sm:$0xff]
        %v627 = vld [vmem:[%s382 + $0x518] sm:$0xff]
        %v628 = vld [vmem:[%s382 + $0x520] sm:$0xff]
        %v629 = vld [vmem:[%s382 + $0x528] sm:$0xff]
        %v630 = vld [vmem:[%s382 + $0x530] sm:$0xff]
        %v631 = vld [vmem:[%s382 + $0x538] sm:$0xff]
        %v632 = vld [vmem:[%s382 + $0x540] sm:$0xff]
        %v633 = vld [vmem:[%s382 + $0x548] sm:$0xff]
        %v634 = vld [vmem:[%s382 + $0x550] sm:$0xff]
        %v635 = vld [vmem:[%s382 + $0x558] sm:$0xff]
        %v636 = vld [vmem:[%s382 + $0x560] sm:$0xff]
        %v637 = vld [vmem:[%s382 + $0x568] sm:$0xff]
        %v638 = vld [vmem:[%s382 + $0x570] sm:$0xff]
        %v639 = vld [vmem:[%s382 + $0x578] sm:$0xff]
        %v640 = vld [vmem:[%s382 + $0x580] sm:$0xff]
        %v641 = vld [vmem:[%s382 + $0x588] sm:$0xff]
        %v642 = vld [vmem:[%s382 + $0x590] sm:$0xff]
        %v643 = vld [vmem:[%s382 + $0x598] sm:$0xff]
        %v644 = vld [vmem:[%s382 + $0x5a0] sm:$0xff]
        %v645 = vld [vmem:[%s382 + $0x5a8] sm:$0xff]
        %v646 = vld [vmem:[%s382 + $0x5b0] sm:$0xff]
        %v647 = vld [vmem:[%s382 + $0x5b8] sm:$0xff]
        %v648 = vld [vmem:[%s382 + $0x5c0] sm:$0xff]
        %v649 = vld [vmem:[%s382 + $0x5c8] sm:$0xff]
        %v650 = vld [vmem:[%s382 + $0x5d0] sm:$0xff]
        %v651 = vld [vmem:[%s382 + $0x5d8] sm:$0xff]
        %v652 = vld [vmem:[%s382 + $0x5e0] sm:$0xff]
        %v653 = vld [vmem:[%s382 + $0x5e8] sm:$0xff]
        %v654 = vld [vmem:[%s382 + $0x5f0] sm:$0xff]
        %v655 = vld [vmem:[%s382 + $0x5f8] sm:$0xff]
        %v656 = vpack.c.bf16 %v472, %v464
        %v657 = vpack.c.bf16 %v473, %v465
        %v658 = vpack.c.bf16 %v474, %v466
        %v659 = vpack.c.bf16 %v475, %v467
        %v660 = vpack.c.bf16 %v476, %v468
        %v661 = vpack.c.bf16 %v477, %v469
        %v662 = vpack.c.bf16 %v478, %v470
        %v663 = vpack.c.bf16 %v479, %v471
        %v664 = vpack.c.bf16 %v488, %v480
        %v665 = vpack.c.bf16 %v489, %v481
        %v666 = vpack.c.bf16 %v490, %v482
        %v667 = vpack.c.bf16 %v491, %v483
        %v668 = vpack.c.bf16 %v492, %v484
        %v669 = vpack.c.bf16 %v493, %v485
        %v670 = vpack.c.bf16 %v494, %v486
        %v671 = vpack.c.bf16 %v495, %v487
        %v672 = vpack.c.bf16 %v504, %v496
        %v673 = vpack.c.bf16 %v505, %v497
        %v674 = vpack.c.bf16 %v506, %v498
        %v675 = vpack.c.bf16 %v507, %v499
        %v676 = vpack.c.bf16 %v508, %v500
        %v677 = vpack.c.bf16 %v509, %v501
        %v678 = vpack.c.bf16 %v510, %v502
        %v679 = vpack.c.bf16 %v511, %v503
        %v680 = vpack.c.bf16 %v520, %v512
        %v681 = vpack.c.bf16 %v521, %v513
        %v682 = vpack.c.bf16 %v522, %v514
        %v683 = vpack.c.bf16 %v523, %v515
        %v684 = vpack.c.bf16 %v524, %v516
        %v685 = vpack.c.bf16 %v525, %v517
        %v686 = vpack.c.bf16 %v526, %v518
        %v687 = vpack.c.bf16 %v527, %v519
        %v688 = vpack.c.bf16 %v536, %v528
        %v689 = vpack.c.bf16 %v537, %v529
        %v690 = vpack.c.bf16 %v538, %v530
        %v691 = vpack.c.bf16 %v539, %v531
        %v692 = vpack.c.bf16 %v540, %v532
        %v693 = vpack.c.bf16 %v541, %v533
        %v694 = vpack.c.bf16 %v542, %v534
        %v695 = vpack.c.bf16 %v543, %v535
        %v696 = vpack.c.bf16 %v552, %v544
        %v697 = vpack.c.bf16 %v553, %v545
        %v698 = vpack.c.bf16 %v554, %v546
        %v699 = vpack.c.bf16 %v555, %v547
        %v700 = vpack.c.bf16 %v556, %v548
        %v701 = vpack.c.bf16 %v557, %v549
        %v702 = vpack.c.bf16 %v558, %v550
        %v703 = vpack.c.bf16 %v559, %v551
        %v704 = vpack.c.bf16 %v568, %v560
        %v705 = vpack.c.bf16 %v569, %v561
        %v706 = vpack.c.bf16 %v570, %v562
        %v707 = vpack.c.bf16 %v571, %v563
        %v708 = vpack.c.bf16 %v572, %v564
        %v709 = vpack.c.bf16 %v573, %v565
        %v710 = vpack.c.bf16 %v574, %v566
        %v711 = vpack.c.bf16 %v575, %v567
        %v712 = vpack.c.bf16 %v584, %v576
        %v713 = vpack.c.bf16 %v585, %v577
        %v714 = vpack.c.bf16 %v586, %v578
        %v715 = vpack.c.bf16 %v587, %v579
        %v716 = vpack.c.bf16 %v588, %v580
        %v717 = vpack.c.bf16 %v589, %v581
        %v718 = vpack.c.bf16 %v590, %v582
        %v719 = vpack.c.bf16 %v591, %v583
        %v720 = vpack.c.bf16 %v600, %v592
        %v721 = vpack.c.bf16 %v601, %v593
        %v722 = vpack.c.bf16 %v602, %v594
        %v723 = vpack.c.bf16 %v603, %v595
        %v724 = vpack.c.bf16 %v604, %v596
        %v725 = vpack.c.bf16 %v605, %v597
        %v726 = vpack.c.bf16 %v606, %v598
        %v727 = vpack.c.bf16 %v607, %v599
        %v728 = vpack.c.bf16 %v616, %v608
        %v729 = vpack.c.bf16 %v617, %v609
        %v730 = vpack.c.bf16 %v618, %v610
        %v731 = vpack.c.bf16 %v619, %v611
        %v732 = vpack.c.bf16 %v620, %v612
        %v733 = vpack.c.bf16 %v621, %v613
        %v734 = vpack.c.bf16 %v622, %v614
        %v735 = vpack.c.bf16 %v623, %v615
        %v736 = vpack.c.bf16 %v632, %v624
        %v737 = vpack.c.bf16 %v633, %v625
        %v738 = vpack.c.bf16 %v634, %v626
        %v739 = vpack.c.bf16 %v635, %v627
        %v740 = vpack.c.bf16 %v636, %v628
        %v741 = vpack.c.bf16 %v637, %v629
        %v742 = vpack.c.bf16 %v638, %v630
        %v743 = vpack.c.bf16 %v639, %v631
        %v744 = vpack.c.bf16 %v648, %v640
        %v745 = vpack.c.bf16 %v649, %v641
        %v746 = vpack.c.bf16 %v650, %v642
        %v747 = vpack.c.bf16 %v651, %v643
        %v748 = vpack.c.bf16 %v652, %v644
        %v749 = vpack.c.bf16 %v653, %v645
        %v750 = vpack.c.bf16 %v654, %v646
        %v751 = vpack.c.bf16 %v655, %v647
        %v752 = vld [vmem:[#allocation5] sm:$0xff]
        %v753 = vld [vmem:[#allocation5 + $0x8] sm:$0xff]
        %v754 = vld [vmem:[#allocation5 + $0x10] sm:$0xff]
        %v755 = vld [vmem:[#allocation5 + $0x18] sm:$0xff]
        %v756 = vld [vmem:[#allocation5 + $0x20] sm:$0xff]
        %v757 = vld [vmem:[#allocation5 + $0x28] sm:$0xff]
        %v758 = vld [vmem:[#allocation5 + $0x30] sm:$0xff]
        %v759 = vld [vmem:[#allocation5 + $0x38] sm:$0xff]
        %v760 = vld [vmem:[#allocation5 + $0x40] sm:$0xff]
        %v761 = vld [vmem:[#allocation5 + $0x48] sm:$0xff]
        %v762 = vld [vmem:[#allocation5 + $0x50] sm:$0xff]
        %v763 = vld [vmem:[#allocation5 + $0x58] sm:$0xff]
        %v764 = vld [vmem:[#allocation5 + $0x60] sm:$0xff]
        %v765 = vld [vmem:[#allocation5 + $0x68] sm:$0xff]
        %v766 = vld [vmem:[#allocation5 + $0x70] sm:$0xff]
        %v767 = vld [vmem:[#allocation5 + $0x78] sm:$0xff]
        %v768 = vld [vmem:[#allocation5 + $0x80] sm:$0xff]
        %v769 = vld [vmem:[#allocation5 + $0x88] sm:$0xff]
        %v770 = vld [vmem:[#allocation5 + $0x90] sm:$0xff]
        %v771 = vld [vmem:[#allocation5 + $0x98] sm:$0xff]
        %v772 = vld [vmem:[#allocation5 + $0xa0] sm:$0xff]
        %v773 = vld [vmem:[#allocation5 + $0xa8] sm:$0xff]
        %v774 = vld [vmem:[#allocation5 + $0xb0] sm:$0xff]
        %v775 = vld [vmem:[#allocation5 + $0xb8] sm:$0xff]
        %v776 = vld [vmem:[#allocation5 + $0xc0] sm:$0xff]
        %v777 = vld [vmem:[#allocation5 + $0xc8] sm:$0xff]
        %v778 = vld [vmem:[#allocation5 + $0xd0] sm:$0xff]
        %v779 = vld [vmem:[#allocation5 + $0xd8] sm:$0xff]
        %v780 = vld [vmem:[#allocation5 + $0xe0] sm:$0xff]
        %v781 = vld [vmem:[#allocation5 + $0xe8] sm:$0xff]
        %v782 = vld [vmem:[#allocation5 + $0xf0] sm:$0xff]
        %v783 = vld [vmem:[#allocation5 + $0xf8] sm:$0xff]
        %v784 = vld [vmem:[#allocation5 + $0x100] sm:$0xff]
        %v785 = vld [vmem:[#allocation5 + $0x108] sm:$0xff]
        %v786 = vld [vmem:[#allocation5 + $0x110] sm:$0xff]
        %v787 = vld [vmem:[#allocation5 + $0x118] sm:$0xff]
        %v788 = vld [vmem:[#allocation5 + $0x120] sm:$0xff]
        %v789 = vld [vmem:[#allocation5 + $0x128] sm:$0xff]
        %v790 = vld [vmem:[#allocation5 + $0x130] sm:$0xff]
        %v791 = vld [vmem:[#allocation5 + $0x138] sm:$0xff]
        %v792 = vld [vmem:[#allocation5 + $0x140] sm:$0xff]
        %v793 = vld [vmem:[#allocation5 + $0x148] sm:$0xff]
        %v794 = vld [vmem:[#allocation5 + $0x150] sm:$0xff]
        %v795 = vld [vmem:[#allocation5 + $0x158] sm:$0xff]
        %v796 = vld [vmem:[#allocation5 + $0x160] sm:$0xff]
        %v797 = vld [vmem:[#allocation5 + $0x168] sm:$0xff]
        %v798 = vld [vmem:[#allocation5 + $0x170] sm:$0xff]
        %v799 = vld [vmem:[#allocation5 + $0x178] sm:$0xff]
        %v800 = vld [vmem:[#allocation5 + $0x180] sm:$0xff]
        %v801 = vld [vmem:[#allocation5 + $0x188] sm:$0xff]
        %v802 = vld [vmem:[#allocation5 + $0x190] sm:$0xff]
        %v803 = vld [vmem:[#allocation5 + $0x198] sm:$0xff]
        %v804 = vld [vmem:[#allocation5 + $0x1a0] sm:$0xff]
        %v805 = vld [vmem:[#allocation5 + $0x1a8] sm:$0xff]
        %v806 = vld [vmem:[#allocation5 + $0x1b0] sm:$0xff]
        %v807 = vld [vmem:[#allocation5 + $0x1b8] sm:$0xff]
        %v808 = vld [vmem:[#allocation5 + $0x1c0] sm:$0xff]
        %v809 = vld [vmem:[#allocation5 + $0x1c8] sm:$0xff]
        %v810 = vld [vmem:[#allocation5 + $0x1d0] sm:$0xff]
        %v811 = vld [vmem:[#allocation5 + $0x1d8] sm:$0xff]
        %v812 = vld [vmem:[#allocation5 + $0x1e0] sm:$0xff]
        %v813 = vld [vmem:[#allocation5 + $0x1e8] sm:$0xff]
        %v814 = vld [vmem:[#allocation5 + $0x1f0] sm:$0xff]
        %v815 = vld [vmem:[#allocation5 + $0x1f8] sm:$0xff]
        %v816 = vld [vmem:[#allocation5 + $0x200] sm:$0xff]
        %v817 = vld [vmem:[#allocation5 + $0x208] sm:$0xff]
        %v818 = vld [vmem:[#allocation5 + $0x210] sm:$0xff]
        %v819 = vld [vmem:[#allocation5 + $0x218] sm:$0xff]
        %v820 = vld [vmem:[#allocation5 + $0x220] sm:$0xff]
        %v821 = vld [vmem:[#allocation5 + $0x228] sm:$0xff]
        %v822 = vld [vmem:[#allocation5 + $0x230] sm:$0xff]
        %v823 = vld [vmem:[#allocation5 + $0x238] sm:$0xff]
        %v824 = vld [vmem:[#allocation5 + $0x240] sm:$0xff]
        %v825 = vld [vmem:[#allocation5 + $0x248] sm:$0xff]
        %v826 = vld [vmem:[#allocation5 + $0x250] sm:$0xff]
        %v827 = vld [vmem:[#allocation5 + $0x258] sm:$0xff]
        %v828 = vld [vmem:[#allocation5 + $0x260] sm:$0xff]
        %v829 = vld [vmem:[#allocation5 + $0x268] sm:$0xff]
        %v830 = vld [vmem:[#allocation5 + $0x270] sm:$0xff]
        %v831 = vld [vmem:[#allocation5 + $0x278] sm:$0xff]
        %v832 = vld [vmem:[#allocation5 + $0x280] sm:$0xff]
        %v833 = vld [vmem:[#allocation5 + $0x288] sm:$0xff]
        %v834 = vld [vmem:[#allocation5 + $0x290] sm:$0xff]
        %v835 = vld [vmem:[#allocation5 + $0x298] sm:$0xff]
        %v836 = vld [vmem:[#allocation5 + $0x2a0] sm:$0xff]
        %v837 = vld [vmem:[#allocation5 + $0x2a8] sm:$0xff]
        %v838 = vld [vmem:[#allocation5 + $0x2b0] sm:$0xff]
        %v839 = vld [vmem:[#allocation5 + $0x2b8] sm:$0xff]
        %v840 = vld [vmem:[#allocation5 + $0x2c0] sm:$0xff]
        %v841 = vld [vmem:[#allocation5 + $0x2c8] sm:$0xff]
        %v842 = vld [vmem:[#allocation5 + $0x2d0] sm:$0xff]
        %v843 = vld [vmem:[#allocation5 + $0x2d8] sm:$0xff]
        %v844 = vld [vmem:[#allocation5 + $0x2e0] sm:$0xff]
        %v845 = vld [vmem:[#allocation5 + $0x2e8] sm:$0xff]
        %v846 = vld [vmem:[#allocation5 + $0x2f0] sm:$0xff]
        %v847 = vld [vmem:[#allocation5 + $0x2f8] sm:$0xff]
        %v848 = vld [vmem:[#allocation5 + $0x300] sm:$0xff]
        %v849 = vld [vmem:[#allocation5 + $0x308] sm:$0xff]
        %v850 = vld [vmem:[#allocation5 + $0x310] sm:$0xff]
        %v851 = vld [vmem:[#allocation5 + $0x318] sm:$0xff]
        %v852 = vld [vmem:[#allocation5 + $0x320] sm:$0xff]
        %v853 = vld [vmem:[#allocation5 + $0x328] sm:$0xff]
        %v854 = vld [vmem:[#allocation5 + $0x330] sm:$0xff]
        %v855 = vld [vmem:[#allocation5 + $0x338] sm:$0xff]
        %v856 = vld [vmem:[#allocation5 + $0x340] sm:$0xff]
        %v857 = vld [vmem:[#allocation5 + $0x348] sm:$0xff]
        %v858 = vld [vmem:[#allocation5 + $0x350] sm:$0xff]
        %v859 = vld [vmem:[#allocation5 + $0x358] sm:$0xff]
        %v860 = vld [vmem:[#allocation5 + $0x360] sm:$0xff]
        %v861 = vld [vmem:[#allocation5 + $0x368] sm:$0xff]
        %v862 = vld [vmem:[#allocation5 + $0x370] sm:$0xff]
        %v863 = vld [vmem:[#allocation5 + $0x378] sm:$0xff]
        %v864 = vld [vmem:[#allocation5 + $0x380] sm:$0xff]
        %v865 = vld [vmem:[#allocation5 + $0x388] sm:$0xff]
        %v866 = vld [vmem:[#allocation5 + $0x390] sm:$0xff]
        %v867 = vld [vmem:[#allocation5 + $0x398] sm:$0xff]
        %v868 = vld [vmem:[#allocation5 + $0x3a0] sm:$0xff]
        %v869 = vld [vmem:[#allocation5 + $0x3a8] sm:$0xff]
        %v870 = vld [vmem:[#allocation5 + $0x3b0] sm:$0xff]
        %v871 = vld [vmem:[#allocation5 + $0x3b8] sm:$0xff]
        %v872 = vld [vmem:[#allocation5 + $0x3c0] sm:$0xff]
        %v873 = vld [vmem:[#allocation5 + $0x3c8] sm:$0xff]
        %v874 = vld [vmem:[#allocation5 + $0x3d0] sm:$0xff]
        %v875 = vld [vmem:[#allocation5 + $0x3d8] sm:$0xff]
        %v876 = vld [vmem:[#allocation5 + $0x3e0] sm:$0xff]
        %v877 = vld [vmem:[#allocation5 + $0x3e8] sm:$0xff]
        %v878 = vld [vmem:[#allocation5 + $0x3f0] sm:$0xff]
        %v879 = vld [vmem:[#allocation5 + $0x3f8] sm:$0xff]
        %v880 = vld [vmem:[#allocation7] sm:$0x3]
        %v882 = vperm.slane %v880, 0
        %v883 = vperm.slane %v880, 1
        %v1014 = vunpack.c.l.b16 %v752
        %v1015 = vunpack.c.h.b16 %v752
        %v1016 = vunpack.c.l.b16 %v753
        %v1017 = vunpack.c.h.b16 %v753
        %v1018 = vunpack.c.l.b16 %v754
        %v1019 = vunpack.c.h.b16 %v754
        %v1020 = vunpack.c.l.b16 %v755
        %v1021 = vunpack.c.h.b16 %v755
        %v1022 = vunpack.c.l.b16 %v756
        %v1023 = vunpack.c.h.b16 %v756
        %v1024 = vunpack.c.l.b16 %v757
        %v1025 = vunpack.c.h.b16 %v757
        %v1026 = vunpack.c.l.b16 %v758
        %v1027 = vunpack.c.h.b16 %v758
        %v1028 = vunpack.c.l.b16 %v759
        %v1029 = vunpack.c.h.b16 %v759
        %v1030 = vunpack.c.l.b16 %v760
        %v1031 = vunpack.c.h.b16 %v760
        %v1032 = vunpack.c.l.b16 %v761
        %v1033 = vunpack.c.h.b16 %v761
        %v1034 = vunpack.c.l.b16 %v762
        %v1035 = vunpack.c.h.b16 %v762
        %v1036 = vunpack.c.l.b16 %v763
        %v1037 = vunpack.c.h.b16 %v763
        %v1038 = vunpack.c.l.b16 %v764
        %v1039 = vunpack.c.h.b16 %v764
        %v1040 = vunpack.c.l.b16 %v765
        %v1041 = vunpack.c.h.b16 %v765
        %v1042 = vunpack.c.l.b16 %v766
        %v1043 = vunpack.c.h.b16 %v766
        %v1044 = vunpack.c.l.b16 %v767
        %v1045 = vunpack.c.h.b16 %v767
        %v1046 = vunpack.c.l.b16 %v768
        %v1047 = vunpack.c.h.b16 %v768
        %v1048 = vunpack.c.l.b16 %v769
        %v1049 = vunpack.c.h.b16 %v769
        %v1050 = vunpack.c.l.b16 %v770
        %v1051 = vunpack.c.h.b16 %v770
        %v1052 = vunpack.c.l.b16 %v771
        %v1053 = vunpack.c.h.b16 %v771
        %v1054 = vunpack.c.l.b16 %v772
        %v1055 = vunpack.c.h.b16 %v772
        %v1056 = vunpack.c.l.b16 %v773
        %v1057 = vunpack.c.h.b16 %v773
        %v1058 = vunpack.c.l.b16 %v774
        %v1059 = vunpack.c.h.b16 %v774
        %v1060 = vunpack.c.l.b16 %v775
        %v1061 = vunpack.c.h.b16 %v775
        %v1062 = vunpack.c.l.b16 %v776
        %v1063 = vunpack.c.h.b16 %v776
        %v1064 = vunpack.c.l.b16 %v777
        %v1065 = vunpack.c.h.b16 %v777
        %v1066 = vunpack.c.l.b16 %v778
        %v1067 = vunpack.c.h.b16 %v778
        %v1068 = vunpack.c.l.b16 %v779
        %v1069 = vunpack.c.h.b16 %v779
        %v1070 = vunpack.c.l.b16 %v780
        %v1071 = vunpack.c.h.b16 %v780
        %v1072 = vunpack.c.l.b16 %v781
        %v1073 = vunpack.c.h.b16 %v781
        %v1074 = vunpack.c.l.b16 %v782
        %v1075 = vunpack.c.h.b16 %v782
        %v1076 = vunpack.c.l.b16 %v783
        %v1077 = vunpack.c.h.b16 %v783
        %v1078 = vunpack.c.l.b16 %v784
        %v1079 = vunpack.c.h.b16 %v784
        %v1080 = vunpack.c.l.b16 %v785
        %v1081 = vunpack.c.h.b16 %v785
        %v1082 = vunpack.c.l.b16 %v786
        %v1083 = vunpack.c.h.b16 %v786
        %v1084 = vunpack.c.l.b16 %v787
        %v1085 = vunpack.c.h.b16 %v787
        %v1086 = vunpack.c.l.b16 %v788
        %v1087 = vunpack.c.h.b16 %v788
        %v1088 = vunpack.c.l.b16 %v789
        %v1089 = vunpack.c.h.b16 %v789
        %v1090 = vunpack.c.l.b16 %v790
        %v1091 = vunpack.c.h.b16 %v790
        %v1092 = vunpack.c.l.b16 %v791
        %v1093 = vunpack.c.h.b16 %v791
        %v1094 = vunpack.c.l.b16 %v792
        %v1095 = vunpack.c.h.b16 %v792
        %v1096 = vunpack.c.l.b16 %v793
        %v1097 = vunpack.c.h.b16 %v793
        %v1098 = vunpack.c.l.b16 %v794
        %v1099 = vunpack.c.h.b16 %v794
        %v1100 = vunpack.c.l.b16 %v795
        %v1101 = vunpack.c.h.b16 %v795
        %v1102 = vunpack.c.l.b16 %v796
        %v1103 = vunpack.c.h.b16 %v796
        %v1104 = vunpack.c.l.b16 %v797
        %v1105 = vunpack.c.h.b16 %v797
        %v1106 = vunpack.c.l.b16 %v798
        %v1107 = vunpack.c.h.b16 %v798
        %v1108 = vunpack.c.l.b16 %v799
        %v1109 = vunpack.c.h.b16 %v799
        %v1110 = vunpack.c.l.b16 %v800
        %v1111 = vunpack.c.h.b16 %v800
        %v1112 = vunpack.c.l.b16 %v801
        %v1113 = vunpack.c.h.b16 %v801
        %v1114 = vunpack.c.l.b16 %v802
        %v1115 = vunpack.c.h.b16 %v802
        %v1116 = vunpack.c.l.b16 %v803
        %v1117 = vunpack.c.h.b16 %v803
        %v1118 = vunpack.c.l.b16 %v804
        %v1119 = vunpack.c.h.b16 %v804
        %v1120 = vunpack.c.l.b16 %v805
        %v1121 = vunpack.c.h.b16 %v805
        %v1122 = vunpack.c.l.b16 %v806
        %v1123 = vunpack.c.h.b16 %v806
        %v1124 = vunpack.c.l.b16 %v807
        %v1125 = vunpack.c.h.b16 %v807
        %v1126 = vunpack.c.l.b16 %v808
        %v1127 = vunpack.c.h.b16 %v808
        %v1128 = vunpack.c.l.b16 %v809
        %v1129 = vunpack.c.h.b16 %v809
        %v1130 = vunpack.c.l.b16 %v810
        %v1131 = vunpack.c.h.b16 %v810
        %v1132 = vunpack.c.l.b16 %v811
        %v1133 = vunpack.c.h.b16 %v811
        %v1134 = vunpack.c.l.b16 %v812
        %v1135 = vunpack.c.h.b16 %v812
        %v1136 = vunpack.c.l.b16 %v813
        %v1137 = vunpack.c.h.b16 %v813
        %v1138 = vunpack.c.l.b16 %v814
        %v1139 = vunpack.c.h.b16 %v814
        %v1140 = vunpack.c.l.b16 %v815
        %v1141 = vunpack.c.h.b16 %v815
        %v1142 = vunpack.c.l.b16 %v816
        %v1143 = vunpack.c.h.b16 %v816
        %v1144 = vunpack.c.l.b16 %v817
        %v1145 = vunpack.c.h.b16 %v817
        %v1146 = vunpack.c.l.b16 %v818
        %v1147 = vunpack.c.h.b16 %v818
        %v1148 = vunpack.c.l.b16 %v819
        %v1149 = vunpack.c.h.b16 %v819
        %v1150 = vunpack.c.l.b16 %v820
        %v1151 = vunpack.c.h.b16 %v820
        %v1152 = vunpack.c.l.b16 %v821
        %v1153 = vunpack.c.h.b16 %v821
        %v1154 = vunpack.c.l.b16 %v822
        %v1155 = vunpack.c.h.b16 %v822
        %v1156 = vunpack.c.l.b16 %v823
        %v1157 = vunpack.c.h.b16 %v823
        %v1158 = vunpack.c.l.b16 %v824
        %v1159 = vunpack.c.h.b16 %v824
        %v1160 = vunpack.c.l.b16 %v825
        %v1161 = vunpack.c.h.b16 %v825
        %v1162 = vunpack.c.l.b16 %v826
        %v1163 = vunpack.c.h.b16 %v826
        %v1164 = vunpack.c.l.b16 %v827
        %v1165 = vunpack.c.h.b16 %v827
        %v1166 = vunpack.c.l.b16 %v828
        %v1167 = vunpack.c.h.b16 %v828
        %v1168 = vunpack.c.l.b16 %v829
        %v1169 = vunpack.c.h.b16 %v829
        %v1170 = vunpack.c.l.b16 %v830
        %v1171 = vunpack.c.h.b16 %v830
        %v1172 = vunpack.c.l.b16 %v831
        %v1173 = vunpack.c.h.b16 %v831
        %v1174 = vunpack.c.l.b16 %v832
        %v1175 = vunpack.c.h.b16 %v832
        %v1176 = vunpack.c.l.b16 %v833
        %v1177 = vunpack.c.h.b16 %v833
        %v1178 = vunpack.c.l.b16 %v834
        %v1179 = vunpack.c.h.b16 %v834
        %v1180 = vunpack.c.l.b16 %v835
        %v1181 = vunpack.c.h.b16 %v835
        %v1182 = vunpack.c.l.b16 %v836
        %v1183 = vunpack.c.h.b16 %v836
        %v1184 = vunpack.c.l.b16 %v837
        %v1185 = vunpack.c.h.b16 %v837
        %v1186 = vunpack.c.l.b16 %v838
        %v1187 = vunpack.c.h.b16 %v838
        %v1188 = vunpack.c.l.b16 %v839
        %v1189 = vunpack.c.h.b16 %v839
        %v1190 = vunpack.c.l.b16 %v840
        %v1191 = vunpack.c.h.b16 %v840
        %v1192 = vunpack.c.l.b16 %v841
        %v1193 = vunpack.c.h.b16 %v841
        %v1194 = vunpack.c.l.b16 %v842
        %v1195 = vunpack.c.h.b16 %v842
        %v1196 = vunpack.c.l.b16 %v843
        %v1197 = vunpack.c.h.b16 %v843
        %v1198 = vunpack.c.l.b16 %v844
        %v1199 = vunpack.c.h.b16 %v844
        %v1200 = vunpack.c.l.b16 %v845
        %v1201 = vunpack.c.h.b16 %v845
        %v1202 = vunpack.c.l.b16 %v846
        %v1203 = vunpack.c.h.b16 %v846
        %v1204 = vunpack.c.l.b16 %v847
        %v1205 = vunpack.c.h.b16 %v847
        %v1206 = vunpack.c.l.b16 %v848
        %v1207 = vunpack.c.h.b16 %v848
        %v1208 = vunpack.c.l.b16 %v849
        %v1209 = vunpack.c.h.b16 %v849
        %v1210 = vunpack.c.l.b16 %v850
        %v1211 = vunpack.c.h.b16 %v850
        %v1212 = vunpack.c.l.b16 %v851
        %v1213 = vunpack.c.h.b16 %v851
        %v1214 = vunpack.c.l.b16 %v852
        %v1215 = vunpack.c.h.b16 %v852
        %v1216 = vunpack.c.l.b16 %v853
        %v1217 = vunpack.c.h.b16 %v853
        %v1218 = vunpack.c.l.b16 %v854
        %v1219 = vunpack.c.h.b16 %v854
        %v1220 = vunpack.c.l.b16 %v855
        %v1221 = vunpack.c.h.b16 %v855
        %v1222 = vunpack.c.l.b16 %v856
        %v1223 = vunpack.c.h.b16 %v856
        %v1224 = vunpack.c.l.b16 %v857
        %v1225 = vunpack.c.h.b16 %v857
        %v1226 = vunpack.c.l.b16 %v858
        %v1227 = vunpack.c.h.b16 %v858
        %v1228 = vunpack.c.l.b16 %v859
        %v1229 = vunpack.c.h.b16 %v859
        %v1230 = vunpack.c.l.b16 %v860
        %v1231 = vunpack.c.h.b16 %v860
        %v1232 = vunpack.c.l.b16 %v861
        %v1233 = vunpack.c.h.b16 %v861
        %v1234 = vunpack.c.l.b16 %v862
        %v1235 = vunpack.c.h.b16 %v862
        %v1236 = vunpack.c.l.b16 %v863
        %v1237 = vunpack.c.h.b16 %v863
        %v1238 = vunpack.c.l.b16 %v864
        %v1239 = vunpack.c.h.b16 %v864
        %v1240 = vunpack.c.l.b16 %v865
        %v1241 = vunpack.c.h.b16 %v865
        %v1242 = vunpack.c.l.b16 %v866
        %v1243 = vunpack.c.h.b16 %v866
        %v1244 = vunpack.c.l.b16 %v867
        %v1245 = vunpack.c.h.b16 %v867
        %v1246 = vunpack.c.l.b16 %v868
        %v1247 = vunpack.c.h.b16 %v868
        %v1248 = vunpack.c.l.b16 %v869
        %v1249 = vunpack.c.h.b16 %v869
        %v1250 = vunpack.c.l.b16 %v870
        %v1251 = vunpack.c.h.b16 %v870
        %v1252 = vunpack.c.l.b16 %v871
        %v1253 = vunpack.c.h.b16 %v871
        %v1254 = vunpack.c.l.b16 %v872
        %v1255 = vunpack.c.h.b16 %v872
        %v1256 = vunpack.c.l.b16 %v873
        %v1257 = vunpack.c.h.b16 %v873
        %v1258 = vunpack.c.l.b16 %v874
        %v1259 = vunpack.c.h.b16 %v874
        %v1260 = vunpack.c.l.b16 %v875
        %v1261 = vunpack.c.h.b16 %v875
        %v1262 = vunpack.c.l.b16 %v876
        %v1263 = vunpack.c.h.b16 %v876
        %v1264 = vunpack.c.l.b16 %v877
        %v1265 = vunpack.c.h.b16 %v877
        %v1266 = vunpack.c.l.b16 %v878
        %v1267 = vunpack.c.h.b16 %v878
        %v1268 = vunpack.c.l.b16 %v879
        %v1269 = vunpack.c.h.b16 %v879
        %v1270 = vpack.c.b16 %v1016, %v1014
        %v1271 = vpack.c.b16 %v1017, %v1015
        %v1272 = vpack.c.b16 %v1020, %v1018
        %v1273 = vpack.c.b16 %v1021, %v1019
        %v1274 = vpack.c.b16 %v1024, %v1022
        %v1275 = vpack.c.b16 %v1025, %v1023
        %v1276 = vpack.c.b16 %v1028, %v1026
        %v1277 = vpack.c.b16 %v1029, %v1027
        %v1278 = vpack.c.b16 %v1032, %v1030
        %v1279 = vpack.c.b16 %v1033, %v1031
        %v1280 = vpack.c.b16 %v1036, %v1034
        %v1281 = vpack.c.b16 %v1037, %v1035
        %v1282 = vpack.c.b16 %v1040, %v1038
        %v1283 = vpack.c.b16 %v1041, %v1039
        %v1284 = vpack.c.b16 %v1044, %v1042
        %v1285 = vpack.c.b16 %v1045, %v1043
        %v1286 = vpack.c.b16 %v1048, %v1046
        %v1287 = vpack.c.b16 %v1049, %v1047
        %v1288 = vpack.c.b16 %v1052, %v1050
        %v1289 = vpack.c.b16 %v1053, %v1051
        %v1290 = vpack.c.b16 %v1056, %v1054
        %v1291 = vpack.c.b16 %v1057, %v1055
        %v1292 = vpack.c.b16 %v1060, %v1058
        %v1293 = vpack.c.b16 %v1061, %v1059
        %v1294 = vpack.c.b16 %v1064, %v1062
        %v1295 = vpack.c.b16 %v1065, %v1063
        %v1296 = vpack.c.b16 %v1068, %v1066
        %v1297 = vpack.c.b16 %v1069, %v1067
        %v1298 = vpack.c.b16 %v1072, %v1070
        %v1299 = vpack.c.b16 %v1073, %v1071
        %v1300 = vpack.c.b16 %v1076, %v1074
        %v1301 = vpack.c.b16 %v1077, %v1075
        %v1302 = vpack.c.b16 %v1080, %v1078
        %v1303 = vpack.c.b16 %v1081, %v1079
        %v1304 = vpack.c.b16 %v1084, %v1082
        %v1305 = vpack.c.b16 %v1085, %v1083
        %v1306 = vpack.c.b16 %v1088, %v1086
        %v1307 = vpack.c.b16 %v1089, %v1087
        %v1308 = vpack.c.b16 %v1092, %v1090
        %v1309 = vpack.c.b16 %v1093, %v1091
        %v1310 = vpack.c.b16 %v1096, %v1094
        %v1311 = vpack.c.b16 %v1097, %v1095
        %v1312 = vpack.c.b16 %v1100, %v1098
        %v1313 = vpack.c.b16 %v1101, %v1099
        %v1314 = vpack.c.b16 %v1104, %v1102
        %v1315 = vpack.c.b16 %v1105, %v1103
        %v1316 = vpack.c.b16 %v1108, %v1106
        %v1317 = vpack.c.b16 %v1109, %v1107
        %v1318 = vpack.c.b16 %v1112, %v1110
        %v1319 = vpack.c.b16 %v1113, %v1111
        %v1320 = vpack.c.b16 %v1116, %v1114
        %v1321 = vpack.c.b16 %v1117, %v1115
        %v1322 = vpack.c.b16 %v1120, %v1118
        %v1323 = vpack.c.b16 %v1121, %v1119
        %v1324 = vpack.c.b16 %v1124, %v1122
        %v1325 = vpack.c.b16 %v1125, %v1123
        %v1326 = vpack.c.b16 %v1128, %v1126
        %v1327 = vpack.c.b16 %v1129, %v1127
        %v1328 = vpack.c.b16 %v1132, %v1130
        %v1329 = vpack.c.b16 %v1133, %v1131
        %v1330 = vpack.c.b16 %v1136, %v1134
        %v1331 = vpack.c.b16 %v1137, %v1135
        %v1332 = vpack.c.b16 %v1140, %v1138
        %v1333 = vpack.c.b16 %v1141, %v1139
        %v1334 = vpack.c.b16 %v1144, %v1142
        %v1335 = vpack.c.b16 %v1145, %v1143
        %v1336 = vpack.c.b16 %v1148, %v1146
        %v1337 = vpack.c.b16 %v1149, %v1147
        %v1338 = vpack.c.b16 %v1152, %v1150
        %v1339 = vpack.c.b16 %v1153, %v1151
        %v1340 = vpack.c.b16 %v1156, %v1154
        %v1341 = vpack.c.b16 %v1157, %v1155
        %v1342 = vpack.c.b16 %v1160, %v1158
        %v1343 = vpack.c.b16 %v1161, %v1159
        %v1344 = vpack.c.b16 %v1164, %v1162
        %v1345 = vpack.c.b16 %v1165, %v1163
        %v1346 = vpack.c.b16 %v1168, %v1166
        %v1347 = vpack.c.b16 %v1169, %v1167
        %v1348 = vpack.c.b16 %v1172, %v1170
        %v1349 = vpack.c.b16 %v1173, %v1171
        %v1350 = vpack.c.b16 %v1176, %v1174
        %v1351 = vpack.c.b16 %v1177, %v1175
        %v1352 = vpack.c.b16 %v1180, %v1178
        %v1353 = vpack.c.b16 %v1181, %v1179
        %v1354 = vpack.c.b16 %v1184, %v1182
        %v1355 = vpack.c.b16 %v1185, %v1183
        %v1356 = vpack.c.b16 %v1188, %v1186
        %v1357 = vpack.c.b16 %v1189, %v1187
        %v1358 = vpack.c.b16 %v1192, %v1190
        %v1359 = vpack.c.b16 %v1193, %v1191
        %v1360 = vpack.c.b16 %v1196, %v1194
        %v1361 = vpack.c.b16 %v1197, %v1195
        %v1362 = vpack.c.b16 %v1200, %v1198
        %v1363 = vpack.c.b16 %v1201, %v1199
        %v1364 = vpack.c.b16 %v1204, %v1202
        %v1365 = vpack.c.b16 %v1205, %v1203
        %v1366 = vpack.c.b16 %v1208, %v1206
        %v1367 = vpack.c.b16 %v1209, %v1207
        %v1368 = vpack.c.b16 %v1212, %v1210
        %v1369 = vpack.c.b16 %v1213, %v1211
        %v1370 = vpack.c.b16 %v1216, %v1214
        %v1371 = vpack.c.b16 %v1217, %v1215
        %v1372 = vpack.c.b16 %v1220, %v1218
        %v1373 = vpack.c.b16 %v1221, %v1219
        %v1374 = vpack.c.b16 %v1224, %v1222
        %v1375 = vpack.c.b16 %v1225, %v1223
        %v1376 = vpack.c.b16 %v1228, %v1226
        %v1377 = vpack.c.b16 %v1229, %v1227
        %v1378 = vpack.c.b16 %v1232, %v1230
        %v1379 = vpack.c.b16 %v1233, %v1231
        %v1380 = vpack.c.b16 %v1236, %v1234
        %v1381 = vpack.c.b16 %v1237, %v1235
        %v1382 = vpack.c.b16 %v1240, %v1238
        %v1383 = vpack.c.b16 %v1241, %v1239
        %v1384 = vpack.c.b16 %v1244, %v1242
        %v1385 = vpack.c.b16 %v1245, %v1243
        %v1386 = vpack.c.b16 %v1248, %v1246
        %v1387 = vpack.c.b16 %v1249, %v1247
        %v1388 = vpack.c.b16 %v1252, %v1250
        %v1389 = vpack.c.b16 %v1253, %v1251
        %v1390 = vpack.c.b16 %v1256, %v1254
        %v1391 = vpack.c.b16 %v1257, %v1255
        %v1392 = vpack.c.b16 %v1260, %v1258
        %v1393 = vpack.c.b16 %v1261, %v1259
        %v1394 = vpack.c.b16 %v1264, %v1262
        %v1395 = vpack.c.b16 %v1265, %v1263
        %v1396 = vpack.c.b16 %v1268, %v1266
        %v1397 = vpack.c.b16 %v1269, %v1267
        %1526 = vmatpush.bf16.msra.mxu0 %v1284
        %1527 = vmatpush.bf16.msra.mxu0 %v1282
        %1528 = vmatpush.bf16.msra.mxu0 %v1280
        %1529 = vmatpush.bf16.msra.mxu0 %v1278
        %1530 = vmatpush.bf16.msra.mxu0 %v1276
        %1531 = vmatpush.bf16.msra.mxu0 %v1274
        %1532 = vmatpush.bf16.msra.mxu0 %v1272
        %1533 = vmatpush.bf16.msra.mxu0 %v1270
        %1534 = vmatmul.bf16.gmra.mxu0 %v656
        %v1535 = vpop.f32.mrf.mxu0
        %v1536 = vadd.f32 %v882, %v1535
        %v1537 = vpop.f32.mrf.mxu0
        %v1538 = vadd.f32 %v882, %v1537
        %1539 = vmatmul.bf16.gmra.mxu0 %v664
        %v1540 = vpop.f32.mrf.mxu0
        %v1541 = vadd.f32 %v882, %v1540
        %v1542 = vpop.f32.mrf.mxu0
        %v1543 = vadd.f32 %v882, %v1542
        %1544 = vmatmul.bf16.gmra.mxu0 %v672
        %v1545 = vpop.f32.mrf.mxu0
        %v1546 = vadd.f32 %v882, %v1545
        %v1547 = vpop.f32.mrf.mxu0
        %v1548 = vadd.f32 %v882, %v1547
        %1549 = vmatmul.bf16.gmra.mxu0 %v680
        %v1550 = vpop.f32.mrf.mxu0
        %v1551 = vadd.f32 %v882, %v1550
        %v1552 = vpop.f32.mrf.mxu0
        %v1553 = vadd.f32 %v882, %v1552
        %1554 = vmatmul.bf16.gmra.mxu0 %v688
        %v1555 = vpop.f32.mrf.mxu0
        %v1556 = vadd.f32 %v882, %v1555
        %v1557 = vpop.f32.mrf.mxu0
        %v1558 = vadd.f32 %v882, %v1557
        %1559 = vmatmul.bf16.gmra.mxu0 %v696
        %v1560 = vpop.f32.mrf.mxu0
        %v1561 = vadd.f32 %v882, %v1560
        %v1562 = vpop.f32.mrf.mxu0
        %v1563 = vadd.f32 %v882, %v1562
        %1564 = vmatmul.bf16.gmra.mxu0 %v704
        %v1565 = vpop.f32.mrf.mxu0
        %v1566 = vadd.f32 %v882, %v1565
        %v1567 = vpop.f32.mrf.mxu0
        %v1568 = vadd.f32 %v882, %v1567
        %1569 = vmatmul.bf16.gmra.mxu0 %v712
        %v1570 = vpop.f32.mrf.mxu0
        %v1571 = vadd.f32 %v882, %v1570
        %v1572 = vpop.f32.mrf.mxu0
        %v1573 = vadd.f32 %v882, %v1572
        %1574 = vmatmul.bf16.gmra.mxu0 %v720
        %v1575 = vpop.f32.mrf.mxu0
        %v1576 = vadd.f32 %v882, %v1575
        %v1577 = vpop.f32.mrf.mxu0
        %v1578 = vadd.f32 %v882, %v1577
        %1579 = vmatmul.bf16.gmra.mxu0 %v728
        %v1580 = vpop.f32.mrf.mxu0
        %v1581 = vadd.f32 %v882, %v1580
        %v1582 = vpop.f32.mrf.mxu0
        %v1583 = vadd.f32 %v882, %v1582
        %1584 = vmatmul.bf16.gmra.mxu0 %v736
        %v1585 = vpop.f32.mrf.mxu0
        %v1586 = vadd.f32 %v882, %v1585
        %v1587 = vpop.f32.mrf.mxu0
        %v1588 = vadd.f32 %v882, %v1587
        %1589 = vmatmul.bf16.gmra.mxu0 %v744
        %v1590 = vpop.f32.mrf.mxu0
        %v1591 = vadd.f32 %v882, %v1590
        %v1592 = vpop.f32.mrf.mxu0
        %v1593 = vadd.f32 %v882, %v1592
        %1594 = vdwg.mxu0
        %1595 = vmatpush.bf16.msra.mxu0 %v1300
        %1596 = vmatpush.bf16.msra.mxu0 %v1298
        %1597 = vmatpush.bf16.msra.mxu0 %v1296
        %1598 = vmatpush.bf16.msra.mxu0 %v1294
        %1599 = vmatpush.bf16.msra.mxu0 %v1292
        %1600 = vmatpush.bf16.msra.mxu0 %v1290
        %1601 = vmatpush.bf16.msra.mxu0 %v1288
        %1602 = vmatpush.bf16.msra.mxu0 %v1286
        %1603 = vmatmul.bf16.gmra.mxu0 %v657
        %v1604 = vpop.f32.mrf.mxu0
        %v1605 = vadd.f32 %v1536, %v1604
        %v1606 = vpop.f32.mrf.mxu0
        %v1607 = vadd.f32 %v1538, %v1606
        %1608 = vmatmul.bf16.gmra.mxu0 %v665
        %v1609 = vpop.f32.mrf.mxu0
        %v1610 = vadd.f32 %v1541, %v1609
        %v1611 = vpop.f32.mrf.mxu0
        %v1612 = vadd.f32 %v1543, %v1611
        %1613 = vmatmul.bf16.gmra.mxu0 %v673
        %v1614 = vpop.f32.mrf.mxu0
        %v1615 = vadd.f32 %v1546, %v1614
        %v1616 = vpop.f32.mrf.mxu0
        %v1617 = vadd.f32 %v1548, %v1616
        %1618 = vmatmul.bf16.gmra.mxu0 %v681
        %v1619 = vpop.f32.mrf.mxu0
        %v1620 = vadd.f32 %v1551, %v1619
        %v1621 = vpop.f32.mrf.mxu0
        %v1622 = vadd.f32 %v1553, %v1621
        %1623 = vmatmul.bf16.gmra.mxu0 %v689
        %v1624 = vpop.f32.mrf.mxu0
        %v1625 = vadd.f32 %v1556, %v1624
        %v1626 = vpop.f32.mrf.mxu0
        %v1627 = vadd.f32 %v1558, %v1626
        %1628 = vmatmul.bf16.gmra.mxu0 %v697
        %v1629 = vpop.f32.mrf.mxu0
        %v1630 = vadd.f32 %v1561, %v1629
        %v1631 = vpop.f32.mrf.mxu0
        %v1632 = vadd.f32 %v1563, %v1631
        %1633 = vmatmul.bf16.gmra.mxu0 %v705
        %v1634 = vpop.f32.mrf.mxu0
        %v1635 = vadd.f32 %v1566, %v1634
        %v1636 = vpop.f32.mrf.mxu0
        %v1637 = vadd.f32 %v1568, %v1636
        %1638 = vmatmul.bf16.gmra.mxu0 %v713
        %v1639 = vpop.f32.mrf.mxu0
        %v1640 = vadd.f32 %v1571, %v1639
        %v1641 = vpop.f32.mrf.mxu0
        %v1642 = vadd.f32 %v1573, %v1641
        %1643 = vmatmul.bf16.gmra.mxu0 %v721
        %v1644 = vpop.f32.mrf.mxu0
        %v1645 = vadd.f32 %v1576, %v1644
        %v1646 = vpop.f32.mrf.mxu0
        %v1647 = vadd.f32 %v1578, %v1646
        %1648 = vmatmul.bf16.gmra.mxu0 %v729
        %v1649 = vpop.f32.mrf.mxu0
        %v1650 = vadd.f32 %v1581, %v1649
        %v1651 = vpop.f32.mrf.mxu0
        %v1652 = vadd.f32 %v1583, %v1651
        %1653 = vmatmul.bf16.gmra.mxu0 %v737
        %v1654 = vpop.f32.mrf.mxu0
        %v1655 = vadd.f32 %v1586, %v1654
        %v1656 = vpop.f32.mrf.mxu0
        %v1657 = vadd.f32 %v1588, %v1656
        %1658 = vmatmul.bf16.gmra.mxu0 %v745
        %v1659 = vpop.f32.mrf.mxu0
        %v1660 = vadd.f32 %v1591, %v1659
        %v1661 = vpop.f32.mrf.mxu0
        %v1662 = vadd.f32 %v1593, %v1661
        %1663 = vdwg.mxu0
        %1664 = vmatpush.bf16.msra.mxu0 %v1316
        %1665 = vmatpush.bf16.msra.mxu0 %v1314
        %1666 = vmatpush.bf16.msra.mxu0 %v1312
        %1667 = vmatpush.bf16.msra.mxu0 %v1310
        %1668 = vmatpush.bf16.msra.mxu0 %v1308
        %1669 = vmatpush.bf16.msra.mxu0 %v1306
        %1670 = vmatpush.bf16.msra.mxu0 %v1304
        %1671 = vmatpush.bf16.msra.mxu0 %v1302
        %1672 = vmatmul.bf16.gmra.mxu0 %v658
        %v1673 = vpop.f32.mrf.mxu0
        %v1674 = vadd.f32 %v1605, %v1673
        %v1675 = vpop.f32.mrf.mxu0
        %v1676 = vadd.f32 %v1607, %v1675
        %1677 = vmatmul.bf16.gmra.mxu0 %v666
        %v1678 = vpop.f32.mrf.mxu0
        %v1679 = vadd.f32 %v1610, %v1678
        %v1680 = vpop.f32.mrf.mxu0
        %v1681 = vadd.f32 %v1612, %v1680
        %1682 = vmatmul.bf16.gmra.mxu0 %v674
        %v1683 = vpop.f32.mrf.mxu0
        %v1684 = vadd.f32 %v1615, %v1683
        %v1685 = vpop.f32.mrf.mxu0
        %v1686 = vadd.f32 %v1617, %v1685
        %1687 = vmatmul.bf16.gmra.mxu0 %v682
        %v1688 = vpop.f32.mrf.mxu0
        %v1689 = vadd.f32 %v1620, %v1688
        %v1690 = vpop.f32.mrf.mxu0
        %v1691 = vadd.f32 %v1622, %v1690
        %1692 = vmatmul.bf16.gmra.mxu0 %v690
        %v1693 = vpop.f32.mrf.mxu0
        %v1694 = vadd.f32 %v1625, %v1693
        %v1695 = vpop.f32.mrf.mxu0
        %v1696 = vadd.f32 %v1627, %v1695
        %1697 = vmatmul.bf16.gmra.mxu0 %v698
        %v1698 = vpop.f32.mrf.mxu0
        %v1699 = vadd.f32 %v1630, %v1698
        %v1700 = vpop.f32.mrf.mxu0
        %v1701 = vadd.f32 %v1632, %v1700
        %1702 = vmatmul.bf16.gmra.mxu0 %v706
        %v1703 = vpop.f32.mrf.mxu0
        %v1704 = vadd.f32 %v1635, %v1703
        %v1705 = vpop.f32.mrf.mxu0
        %v1706 = vadd.f32 %v1637, %v1705
        %1707 = vmatmul.bf16.gmra.mxu0 %v714
        %v1708 = vpop.f32.mrf.mxu0
        %v1709 = vadd.f32 %v1640, %v1708
        %v1710 = vpop.f32.mrf.mxu0
        %v1711 = vadd.f32 %v1642, %v1710
        %1712 = vmatmul.bf16.gmra.mxu0 %v722
        %v1713 = vpop.f32.mrf.mxu0
        %v1714 = vadd.f32 %v1645, %v1713
        %v1715 = vpop.f32.mrf.mxu0
        %v1716 = vadd.f32 %v1647, %v1715
        %1717 = vmatmul.bf16.gmra.mxu0 %v730
        %v1718 = vpop.f32.mrf.mxu0
        %v1719 = vadd.f32 %v1650, %v1718
        %v1720 = vpop.f32.mrf.mxu0
        %v1721 = vadd.f32 %v1652, %v1720
        %1722 = vmatmul.bf16.gmra.mxu0 %v738
        %v1723 = vpop.f32.mrf.mxu0
        %v1724 = vadd.f32 %v1655, %v1723
        %v1725 = vpop.f32.mrf.mxu0
        %v1726 = vadd.f32 %v1657, %v1725
        %1727 = vmatmul.bf16.gmra.mxu0 %v746
        %v1728 = vpop.f32.mrf.mxu0
        %v1729 = vadd.f32 %v1660, %v1728
        %v1730 = vpop.f32.mrf.mxu0
        %v1731 = vadd.f32 %v1662, %v1730
        %1732 = vdwg.mxu0
        %1733 = vmatpush.bf16.msra.mxu0 %v1332
        %1734 = vmatpush.bf16.msra.mxu0 %v1330
        %1735 = vmatpush.bf16.msra.mxu0 %v1328
        %1736 = vmatpush.bf16.msra.mxu0 %v1326
        %1737 = vmatpush.bf16.msra.mxu0 %v1324
        %1738 = vmatpush.bf16.msra.mxu0 %v1322
        %1739 = vmatpush.bf16.msra.mxu0 %v1320
        %1740 = vmatpush.bf16.msra.mxu0 %v1318
        %1741 = vmatmul.bf16.gmra.mxu0 %v659
        %v1742 = vpop.f32.mrf.mxu0
        %v1743 = vadd.f32 %v1674, %v1742
        %v1744 = vpop.f32.mrf.mxu0
        %v1745 = vadd.f32 %v1676, %v1744
        %1746 = vmatmul.bf16.gmra.mxu0 %v667
        %v1747 = vpop.f32.mrf.mxu0
        %v1748 = vadd.f32 %v1679, %v1747
        %v1749 = vpop.f32.mrf.mxu0
        %v1750 = vadd.f32 %v1681, %v1749
        %1751 = vmatmul.bf16.gmra.mxu0 %v675
        %v1752 = vpop.f32.mrf.mxu0
        %v1753 = vadd.f32 %v1684, %v1752
        %v1754 = vpop.f32.mrf.mxu0
        %v1755 = vadd.f32 %v1686, %v1754
        %1756 = vmatmul.bf16.gmra.mxu0 %v683
        %v1757 = vpop.f32.mrf.mxu0
        %v1758 = vadd.f32 %v1689, %v1757
        %v1759 = vpop.f32.mrf.mxu0
        %v1760 = vadd.f32 %v1691, %v1759
        %1761 = vmatmul.bf16.gmra.mxu0 %v691
        %v1762 = vpop.f32.mrf.mxu0
        %v1763 = vadd.f32 %v1694, %v1762
        %v1764 = vpop.f32.mrf.mxu0
        %v1765 = vadd.f32 %v1696, %v1764
        %1766 = vmatmul.bf16.gmra.mxu0 %v699
        %v1767 = vpop.f32.mrf.mxu0
        %v1768 = vadd.f32 %v1699, %v1767
        %v1769 = vpop.f32.mrf.mxu0
        %v1770 = vadd.f32 %v1701, %v1769
        %1771 = vmatmul.bf16.gmra.mxu0 %v707
        %v1772 = vpop.f32.mrf.mxu0
        %v1773 = vadd.f32 %v1704, %v1772
        %v1774 = vpop.f32.mrf.mxu0
        %v1775 = vadd.f32 %v1706, %v1774
        %1776 = vmatmul.bf16.gmra.mxu0 %v715
        %v1777 = vpop.f32.mrf.mxu0
        %v1778 = vadd.f32 %v1709, %v1777
        %v1779 = vpop.f32.mrf.mxu0
        %v1780 = vadd.f32 %v1711, %v1779
        %1781 = vmatmul.bf16.gmra.mxu0 %v723
        %v1782 = vpop.f32.mrf.mxu0
        %v1783 = vadd.f32 %v1714, %v1782
        %v1784 = vpop.f32.mrf.mxu0
        %v1785 = vadd.f32 %v1716, %v1784
        %1786 = vmatmul.bf16.gmra.mxu0 %v731
        %v1787 = vpop.f32.mrf.mxu0
        %v1788 = vadd.f32 %v1719, %v1787
        %v1789 = vpop.f32.mrf.mxu0
        %v1790 = vadd.f32 %v1721, %v1789
        %1791 = vmatmul.bf16.gmra.mxu0 %v739
        %v1792 = vpop.f32.mrf.mxu0
        %v1793 = vadd.f32 %v1724, %v1792
        %v1794 = vpop.f32.mrf.mxu0
        %v1795 = vadd.f32 %v1726, %v1794
        %1796 = vmatmul.bf16.gmra.mxu0 %v747
        %v1797 = vpop.f32.mrf.mxu0
        %v1798 = vadd.f32 %v1729, %v1797
        %v1799 = vpop.f32.mrf.mxu0
        %v1800 = vadd.f32 %v1731, %v1799
        %1801 = vdwg.mxu0
        %1802 = vmatpush.bf16.msra.mxu0 %v1348
        %1803 = vmatpush.bf16.msra.mxu0 %v1346
        %1804 = vmatpush.bf16.msra.mxu0 %v1344
        %1805 = vmatpush.bf16.msra.mxu0 %v1342
        %1806 = vmatpush.bf16.msra.mxu0 %v1340
        %1807 = vmatpush.bf16.msra.mxu0 %v1338
        %1808 = vmatpush.bf16.msra.mxu0 %v1336
        %1809 = vmatpush.bf16.msra.mxu0 %v1334
        %1810 = vmatmul.bf16.gmra.mxu0 %v660
        %v1811 = vpop.f32.mrf.mxu0
        %v1812 = vadd.f32 %v1743, %v1811
        %v1813 = vpop.f32.mrf.mxu0
        %v1814 = vadd.f32 %v1745, %v1813
        %1815 = vmatmul.bf16.gmra.mxu0 %v668
        %v1816 = vpop.f32.mrf.mxu0
        %v1817 = vadd.f32 %v1748, %v1816
        %v1818 = vpop.f32.mrf.mxu0
        %v1819 = vadd.f32 %v1750, %v1818
        %1820 = vmatmul.bf16.gmra.mxu0 %v676
        %v1821 = vpop.f32.mrf.mxu0
        %v1822 = vadd.f32 %v1753, %v1821
        %v1823 = vpop.f32.mrf.mxu0
        %v1824 = vadd.f32 %v1755, %v1823
        %1825 = vmatmul.bf16.gmra.mxu0 %v684
        %v1826 = vpop.f32.mrf.mxu0
        %v1827 = vadd.f32 %v1758, %v1826
        %v1828 = vpop.f32.mrf.mxu0
        %v1829 = vadd.f32 %v1760, %v1828
        %1830 = vmatmul.bf16.gmra.mxu0 %v692
        %v1831 = vpop.f32.mrf.mxu0
        %v1832 = vadd.f32 %v1763, %v1831
        %v1833 = vpop.f32.mrf.mxu0
        %v1834 = vadd.f32 %v1765, %v1833
        %1835 = vmatmul.bf16.gmra.mxu0 %v700
        %v1836 = vpop.f32.mrf.mxu0
        %v1837 = vadd.f32 %v1768, %v1836
        %v1838 = vpop.f32.mrf.mxu0
        %v1839 = vadd.f32 %v1770, %v1838
        %1840 = vmatmul.bf16.gmra.mxu0 %v708
        %v1841 = vpop.f32.mrf.mxu0
        %v1842 = vadd.f32 %v1773, %v1841
        %v1843 = vpop.f32.mrf.mxu0
        %v1844 = vadd.f32 %v1775, %v1843
        %1845 = vmatmul.bf16.gmra.mxu0 %v716
        %v1846 = vpop.f32.mrf.mxu0
        %v1847 = vadd.f32 %v1778, %v1846
        %v1848 = vpop.f32.mrf.mxu0
        %v1849 = vadd.f32 %v1780, %v1848
        %1850 = vmatmul.bf16.gmra.mxu0 %v724
        %v1851 = vpop.f32.mrf.mxu0
        %v1852 = vadd.f32 %v1783, %v1851
        %v1853 = vpop.f32.mrf.mxu0
        %v1854 = vadd.f32 %v1785, %v1853
        %1855 = vmatmul.bf16.gmra.mxu0 %v732
        %v1856 = vpop.f32.mrf.mxu0
        %v1857 = vadd.f32 %v1788, %v1856
        %v1858 = vpop.f32.mrf.mxu0
        %v1859 = vadd.f32 %v1790, %v1858
        %1860 = vmatmul.bf16.gmra.mxu0 %v740
        %v1861 = vpop.f32.mrf.mxu0
        %v1862 = vadd.f32 %v1793, %v1861
        %v1863 = vpop.f32.mrf.mxu0
        %v1864 = vadd.f32 %v1795, %v1863
        %1865 = vmatmul.bf16.gmra.mxu0 %v748
        %v1866 = vpop.f32.mrf.mxu0
        %v1867 = vadd.f32 %v1798, %v1866
        %v1868 = vpop.f32.mrf.mxu0
        %v1869 = vadd.f32 %v1800, %v1868
        %1870 = vdwg.mxu0
        %1871 = vmatpush.bf16.msra.mxu0 %v1364
        %1872 = vmatpush.bf16.msra.mxu0 %v1362
        %1873 = vmatpush.bf16.msra.mxu0 %v1360
        %1874 = vmatpush.bf16.msra.mxu0 %v1358
        %1875 = vmatpush.bf16.msra.mxu0 %v1356
        %1876 = vmatpush.bf16.msra.mxu0 %v1354
        %1877 = vmatpush.bf16.msra.mxu0 %v1352
        %1878 = vmatpush.bf16.msra.mxu0 %v1350
        %1879 = vmatmul.bf16.gmra.mxu0 %v661
        %v1880 = vpop.f32.mrf.mxu0
        %v1881 = vadd.f32 %v1812, %v1880
        %v1882 = vpop.f32.mrf.mxu0
        %v1883 = vadd.f32 %v1814, %v1882
        %1884 = vmatmul.bf16.gmra.mxu0 %v669
        %v1885 = vpop.f32.mrf.mxu0
        %v1886 = vadd.f32 %v1817, %v1885
        %v1887 = vpop.f32.mrf.mxu0
        %v1888 = vadd.f32 %v1819, %v1887
        %1889 = vmatmul.bf16.gmra.mxu0 %v677
        %v1890 = vpop.f32.mrf.mxu0
        %v1891 = vadd.f32 %v1822, %v1890
        %v1892 = vpop.f32.mrf.mxu0
        %v1893 = vadd.f32 %v1824, %v1892
        %1894 = vmatmul.bf16.gmra.mxu0 %v685
        %v1895 = vpop.f32.mrf.mxu0
        %v1896 = vadd.f32 %v1827, %v1895
        %v1897 = vpop.f32.mrf.mxu0
        %v1898 = vadd.f32 %v1829, %v1897
        %1899 = vmatmul.bf16.gmra.mxu0 %v693
        %v1900 = vpop.f32.mrf.mxu0
        %v1901 = vadd.f32 %v1832, %v1900
        %v1902 = vpop.f32.mrf.mxu0
        %v1903 = vadd.f32 %v1834, %v1902
        %1904 = vmatmul.bf16.gmra.mxu0 %v701
        %v1905 = vpop.f32.mrf.mxu0
        %v1906 = vadd.f32 %v1837, %v1905
        %v1907 = vpop.f32.mrf.mxu0
        %v1908 = vadd.f32 %v1839, %v1907
        %1909 = vmatmul.bf16.gmra.mxu0 %v709
        %v1910 = vpop.f32.mrf.mxu0
        %v1911 = vadd.f32 %v1842, %v1910
        %v1912 = vpop.f32.mrf.mxu0
        %v1913 = vadd.f32 %v1844, %v1912
        %1914 = vmatmul.bf16.gmra.mxu0 %v717
        %v1915 = vpop.f32.mrf.mxu0
        %v1916 = vadd.f32 %v1847, %v1915
        %v1917 = vpop.f32.mrf.mxu0
        %v1918 = vadd.f32 %v1849, %v1917
        %1919 = vmatmul.bf16.gmra.mxu0 %v725
        %v1920 = vpop.f32.mrf.mxu0
        %v1921 = vadd.f32 %v1852, %v1920
        %v1922 = vpop.f32.mrf.mxu0
        %v1923 = vadd.f32 %v1854, %v1922
        %1924 = vmatmul.bf16.gmra.mxu0 %v733
        %v1925 = vpop.f32.mrf.mxu0
        %v1926 = vadd.f32 %v1857, %v1925
        %v1927 = vpop.f32.mrf.mxu0
        %v1928 = vadd.f32 %v1859, %v1927
        %1929 = vmatmul.bf16.gmra.mxu0 %v741
        %v1930 = vpop.f32.mrf.mxu0
        %v1931 = vadd.f32 %v1862, %v1930
        %v1932 = vpop.f32.mrf.mxu0
        %v1933 = vadd.f32 %v1864, %v1932
        %1934 = vmatmul.bf16.gmra.mxu0 %v749
        %v1935 = vpop.f32.mrf.mxu0
        %v1936 = vadd.f32 %v1867, %v1935
        %v1937 = vpop.f32.mrf.mxu0
        %v1938 = vadd.f32 %v1869, %v1937
        %1939 = vdwg.mxu0
        %1940 = vmatpush.bf16.msra.mxu0 %v1380
        %1941 = vmatpush.bf16.msra.mxu0 %v1378
        %1942 = vmatpush.bf16.msra.mxu0 %v1376
        %1943 = vmatpush.bf16.msra.mxu0 %v1374
        %1944 = vmatpush.bf16.msra.mxu0 %v1372
        %1945 = vmatpush.bf16.msra.mxu0 %v1370
        %1946 = vmatpush.bf16.msra.mxu0 %v1368
        %1947 = vmatpush.bf16.msra.mxu0 %v1366
        %1948 = vmatmul.bf16.gmra.mxu0 %v662
        %v1949 = vpop.f32.mrf.mxu0
        %v1950 = vadd.f32 %v1881, %v1949
        %v1951 = vpop.f32.mrf.mxu0
        %v1952 = vadd.f32 %v1883, %v1951
        %1953 = vmatmul.bf16.gmra.mxu0 %v670
        %v1954 = vpop.f32.mrf.mxu0
        %v1955 = vadd.f32 %v1886, %v1954
        %v1956 = vpop.f32.mrf.mxu0
        %v1957 = vadd.f32 %v1888, %v1956
        %1958 = vmatmul.bf16.gmra.mxu0 %v678
        %v1959 = vpop.f32.mrf.mxu0
        %v1960 = vadd.f32 %v1891, %v1959
        %v1961 = vpop.f32.mrf.mxu0
        %v1962 = vadd.f32 %v1893, %v1961
        %1963 = vmatmul.bf16.gmra.mxu0 %v686
        %v1964 = vpop.f32.mrf.mxu0
        %v1965 = vadd.f32 %v1896, %v1964
        %v1966 = vpop.f32.mrf.mxu0
        %v1967 = vadd.f32 %v1898, %v1966
        %1968 = vmatmul.bf16.gmra.mxu0 %v694
        %v1969 = vpop.f32.mrf.mxu0
        %v1970 = vadd.f32 %v1901, %v1969
        %v1971 = vpop.f32.mrf.mxu0
        %v1972 = vadd.f32 %v1903, %v1971
        %1973 = vmatmul.bf16.gmra.mxu0 %v702
        %v1974 = vpop.f32.mrf.mxu0
        %v1975 = vadd.f32 %v1906, %v1974
        %v1976 = vpop.f32.mrf.mxu0
        %v1977 = vadd.f32 %v1908, %v1976
        %1978 = vmatmul.bf16.gmra.mxu0 %v710
        %v1979 = vpop.f32.mrf.mxu0
        %v1980 = vadd.f32 %v1911, %v1979
        %v1981 = vpop.f32.mrf.mxu0
        %v1982 = vadd.f32 %v1913, %v1981
        %1983 = vmatmul.bf16.gmra.mxu0 %v718
        %v1984 = vpop.f32.mrf.mxu0
        %v1985 = vadd.f32 %v1916, %v1984
        %v1986 = vpop.f32.mrf.mxu0
        %v1987 = vadd.f32 %v1918, %v1986
        %1988 = vmatmul.bf16.gmra.mxu0 %v726
        %v1989 = vpop.f32.mrf.mxu0
        %v1990 = vadd.f32 %v1921, %v1989
        %v1991 = vpop.f32.mrf.mxu0
        %v1992 = vadd.f32 %v1923, %v1991
        %1993 = vmatmul.bf16.gmra.mxu0 %v734
        %v1994 = vpop.f32.mrf.mxu0
        %v1995 = vadd.f32 %v1926, %v1994
        %v1996 = vpop.f32.mrf.mxu0
        %v1997 = vadd.f32 %v1928, %v1996
        %1998 = vmatmul.bf16.gmra.mxu0 %v742
        %v1999 = vpop.f32.mrf.mxu0
        %v2000 = vadd.f32 %v1931, %v1999
        %v2001 = vpop.f32.mrf.mxu0
        %v2002 = vadd.f32 %v1933, %v2001
        %2003 = vmatmul.bf16.gmra.mxu0 %v750
        %v2004 = vpop.f32.mrf.mxu0
        %v2005 = vadd.f32 %v1936, %v2004
        %v2006 = vpop.f32.mrf.mxu0
        %v2007 = vadd.f32 %v1938, %v2006
        %2008 = vdwg.mxu0
        %2009 = vmatpush.bf16.msra.mxu0 %v1396
        %2010 = vmatpush.bf16.msra.mxu0 %v1394
        %2011 = vmatpush.bf16.msra.mxu0 %v1392
        %2012 = vmatpush.bf16.msra.mxu0 %v1390
        %2013 = vmatpush.bf16.msra.mxu0 %v1388
        %2014 = vmatpush.bf16.msra.mxu0 %v1386
        %2015 = vmatpush.bf16.msra.mxu0 %v1384
        %2016 = vmatpush.bf16.msra.mxu0 %v1382
        %2017 = vmatmul.bf16.gmra.mxu0 %v663
        %v2018 = vpop.f32.mrf.mxu0
        %v2019 = vadd.f32 %v1950, %v2018
        %v2020 = vpop.f32.mrf.mxu0
        %v2021 = vadd.f32 %v1952, %v2020
        %2022 = vmatmul.bf16.gmra.mxu0 %v671
        %v2023 = vpop.f32.mrf.mxu0
        %v2024 = vadd.f32 %v1955, %v2023
        %v2025 = vpop.f32.mrf.mxu0
        %v2026 = vadd.f32 %v1957, %v2025
        %2027 = vmatmul.bf16.gmra.mxu0 %v679
        %v2028 = vpop.f32.mrf.mxu0
        %v2029 = vadd.f32 %v1960, %v2028
        %v2030 = vpop.f32.mrf.mxu0
        %v2031 = vadd.f32 %v1962, %v2030
        %2032 = vmatmul.bf16.gmra.mxu0 %v687
        %v2033 = vpop.f32.mrf.mxu0
        %v2034 = vadd.f32 %v1965, %v2033
        %v2035 = vpop.f32.mrf.mxu0
        %v2036 = vadd.f32 %v1967, %v2035
        %2037 = vmatmul.bf16.gmra.mxu0 %v695
        %v2038 = vpop.f32.mrf.mxu0
        %v2039 = vadd.f32 %v1970, %v2038
        %v2040 = vpop.f32.mrf.mxu0
        %v2041 = vadd.f32 %v1972, %v2040
        %2042 = vmatmul.bf16.gmra.mxu0 %v703
        %v2043 = vpop.f32.mrf.mxu0
        %v2044 = vadd.f32 %v1975, %v2043
        %v2045 = vpop.f32.mrf.mxu0
        %v2046 = vadd.f32 %v1977, %v2045
        %2047 = vmatmul.bf16.gmra.mxu0 %v711
        %v2048 = vpop.f32.mrf.mxu0
        %v2049 = vadd.f32 %v1980, %v2048
        %v2050 = vpop.f32.mrf.mxu0
        %v2051 = vadd.f32 %v1982, %v2050
        %2052 = vmatmul.bf16.gmra.mxu0 %v719
        %v2053 = vpop.f32.mrf.mxu0
        %v2054 = vadd.f32 %v1985, %v2053
        %v2055 = vpop.f32.mrf.mxu0
        %v2056 = vadd.f32 %v1987, %v2055
        %2057 = vmatmul.bf16.gmra.mxu0 %v727
        %v2058 = vpop.f32.mrf.mxu0
        %v2059 = vadd.f32 %v1990, %v2058
        %v2060 = vpop.f32.mrf.mxu0
        %v2061 = vadd.f32 %v1992, %v2060
        %2062 = vmatmul.bf16.gmra.mxu0 %v735
        %v2063 = vpop.f32.mrf.mxu0
        %v2064 = vadd.f32 %v1995, %v2063
        %v2065 = vpop.f32.mrf.mxu0
        %v2066 = vadd.f32 %v1997, %v2065
        %2067 = vmatmul.bf16.gmra.mxu0 %v743
        %v2068 = vpop.f32.mrf.mxu0
        %v2069 = vadd.f32 %v2000, %v2068
        %v2070 = vpop.f32.mrf.mxu0
        %v2071 = vadd.f32 %v2002, %v2070
        %2072 = vmatmul.bf16.gmra.mxu0 %v751
        %v2073 = vpop.f32.mrf.mxu0
        %v2074 = vadd.f32 %v2005, %v2073
        %v2075 = vpop.f32.mrf.mxu0
        %v2076 = vadd.f32 %v2007, %v2075
        %2077 = vdwg.mxu0
        %2078 = vmatpush.bf16.msra.mxu0 %v1285
        %2079 = vmatpush.bf16.msra.mxu0 %v1283
        %2080 = vmatpush.bf16.msra.mxu0 %v1281
        %2081 = vmatpush.bf16.msra.mxu0 %v1279
        %2082 = vmatpush.bf16.msra.mxu0 %v1277
        %2083 = vmatpush.bf16.msra.mxu0 %v1275
        %2084 = vmatpush.bf16.msra.mxu0 %v1273
        %2085 = vmatpush.bf16.msra.mxu0 %v1271
        %2086 = vmatmul.bf16.gmra.mxu0 %v656
        %v2087 = vpop.f32.mrf.mxu0
        %v2088 = vadd.f32 %v883, %v2087
        %v2089 = vpop.f32.mrf.mxu0
        %v2090 = vadd.f32 %v883, %v2089
        %2091 = vmatmul.bf16.gmra.mxu0 %v664
        %v2092 = vpop.f32.mrf.mxu0
        %v2093 = vadd.f32 %v883, %v2092
        %v2094 = vpop.f32.mrf.mxu0
        %v2095 = vadd.f32 %v883, %v2094
        %2096 = vmatmul.bf16.gmra.mxu0 %v672
        %v2097 = vpop.f32.mrf.mxu0
        %v2098 = vadd.f32 %v883, %v2097
        %v2099 = vpop.f32.mrf.mxu0
        %v2100 = vadd.f32 %v883, %v2099
        %2101 = vmatmul.bf16.gmra.mxu0 %v680
        %v2102 = vpop.f32.mrf.mxu0
        %v2103 = vadd.f32 %v883, %v2102
        %v2104 = vpop.f32.mrf.mxu0
        %v2105 = vadd.f32 %v883, %v2104
        %2106 = vmatmul.bf16.gmra.mxu0 %v688
        %v2107 = vpop.f32.mrf.mxu0
        %v2108 = vadd.f32 %v883, %v2107
        %v2109 = vpop.f32.mrf.mxu0
        %v2110 = vadd.f32 %v883, %v2109
        %2111 = vmatmul.bf16.gmra.mxu0 %v696
        %v2112 = vpop.f32.mrf.mxu0
        %v2113 = vadd.f32 %v883, %v2112
        %v2114 = vpop.f32.mrf.mxu0
        %v2115 = vadd.f32 %v883, %v2114
        %2116 = vmatmul.bf16.gmra.mxu0 %v704
        %v2117 = vpop.f32.mrf.mxu0
        %v2118 = vadd.f32 %v883, %v2117
        %v2119 = vpop.f32.mrf.mxu0
        %v2120 = vadd.f32 %v883, %v2119
        %2121 = vmatmul.bf16.gmra.mxu0 %v712
        %v2122 = vpop.f32.mrf.mxu0
        %v2123 = vadd.f32 %v883, %v2122
        %v2124 = vpop.f32.mrf.mxu0
        %v2125 = vadd.f32 %v883, %v2124
        %2126 = vmatmul.bf16.gmra.mxu0 %v720
        %v2127 = vpop.f32.mrf.mxu0
        %v2128 = vadd.f32 %v883, %v2127
        %v2129 = vpop.f32.mrf.mxu0
        %v2130 = vadd.f32 %v883, %v2129
        %2131 = vmatmul.bf16.gmra.mxu0 %v728
        %v2132 = vpop.f32.mrf.mxu0
        %v2133 = vadd.f32 %v883, %v2132
        %v2134 = vpop.f32.mrf.mxu0
        %v2135 = vadd.f32 %v883, %v2134
        %2136 = vmatmul.bf16.gmra.mxu0 %v736
        %v2137 = vpop.f32.mrf.mxu0
        %v2138 = vadd.f32 %v883, %v2137
        %v2139 = vpop.f32.mrf.mxu0
        %v2140 = vadd.f32 %v883, %v2139
        %2141 = vmatmul.bf16.gmra.mxu0 %v744
        %v2142 = vpop.f32.mrf.mxu0
        %v2143 = vadd.f32 %v883, %v2142
        %v2144 = vpop.f32.mrf.mxu0
        %v2145 = vadd.f32 %v883, %v2144
        %2146 = vdwg.mxu0
        %2147 = vmatpush.bf16.msra.mxu0 %v1301
        %2148 = vmatpush.bf16.msra.mxu0 %v1299
        %2149 = vmatpush.bf16.msra.mxu0 %v1297
        %2150 = vmatpush.bf16.msra.mxu0 %v1295
        %2151 = vmatpush.bf16.msra.mxu0 %v1293
        %2152 = vmatpush.bf16.msra.mxu0 %v1291
        %2153 = vmatpush.bf16.msra.mxu0 %v1289
        %2154 = vmatpush.bf16.msra.mxu0 %v1287
        %2155 = vmatmul.bf16.gmra.mxu0 %v657
        %v2156 = vpop.f32.mrf.mxu0
        %v2157 = vadd.f32 %v2088, %v2156
        %v2158 = vpop.f32.mrf.mxu0
        %v2159 = vadd.f32 %v2090, %v2158
        %2160 = vmatmul.bf16.gmra.mxu0 %v665
        %v2161 = vpop.f32.mrf.mxu0
        %v2162 = vadd.f32 %v2093, %v2161
        %v2163 = vpop.f32.mrf.mxu0
        %v2164 = vadd.f32 %v2095, %v2163
        %2165 = vmatmul.bf16.gmra.mxu0 %v673
        %v2166 = vpop.f32.mrf.mxu0
        %v2167 = vadd.f32 %v2098, %v2166
        %v2168 = vpop.f32.mrf.mxu0
        %v2169 = vadd.f32 %v2100, %v2168
        %2170 = vmatmul.bf16.gmra.mxu0 %v681
        %v2171 = vpop.f32.mrf.mxu0
        %v2172 = vadd.f32 %v2103, %v2171
        %v2173 = vpop.f32.mrf.mxu0
        %v2174 = vadd.f32 %v2105, %v2173
        %2175 = vmatmul.bf16.gmra.mxu0 %v689
        %v2176 = vpop.f32.mrf.mxu0
        %v2177 = vadd.f32 %v2108, %v2176
        %v2178 = vpop.f32.mrf.mxu0
        %v2179 = vadd.f32 %v2110, %v2178
        %2180 = vmatmul.bf16.gmra.mxu0 %v697
        %v2181 = vpop.f32.mrf.mxu0
        %v2182 = vadd.f32 %v2113, %v2181
        %v2183 = vpop.f32.mrf.mxu0
        %v2184 = vadd.f32 %v2115, %v2183
        %2185 = vmatmul.bf16.gmra.mxu0 %v705
        %v2186 = vpop.f32.mrf.mxu0
        %v2187 = vadd.f32 %v2118, %v2186
        %v2188 = vpop.f32.mrf.mxu0
        %v2189 = vadd.f32 %v2120, %v2188
        %2190 = vmatmul.bf16.gmra.mxu0 %v713
        %v2191 = vpop.f32.mrf.mxu0
        %v2192 = vadd.f32 %v2123, %v2191
        %v2193 = vpop.f32.mrf.mxu0
        %v2194 = vadd.f32 %v2125, %v2193
        %2195 = vmatmul.bf16.gmra.mxu0 %v721
        %v2196 = vpop.f32.mrf.mxu0
        %v2197 = vadd.f32 %v2128, %v2196
        %v2198 = vpop.f32.mrf.mxu0
        %v2199 = vadd.f32 %v2130, %v2198
        %2200 = vmatmul.bf16.gmra.mxu0 %v729
        %v2201 = vpop.f32.mrf.mxu0
        %v2202 = vadd.f32 %v2133, %v2201
        %v2203 = vpop.f32.mrf.mxu0
        %v2204 = vadd.f32 %v2135, %v2203
        %2205 = vmatmul.bf16.gmra.mxu0 %v737
        %v2206 = vpop.f32.mrf.mxu0
        %v2207 = vadd.f32 %v2138, %v2206
        %v2208 = vpop.f32.mrf.mxu0
        %v2209 = vadd.f32 %v2140, %v2208
        %2210 = vmatmul.bf16.gmra.mxu0 %v745
        %v2211 = vpop.f32.mrf.mxu0
        %v2212 = vadd.f32 %v2143, %v2211
        %v2213 = vpop.f32.mrf.mxu0
        %v2214 = vadd.f32 %v2145, %v2213
        %2215 = vdwg.mxu0
        %2216 = vmatpush.bf16.msra.mxu0 %v1317
        %2217 = vmatpush.bf16.msra.mxu0 %v1315
        %2218 = vmatpush.bf16.msra.mxu0 %v1313
        %2219 = vmatpush.bf16.msra.mxu0 %v1311
        %2220 = vmatpush.bf16.msra.mxu0 %v1309
        %2221 = vmatpush.bf16.msra.mxu0 %v1307
        %2222 = vmatpush.bf16.msra.mxu0 %v1305
        %2223 = vmatpush.bf16.msra.mxu0 %v1303
        %2224 = vmatmul.bf16.gmra.mxu0 %v658
        %v2225 = vpop.f32.mrf.mxu0
        %v2226 = vadd.f32 %v2157, %v2225
        %v2227 = vpop.f32.mrf.mxu0
        %v2228 = vadd.f32 %v2159, %v2227
        %2229 = vmatmul.bf16.gmra.mxu0 %v666
        %v2230 = vpop.f32.mrf.mxu0
        %v2231 = vadd.f32 %v2162, %v2230
        %v2232 = vpop.f32.mrf.mxu0
        %v2233 = vadd.f32 %v2164, %v2232
        %2234 = vmatmul.bf16.gmra.mxu0 %v674
        %v2235 = vpop.f32.mrf.mxu0
        %v2236 = vadd.f32 %v2167, %v2235
        %v2237 = vpop.f32.mrf.mxu0
        %v2238 = vadd.f32 %v2169, %v2237
        %2239 = vmatmul.bf16.gmra.mxu0 %v682
        %v2240 = vpop.f32.mrf.mxu0
        %v2241 = vadd.f32 %v2172, %v2240
        %v2242 = vpop.f32.mrf.mxu0
        %v2243 = vadd.f32 %v2174, %v2242
        %2244 = vmatmul.bf16.gmra.mxu0 %v690
        %v2245 = vpop.f32.mrf.mxu0
        %v2246 = vadd.f32 %v2177, %v2245
        %v2247 = vpop.f32.mrf.mxu0
        %v2248 = vadd.f32 %v2179, %v2247
        %2249 = vmatmul.bf16.gmra.mxu0 %v698
        %v2250 = vpop.f32.mrf.mxu0
        %v2251 = vadd.f32 %v2182, %v2250
        %v2252 = vpop.f32.mrf.mxu0
        %v2253 = vadd.f32 %v2184, %v2252
        %2254 = vmatmul.bf16.gmra.mxu0 %v706
        %v2255 = vpop.f32.mrf.mxu0
        %v2256 = vadd.f32 %v2187, %v2255
        %v2257 = vpop.f32.mrf.mxu0
        %v2258 = vadd.f32 %v2189, %v2257
        %2259 = vmatmul.bf16.gmra.mxu0 %v714
        %v2260 = vpop.f32.mrf.mxu0
        %v2261 = vadd.f32 %v2192, %v2260
        %v2262 = vpop.f32.mrf.mxu0
        %v2263 = vadd.f32 %v2194, %v2262
        %2264 = vmatmul.bf16.gmra.mxu0 %v722
        %v2265 = vpop.f32.mrf.mxu0
        %v2266 = vadd.f32 %v2197, %v2265
        %v2267 = vpop.f32.mrf.mxu0
        %v2268 = vadd.f32 %v2199, %v2267
        %2269 = vmatmul.bf16.gmra.mxu0 %v730
        %v2270 = vpop.f32.mrf.mxu0
        %v2271 = vadd.f32 %v2202, %v2270
        %v2272 = vpop.f32.mrf.mxu0
        %v2273 = vadd.f32 %v2204, %v2272
        %2274 = vmatmul.bf16.gmra.mxu0 %v738
        %v2275 = vpop.f32.mrf.mxu0
        %v2276 = vadd.f32 %v2207, %v2275
        %v2277 = vpop.f32.mrf.mxu0
        %v2278 = vadd.f32 %v2209, %v2277
        %2279 = vmatmul.bf16.gmra.mxu0 %v746
        %v2280 = vpop.f32.mrf.mxu0
        %v2281 = vadd.f32 %v2212, %v2280
        %v2282 = vpop.f32.mrf.mxu0
        %v2283 = vadd.f32 %v2214, %v2282
        %2284 = vdwg.mxu0
        %2285 = vmatpush.bf16.msra.mxu0 %v1333
        %2286 = vmatpush.bf16.msra.mxu0 %v1331
        %2287 = vmatpush.bf16.msra.mxu0 %v1329
        %2288 = vmatpush.bf16.msra.mxu0 %v1327
        %2289 = vmatpush.bf16.msra.mxu0 %v1325
        %2290 = vmatpush.bf16.msra.mxu0 %v1323
        %2291 = vmatpush.bf16.msra.mxu0 %v1321
        %2292 = vmatpush.bf16.msra.mxu0 %v1319
        %2293 = vmatmul.bf16.gmra.mxu0 %v659
        %v2294 = vpop.f32.mrf.mxu0
        %v2295 = vadd.f32 %v2226, %v2294
        %v2296 = vpop.f32.mrf.mxu0
        %v2297 = vadd.f32 %v2228, %v2296
        %2298 = vmatmul.bf16.gmra.mxu0 %v667
        %v2299 = vpop.f32.mrf.mxu0
        %v2300 = vadd.f32 %v2231, %v2299
        %v2301 = vpop.f32.mrf.mxu0
        %v2302 = vadd.f32 %v2233, %v2301
        %2303 = vmatmul.bf16.gmra.mxu0 %v675
        %v2304 = vpop.f32.mrf.mxu0
        %v2305 = vadd.f32 %v2236, %v2304
        %v2306 = vpop.f32.mrf.mxu0
        %v2307 = vadd.f32 %v2238, %v2306
        %2308 = vmatmul.bf16.gmra.mxu0 %v683
        %v2309 = vpop.f32.mrf.mxu0
        %v2310 = vadd.f32 %v2241, %v2309
        %v2311 = vpop.f32.mrf.mxu0
        %v2312 = vadd.f32 %v2243, %v2311
        %2313 = vmatmul.bf16.gmra.mxu0 %v691
        %v2314 = vpop.f32.mrf.mxu0
        %v2315 = vadd.f32 %v2246, %v2314
        %v2316 = vpop.f32.mrf.mxu0
        %v2317 = vadd.f32 %v2248, %v2316
        %2318 = vmatmul.bf16.gmra.mxu0 %v699
        %v2319 = vpop.f32.mrf.mxu0
        %v2320 = vadd.f32 %v2251, %v2319
        %v2321 = vpop.f32.mrf.mxu0
        %v2322 = vadd.f32 %v2253, %v2321
        %2323 = vmatmul.bf16.gmra.mxu0 %v707
        %v2324 = vpop.f32.mrf.mxu0
        %v2325 = vadd.f32 %v2256, %v2324
        %v2326 = vpop.f32.mrf.mxu0
        %v2327 = vadd.f32 %v2258, %v2326
        %2328 = vmatmul.bf16.gmra.mxu0 %v715
        %v2329 = vpop.f32.mrf.mxu0
        %v2330 = vadd.f32 %v2261, %v2329
        %v2331 = vpop.f32.mrf.mxu0
        %v2332 = vadd.f32 %v2263, %v2331
        %2333 = vmatmul.bf16.gmra.mxu0 %v723
        %v2334 = vpop.f32.mrf.mxu0
        %v2335 = vadd.f32 %v2266, %v2334
        %v2336 = vpop.f32.mrf.mxu0
        %v2337 = vadd.f32 %v2268, %v2336
        %2338 = vmatmul.bf16.gmra.mxu0 %v731
        %v2339 = vpop.f32.mrf.mxu0
        %v2340 = vadd.f32 %v2271, %v2339
        %v2341 = vpop.f32.mrf.mxu0
        %v2342 = vadd.f32 %v2273, %v2341
        %2343 = vmatmul.bf16.gmra.mxu0 %v739
        %v2344 = vpop.f32.mrf.mxu0
        %v2345 = vadd.f32 %v2276, %v2344
        %v2346 = vpop.f32.mrf.mxu0
        %v2347 = vadd.f32 %v2278, %v2346
        %2348 = vmatmul.bf16.gmra.mxu0 %v747
        %v2349 = vpop.f32.mrf.mxu0
        %v2350 = vadd.f32 %v2281, %v2349
        %v2351 = vpop.f32.mrf.mxu0
        %v2352 = vadd.f32 %v2283, %v2351
        %2353 = vdwg.mxu0
        %2354 = vmatpush.bf16.msra.mxu0 %v1349
        %2355 = vmatpush.bf16.msra.mxu0 %v1347
        %2356 = vmatpush.bf16.msra.mxu0 %v1345
        %2357 = vmatpush.bf16.msra.mxu0 %v1343
        %2358 = vmatpush.bf16.msra.mxu0 %v1341
        %2359 = vmatpush.bf16.msra.mxu0 %v1339
        %2360 = vmatpush.bf16.msra.mxu0 %v1337
        %2361 = vmatpush.bf16.msra.mxu0 %v1335
        %2362 = vmatmul.bf16.gmra.mxu0 %v660
        %v2363 = vpop.f32.mrf.mxu0
        %v2364 = vadd.f32 %v2295, %v2363
        %v2365 = vpop.f32.mrf.mxu0
        %v2366 = vadd.f32 %v2297, %v2365
        %2367 = vmatmul.bf16.gmra.mxu0 %v668
        %v2368 = vpop.f32.mrf.mxu0
        %v2369 = vadd.f32 %v2300, %v2368
        %v2370 = vpop.f32.mrf.mxu0
        %v2371 = vadd.f32 %v2302, %v2370
        %2372 = vmatmul.bf16.gmra.mxu0 %v676
        %v2373 = vpop.f32.mrf.mxu0
        %v2374 = vadd.f32 %v2305, %v2373
        %v2375 = vpop.f32.mrf.mxu0
        %v2376 = vadd.f32 %v2307, %v2375
        %2377 = vmatmul.bf16.gmra.mxu0 %v684
        %v2378 = vpop.f32.mrf.mxu0
        %v2379 = vadd.f32 %v2310, %v2378
        %v2380 = vpop.f32.mrf.mxu0
        %v2381 = vadd.f32 %v2312, %v2380
        %2382 = vmatmul.bf16.gmra.mxu0 %v692
        %v2383 = vpop.f32.mrf.mxu0
        %v2384 = vadd.f32 %v2315, %v2383
        %v2385 = vpop.f32.mrf.mxu0
        %v2386 = vadd.f32 %v2317, %v2385
        %2387 = vmatmul.bf16.gmra.mxu0 %v700
        %v2388 = vpop.f32.mrf.mxu0
        %v2389 = vadd.f32 %v2320, %v2388
        %v2390 = vpop.f32.mrf.mxu0
        %v2391 = vadd.f32 %v2322, %v2390
        %2392 = vmatmul.bf16.gmra.mxu0 %v708
        %v2393 = vpop.f32.mrf.mxu0
        %v2394 = vadd.f32 %v2325, %v2393
        %v2395 = vpop.f32.mrf.mxu0
        %v2396 = vadd.f32 %v2327, %v2395
        %2397 = vmatmul.bf16.gmra.mxu0 %v716
        %v2398 = vpop.f32.mrf.mxu0
        %v2399 = vadd.f32 %v2330, %v2398
        %v2400 = vpop.f32.mrf.mxu0
        %v2401 = vadd.f32 %v2332, %v2400
        %2402 = vmatmul.bf16.gmra.mxu0 %v724
        %v2403 = vpop.f32.mrf.mxu0
        %v2404 = vadd.f32 %v2335, %v2403
        %v2405 = vpop.f32.mrf.mxu0
        %v2406 = vadd.f32 %v2337, %v2405
        %2407 = vmatmul.bf16.gmra.mxu0 %v732
        %v2408 = vpop.f32.mrf.mxu0
        %v2409 = vadd.f32 %v2340, %v2408
        %v2410 = vpop.f32.mrf.mxu0
        %v2411 = vadd.f32 %v2342, %v2410
        %2412 = vmatmul.bf16.gmra.mxu0 %v740
        %v2413 = vpop.f32.mrf.mxu0
        %v2414 = vadd.f32 %v2345, %v2413
        %v2415 = vpop.f32.mrf.mxu0
        %v2416 = vadd.f32 %v2347, %v2415
        %2417 = vmatmul.bf16.gmra.mxu0 %v748
        %v2418 = vpop.f32.mrf.mxu0
        %v2419 = vadd.f32 %v2350, %v2418
        %v2420 = vpop.f32.mrf.mxu0
        %v2421 = vadd.f32 %v2352, %v2420
        %2422 = vdwg.mxu0
        %2423 = vmatpush.bf16.msra.mxu0 %v1365
        %2424 = vmatpush.bf16.msra.mxu0 %v1363
        %2425 = vmatpush.bf16.msra.mxu0 %v1361
        %2426 = vmatpush.bf16.msra.mxu0 %v1359
        %2427 = vmatpush.bf16.msra.mxu0 %v1357
        %2428 = vmatpush.bf16.msra.mxu0 %v1355
        %2429 = vmatpush.bf16.msra.mxu0 %v1353
        %2430 = vmatpush.bf16.msra.mxu0 %v1351
        %2431 = vmatmul.bf16.gmra.mxu0 %v661
        %v2432 = vpop.f32.mrf.mxu0
        %v2433 = vadd.f32 %v2364, %v2432
        %v2434 = vpop.f32.mrf.mxu0
        %v2435 = vadd.f32 %v2366, %v2434
        %2436 = vmatmul.bf16.gmra.mxu0 %v669
        %v2437 = vpop.f32.mrf.mxu0
        %v2438 = vadd.f32 %v2369, %v2437
        %v2439 = vpop.f32.mrf.mxu0
        %v2440 = vadd.f32 %v2371, %v2439
        %2441 = vmatmul.bf16.gmra.mxu0 %v677
        %v2442 = vpop.f32.mrf.mxu0
        %v2443 = vadd.f32 %v2374, %v2442
        %v2444 = vpop.f32.mrf.mxu0
        %v2445 = vadd.f32 %v2376, %v2444
        %2446 = vmatmul.bf16.gmra.mxu0 %v685
        %v2447 = vpop.f32.mrf.mxu0
        %v2448 = vadd.f32 %v2379, %v2447
        %v2449 = vpop.f32.mrf.mxu0
        %v2450 = vadd.f32 %v2381, %v2449
        %2451 = vmatmul.bf16.gmra.mxu0 %v693
        %v2452 = vpop.f32.mrf.mxu0
        %v2453 = vadd.f32 %v2384, %v2452
        %v2454 = vpop.f32.mrf.mxu0
        %v2455 = vadd.f32 %v2386, %v2454
        %2456 = vmatmul.bf16.gmra.mxu0 %v701
        %v2457 = vpop.f32.mrf.mxu0
        %v2458 = vadd.f32 %v2389, %v2457
        %v2459 = vpop.f32.mrf.mxu0
        %v2460 = vadd.f32 %v2391, %v2459
        %2461 = vmatmul.bf16.gmra.mxu0 %v709
        %v2462 = vpop.f32.mrf.mxu0
        %v2463 = vadd.f32 %v2394, %v2462
        %v2464 = vpop.f32.mrf.mxu0
        %v2465 = vadd.f32 %v2396, %v2464
        %2466 = vmatmul.bf16.gmra.mxu0 %v717
        %v2467 = vpop.f32.mrf.mxu0
        %v2468 = vadd.f32 %v2399, %v2467
        %v2469 = vpop.f32.mrf.mxu0
        %v2470 = vadd.f32 %v2401, %v2469
        %2471 = vmatmul.bf16.gmra.mxu0 %v725
        %v2472 = vpop.f32.mrf.mxu0
        %v2473 = vadd.f32 %v2404, %v2472
        %v2474 = vpop.f32.mrf.mxu0
        %v2475 = vadd.f32 %v2406, %v2474
        %2476 = vmatmul.bf16.gmra.mxu0 %v733
        %v2477 = vpop.f32.mrf.mxu0
        %v2478 = vadd.f32 %v2409, %v2477
        %v2479 = vpop.f32.mrf.mxu0
        %v2480 = vadd.f32 %v2411, %v2479
        %2481 = vmatmul.bf16.gmra.mxu0 %v741
        %v2482 = vpop.f32.mrf.mxu0
        %v2483 = vadd.f32 %v2414, %v2482
        %v2484 = vpop.f32.mrf.mxu0
        %v2485 = vadd.f32 %v2416, %v2484
        %2486 = vmatmul.bf16.gmra.mxu0 %v749
        %v2487 = vpop.f32.mrf.mxu0
        %v2488 = vadd.f32 %v2419, %v2487
        %v2489 = vpop.f32.mrf.mxu0
        %v2490 = vadd.f32 %v2421, %v2489
        %2491 = vdwg.mxu0
        %2492 = vmatpush.bf16.msra.mxu0 %v1381
        %2493 = vmatpush.bf16.msra.mxu0 %v1379
        %2494 = vmatpush.bf16.msra.mxu0 %v1377
        %2495 = vmatpush.bf16.msra.mxu0 %v1375
        %2496 = vmatpush.bf16.msra.mxu0 %v1373
        %2497 = vmatpush.bf16.msra.mxu0 %v1371
        %2498 = vmatpush.bf16.msra.mxu0 %v1369
        %2499 = vmatpush.bf16.msra.mxu0 %v1367
        %2500 = vmatmul.bf16.gmra.mxu0 %v662
        %v2501 = vpop.f32.mrf.mxu0
        %v2502 = vadd.f32 %v2433, %v2501
        %v2503 = vpop.f32.mrf.mxu0
        %v2504 = vadd.f32 %v2435, %v2503
        %2505 = vmatmul.bf16.gmra.mxu0 %v670
        %v2506 = vpop.f32.mrf.mxu0
        %v2507 = vadd.f32 %v2438, %v2506
        %v2508 = vpop.f32.mrf.mxu0
        %v2509 = vadd.f32 %v2440, %v2508
        %2510 = vmatmul.bf16.gmra.mxu0 %v678
        %v2511 = vpop.f32.mrf.mxu0
        %v2512 = vadd.f32 %v2443, %v2511
        %v2513 = vpop.f32.mrf.mxu0
        %v2514 = vadd.f32 %v2445, %v2513
        %2515 = vmatmul.bf16.gmra.mxu0 %v686
        %v2516 = vpop.f32.mrf.mxu0
        %v2517 = vadd.f32 %v2448, %v2516
        %v2518 = vpop.f32.mrf.mxu0
        %v2519 = vadd.f32 %v2450, %v2518
        %2520 = vmatmul.bf16.gmra.mxu0 %v694
        %v2521 = vpop.f32.mrf.mxu0
        %v2522 = vadd.f32 %v2453, %v2521
        %v2523 = vpop.f32.mrf.mxu0
        %v2524 = vadd.f32 %v2455, %v2523
        %2525 = vmatmul.bf16.gmra.mxu0 %v702
        %v2526 = vpop.f32.mrf.mxu0
        %v2527 = vadd.f32 %v2458, %v2526
        %v2528 = vpop.f32.mrf.mxu0
        %v2529 = vadd.f32 %v2460, %v2528
        %2530 = vmatmul.bf16.gmra.mxu0 %v710
        %v2531 = vpop.f32.mrf.mxu0
        %v2532 = vadd.f32 %v2463, %v2531
        %v2533 = vpop.f32.mrf.mxu0
        %v2534 = vadd.f32 %v2465, %v2533
        %2535 = vmatmul.bf16.gmra.mxu0 %v718
        %v2536 = vpop.f32.mrf.mxu0
        %v2537 = vadd.f32 %v2468, %v2536
        %v2538 = vpop.f32.mrf.mxu0
        %v2539 = vadd.f32 %v2470, %v2538
        %2540 = vmatmul.bf16.gmra.mxu0 %v726
        %v2541 = vpop.f32.mrf.mxu0
        %v2542 = vadd.f32 %v2473, %v2541
        %v2543 = vpop.f32.mrf.mxu0
        %v2544 = vadd.f32 %v2475, %v2543
        %2545 = vmatmul.bf16.gmra.mxu0 %v734
        %v2546 = vpop.f32.mrf.mxu0
        %v2547 = vadd.f32 %v2478, %v2546
        %v2548 = vpop.f32.mrf.mxu0
        %v2549 = vadd.f32 %v2480, %v2548
        %2550 = vmatmul.bf16.gmra.mxu0 %v742
        %v2551 = vpop.f32.mrf.mxu0
        %v2552 = vadd.f32 %v2483, %v2551
        %v2553 = vpop.f32.mrf.mxu0
        %v2554 = vadd.f32 %v2485, %v2553
        %2555 = vmatmul.bf16.gmra.mxu0 %v750
        %v2556 = vpop.f32.mrf.mxu0
        %v2557 = vadd.f32 %v2488, %v2556
        %v2558 = vpop.f32.mrf.mxu0
        %v2559 = vadd.f32 %v2490, %v2558
        %2560 = vdwg.mxu0
        %2561 = vmatpush.bf16.msra.mxu0 %v1397
        %2562 = vmatpush.bf16.msra.mxu0 %v1395
        %2563 = vmatpush.bf16.msra.mxu0 %v1393
        %2564 = vmatpush.bf16.msra.mxu0 %v1391
        %2565 = vmatpush.bf16.msra.mxu0 %v1389
        %2566 = vmatpush.bf16.msra.mxu0 %v1387
        %2567 = vmatpush.bf16.msra.mxu0 %v1385
        %2568 = vmatpush.bf16.msra.mxu0 %v1383
        %2569 = vmatmul.bf16.gmra.mxu0 %v663
        %v2570 = vpop.f32.mrf.mxu0
        %v2571 = vadd.f32 %v2502, %v2570
        %v2572 = vpop.f32.mrf.mxu0
        %v2573 = vadd.f32 %v2504, %v2572
        %2574 = vmatmul.bf16.gmra.mxu0 %v671
        %v2575 = vpop.f32.mrf.mxu0
        %v2576 = vadd.f32 %v2507, %v2575
        %v2577 = vpop.f32.mrf.mxu0
        %v2578 = vadd.f32 %v2509, %v2577
        %2579 = vmatmul.bf16.gmra.mxu0 %v679
        %v2580 = vpop.f32.mrf.mxu0
        %v2581 = vadd.f32 %v2512, %v2580
        %v2582 = vpop.f32.mrf.mxu0
        %v2583 = vadd.f32 %v2514, %v2582
        %2584 = vmatmul.bf16.gmra.mxu0 %v687
        %v2585 = vpop.f32.mrf.mxu0
        %v2586 = vadd.f32 %v2517, %v2585
        %v2587 = vpop.f32.mrf.mxu0
        %v2588 = vadd.f32 %v2519, %v2587
        %2589 = vmatmul.bf16.gmra.mxu0 %v695
        %v2590 = vpop.f32.mrf.mxu0
        %v2591 = vadd.f32 %v2522, %v2590
        %v2592 = vpop.f32.mrf.mxu0
        %v2593 = vadd.f32 %v2524, %v2592
        %2594 = vmatmul.bf16.gmra.mxu0 %v703
        %v2595 = vpop.f32.mrf.mxu0
        %v2596 = vadd.f32 %v2527, %v2595
        %v2597 = vpop.f32.mrf.mxu0
        %v2598 = vadd.f32 %v2529, %v2597
        %2599 = vmatmul.bf16.gmra.mxu0 %v711
        %v2600 = vpop.f32.mrf.mxu0
        %v2601 = vadd.f32 %v2532, %v2600
        %v2602 = vpop.f32.mrf.mxu0
        %v2603 = vadd.f32 %v2534, %v2602
        %2604 = vmatmul.bf16.gmra.mxu0 %v719
        %v2605 = vpop.f32.mrf.mxu0
        %v2606 = vadd.f32 %v2537, %v2605
        %v2607 = vpop.f32.mrf.mxu0
        %v2608 = vadd.f32 %v2539, %v2607
        %2609 = vmatmul.bf16.gmra.mxu0 %v727
        %v2610 = vpop.f32.mrf.mxu0
        %v2611 = vadd.f32 %v2542, %v2610
        %v2612 = vpop.f32.mrf.mxu0
        %v2613 = vadd.f32 %v2544, %v2612
        %2614 = vmatmul.bf16.gmra.mxu0 %v735
        %v2615 = vpop.f32.mrf.mxu0
        %v2616 = vadd.f32 %v2547, %v2615
        %v2617 = vpop.f32.mrf.mxu0
        %v2618 = vadd.f32 %v2549, %v2617
        %2619 = vmatmul.bf16.gmra.mxu0 %v743
        %v2620 = vpop.f32.mrf.mxu0
        %v2621 = vadd.f32 %v2552, %v2620
        %v2622 = vpop.f32.mrf.mxu0
        %v2623 = vadd.f32 %v2554, %v2622
        %2624 = vmatmul.bf16.gmra.mxu0 %v751
        %v2625 = vpop.f32.mrf.mxu0
        %v2626 = vadd.f32 %v2557, %v2625
        %v2627 = vpop.f32.mrf.mxu0
        %v2628 = vadd.f32 %v2559, %v2627
        %2629 = vdwg.mxu0
        %v2630 = vld [vmem:[%s402] sm:$0xff]
        %v2631 = vld [vmem:[%s402 + $0x8] sm:$0xff]
        %v2632 = vld [vmem:[%s402 + $0x10] sm:$0xff]
        %v2633 = vld [vmem:[%s402 + $0x18] sm:$0xff]
        %v2634 = vld [vmem:[%s402 + $0x20] sm:$0xff]
        %v2635 = vld [vmem:[%s402 + $0x28] sm:$0xff]
        %v2636 = vld [vmem:[%s402 + $0x30] sm:$0xff]
        %v2637 = vld [vmem:[%s402 + $0x38] sm:$0xff]
        %v2638 = vld [vmem:[%s402 + $0x40] sm:$0xff]
        %v2639 = vld [vmem:[%s402 + $0x48] sm:$0xff]
        %v2640 = vld [vmem:[%s402 + $0x50] sm:$0xff]
        %v2641 = vld [vmem:[%s402 + $0x58] sm:$0xff]
        %v2642 = vld [vmem:[%s402 + $0x60] sm:$0xff]
        %v2643 = vld [vmem:[%s402 + $0x68] sm:$0xff]
        %v2644 = vld [vmem:[%s402 + $0x70] sm:$0xff]
        %v2645 = vld [vmem:[%s402 + $0x78] sm:$0xff]
        %v2646 = vld [vmem:[%s402 + $0x80] sm:$0xff]
        %v2647 = vld [vmem:[%s402 + $0x88] sm:$0xff]
        %v2648 = vld [vmem:[%s402 + $0x90] sm:$0xff]
        %v2649 = vld [vmem:[%s402 + $0x98] sm:$0xff]
        %v2650 = vld [vmem:[%s402 + $0xa0] sm:$0xff]
        %v2651 = vld [vmem:[%s402 + $0xa8] sm:$0xff]
        %v2652 = vld [vmem:[%s402 + $0xb0] sm:$0xff]
        %v2653 = vld [vmem:[%s402 + $0xb8] sm:$0xff]
        %v2654 = vld [vmem:[%s402 + $0xc0] sm:$0xff]
        %v2655 = vld [vmem:[%s402 + $0xc8] sm:$0xff]
        %v2656 = vld [vmem:[%s402 + $0xd0] sm:$0xff]
        %v2657 = vld [vmem:[%s402 + $0xd8] sm:$0xff]
        %v2658 = vld [vmem:[%s402 + $0xe0] sm:$0xff]
        %v2659 = vld [vmem:[%s402 + $0xe8] sm:$0xff]
        %v2660 = vld [vmem:[%s402 + $0xf0] sm:$0xff]
        %v2661 = vld [vmem:[%s402 + $0xf8] sm:$0xff]
        %v2662 = vld [vmem:[%s402 + $0x100] sm:$0xff]
        %v2663 = vld [vmem:[%s402 + $0x108] sm:$0xff]
        %v2664 = vld [vmem:[%s402 + $0x110] sm:$0xff]
        %v2665 = vld [vmem:[%s402 + $0x118] sm:$0xff]
        %v2666 = vld [vmem:[%s402 + $0x120] sm:$0xff]
        %v2667 = vld [vmem:[%s402 + $0x128] sm:$0xff]
        %v2668 = vld [vmem:[%s402 + $0x130] sm:$0xff]
        %v2669 = vld [vmem:[%s402 + $0x138] sm:$0xff]
        %v2670 = vld [vmem:[%s402 + $0x140] sm:$0xff]
        %v2671 = vld [vmem:[%s402 + $0x148] sm:$0xff]
        %v2672 = vld [vmem:[%s402 + $0x150] sm:$0xff]
        %v2673 = vld [vmem:[%s402 + $0x158] sm:$0xff]
        %v2674 = vld [vmem:[%s402 + $0x160] sm:$0xff]
        %v2675 = vld [vmem:[%s402 + $0x168] sm:$0xff]
        %v2676 = vld [vmem:[%s402 + $0x170] sm:$0xff]
        %v2677 = vld [vmem:[%s402 + $0x178] sm:$0xff]
        %v2678 = vadd.f32 %v2019, %v2630
        %v2679 = vadd.f32 %v2571, %v2631
        %v2680 = vadd.f32 %v2021, %v2632
        %v2681 = vadd.f32 %v2573, %v2633
        %v2682 = vadd.f32 %v2024, %v2634
        %v2683 = vadd.f32 %v2576, %v2635
        %v2684 = vadd.f32 %v2026, %v2636
        %v2685 = vadd.f32 %v2578, %v2637
        %v2686 = vadd.f32 %v2029, %v2638
        %v2687 = vadd.f32 %v2581, %v2639
        %v2688 = vadd.f32 %v2031, %v2640
        %v2689 = vadd.f32 %v2583, %v2641
        %v2690 = vadd.f32 %v2034, %v2642
        %v2691 = vadd.f32 %v2586, %v2643
        %v2692 = vadd.f32 %v2036, %v2644
        %v2693 = vadd.f32 %v2588, %v2645
        %v2694 = vadd.f32 %v2039, %v2646
        %v2695 = vadd.f32 %v2591, %v2647
        %v2696 = vadd.f32 %v2041, %v2648
        %v2697 = vadd.f32 %v2593, %v2649
        %v2698 = vadd.f32 %v2044, %v2650
        %v2699 = vadd.f32 %v2596, %v2651
        %v2700 = vadd.f32 %v2046, %v2652
        %v2701 = vadd.f32 %v2598, %v2653
        %v2702 = vadd.f32 %v2049, %v2654
        %v2703 = vadd.f32 %v2601, %v2655
        %v2704 = vadd.f32 %v2051, %v2656
        %v2705 = vadd.f32 %v2603, %v2657
        %v2706 = vadd.f32 %v2054, %v2658
        %v2707 = vadd.f32 %v2606, %v2659
        %v2708 = vadd.f32 %v2056, %v2660
        %v2709 = vadd.f32 %v2608, %v2661
        %v2710 = vadd.f32 %v2059, %v2662
        %v2711 = vadd.f32 %v2611, %v2663
        %v2712 = vadd.f32 %v2061, %v2664
        %v2713 = vadd.f32 %v2613, %v2665
        %v2714 = vadd.f32 %v2064, %v2666
        %v2715 = vadd.f32 %v2616, %v2667
        %v2716 = vadd.f32 %v2066, %v2668
        %v2717 = vadd.f32 %v2618, %v2669
        %v2718 = vadd.f32 %v2069, %v2670
        %v2719 = vadd.f32 %v2621, %v2671
        %v2720 = vadd.f32 %v2071, %v2672
        %v2721 = vadd.f32 %v2623, %v2673
        %v2722 = vadd.f32 %v2074, %v2674
        %v2723 = vadd.f32 %v2626, %v2675
        %v2724 = vadd.f32 %v2076, %v2676
        %v2725 = vadd.f32 %v2628, %v2677
        %v2726 = vadd.f32 %v2678, %v2679
        %2727 = vadd.xlane.f32.xlu0 %v2726
        %v2728 = vpop.xlane.xlu0 %2727
        %v2729 = vadd.f32 %v2680, %v2681
        %2730 = vadd.xlane.f32.xlu0 %v2729
        %v2731 = vpop.xlane.xlu0 %2730
        %v2732 = vadd.f32 %v2682, %v2683
        %2733 = vadd.xlane.f32.xlu0 %v2732
        %v2734 = vpop.xlane.xlu0 %2733
        %v2735 = vadd.f32 %v2684, %v2685
        %2736 = vadd.xlane.f32.xlu0 %v2735
        %v2737 = vpop.xlane.xlu0 %2736
        %v2738 = vadd.f32 %v2686, %v2687
        %2739 = vadd.xlane.f32.xlu0 %v2738
        %v2740 = vpop.xlane.xlu0 %2739
        %v2741 = vadd.f32 %v2688, %v2689
        %2742 = vadd.xlane.f32.xlu0 %v2741
        %v2743 = vpop.xlane.xlu0 %2742
        %v2744 = vadd.f32 %v2690, %v2691
        %2745 = vadd.xlane.f32.xlu0 %v2744
        %v2746 = vpop.xlane.xlu0 %2745
        %v2747 = vadd.f32 %v2692, %v2693
        %2748 = vadd.xlane.f32.xlu0 %v2747
        %v2749 = vpop.xlane.xlu0 %2748
        %v2750 = vadd.f32 %v2694, %v2695
        %2751 = vadd.xlane.f32.xlu0 %v2750
        %v2752 = vpop.xlane.xlu0 %2751
        %v2753 = vadd.f32 %v2696, %v2697
        %2754 = vadd.xlane.f32.xlu0 %v2753
        %v2755 = vpop.xlane.xlu0 %2754
        %v2756 = vadd.f32 %v2698, %v2699
        %2757 = vadd.xlane.f32.xlu0 %v2756
        %v2758 = vpop.xlane.xlu0 %2757
        %v2759 = vadd.f32 %v2700, %v2701
        %2760 = vadd.xlane.f32.xlu0 %v2759
        %v2761 = vpop.xlane.xlu0 %2760
        %v2762 = vadd.f32 %v2702, %v2703
        %2763 = vadd.xlane.f32.xlu0 %v2762
        %v2764 = vpop.xlane.xlu0 %2763
        %v2765 = vadd.f32 %v2704, %v2705
        %2766 = vadd.xlane.f32.xlu0 %v2765
        %v2767 = vpop.xlane.xlu0 %2766
        %v2768 = vadd.f32 %v2706, %v2707
        %2769 = vadd.xlane.f32.xlu0 %v2768
        %v2770 = vpop.xlane.xlu0 %2769
        %v2771 = vadd.f32 %v2708, %v2709
        %2772 = vadd.xlane.f32.xlu0 %v2771
        %v2773 = vpop.xlane.xlu0 %2772
        %v2774 = vadd.f32 %v2710, %v2711
        %2775 = vadd.xlane.f32.xlu0 %v2774
        %v2776 = vpop.xlane.xlu0 %2775
        %v2777 = vadd.f32 %v2712, %v2713
        %2778 = vadd.xlane.f32.xlu0 %v2777
        %v2779 = vpop.xlane.xlu0 %2778
        %v2780 = vadd.f32 %v2714, %v2715
        %2781 = vadd.xlane.f32.xlu0 %v2780
        %v2782 = vpop.xlane.xlu0 %2781
        %v2783 = vadd.f32 %v2716, %v2717
        %2784 = vadd.xlane.f32.xlu0 %v2783
        %v2785 = vpop.xlane.xlu0 %2784
        %v2786 = vadd.f32 %v2718, %v2719
        %2787 = vadd.xlane.f32.xlu0 %v2786
        %v2788 = vpop.xlane.xlu0 %2787
        %v2789 = vadd.f32 %v2720, %v2721
        %2790 = vadd.xlane.f32.xlu0 %v2789
        %v2791 = vpop.xlane.xlu0 %2790
        %v2792 = vadd.f32 %v2722, %v2723
        %2793 = vadd.xlane.f32.xlu0 %v2792
        %v2794 = vpop.xlane.xlu0 %2793
        %v2795 = vadd.f32 %v2724, %v2725
        %2796 = vadd.xlane.f32.xlu0 %v2795
        %v2797 = vpop.xlane.xlu0 %2796
        %v2798 = vmul.f32 %v2678, %v2678
        %v2799 = vmul.f32 %v2679, %v2679
        %v2800 = vmul.f32 %v2680, %v2680
        %v2801 = vmul.f32 %v2681, %v2681
        %v2802 = vmul.f32 %v2682, %v2682
        %v2803 = vmul.f32 %v2683, %v2683
        %v2804 = vmul.f32 %v2684, %v2684
        %v2805 = vmul.f32 %v2685, %v2685
        %v2806 = vmul.f32 %v2686, %v2686
        %v2807 = vmul.f32 %v2687, %v2687
        %v2808 = vmul.f32 %v2688, %v2688
        %v2809 = vmul.f32 %v2689, %v2689
        %v2810 = vmul.f32 %v2690, %v2690
        %v2811 = vmul.f32 %v2691, %v2691
        %v2812 = vmul.f32 %v2692, %v2692
        %v2813 = vmul.f32 %v2693, %v2693
        %v2814 = vmul.f32 %v2694, %v2694
        %v2815 = vmul.f32 %v2695, %v2695
        %v2816 = vmul.f32 %v2696, %v2696
        %v2817 = vmul.f32 %v2697, %v2697
        %v2818 = vmul.f32 %v2698, %v2698
        %v2819 = vmul.f32 %v2699, %v2699
        %v2820 = vmul.f32 %v2700, %v2700
        %v2821 = vmul.f32 %v2701, %v2701
        %v2822 = vmul.f32 %v2702, %v2702
        %v2823 = vmul.f32 %v2703, %v2703
        %v2824 = vmul.f32 %v2704, %v2704
        %v2825 = vmul.f32 %v2705, %v2705
        %v2826 = vmul.f32 %v2706, %v2706
        %v2827 = vmul.f32 %v2707, %v2707
        %v2828 = vmul.f32 %v2708, %v2708
        %v2829 = vmul.f32 %v2709, %v2709
        %v2830 = vmul.f32 %v2710, %v2710
        %v2831 = vmul.f32 %v2711, %v2711
        %v2832 = vmul.f32 %v2712, %v2712
        %v2833 = vmul.f32 %v2713, %v2713
        %v2834 = vmul.f32 %v2714, %v2714
        %v2835 = vmul.f32 %v2715, %v2715
        %v2836 = vmul.f32 %v2716, %v2716
        %v2837 = vmul.f32 %v2717, %v2717
        %v2838 = vmul.f32 %v2718, %v2718
        %v2839 = vmul.f32 %v2719, %v2719
        %v2840 = vmul.f32 %v2720, %v2720
        %v2841 = vmul.f32 %v2721, %v2721
        %v2842 = vmul.f32 %v2722, %v2722
        %v2843 = vmul.f32 %v2723, %v2723
        %v2844 = vmul.f32 %v2724, %v2724
        %v2845 = vmul.f32 %v2725, %v2725
        %v2846 = vadd.f32 %v2798, %v2799
        %2847 = vadd.xlane.f32.xlu0 %v2846
        %v2848 = vpop.xlane.xlu0 %2847
        %v2849 = vadd.f32 %v2800, %v2801
        %2850 = vadd.xlane.f32.xlu0 %v2849
        %v2851 = vpop.xlane.xlu0 %2850
        %v2852 = vadd.f32 %v2802, %v2803
        %2853 = vadd.xlane.f32.xlu0 %v2852
        %v2854 = vpop.xlane.xlu0 %2853
        %v2855 = vadd.f32 %v2804, %v2805
        %2856 = vadd.xlane.f32.xlu0 %v2855
        %v2857 = vpop.xlane.xlu0 %2856
        %v2858 = vadd.f32 %v2806, %v2807
        %2859 = vadd.xlane.f32.xlu0 %v2858
        %v2860 = vpop.xlane.xlu0 %2859
        %v2861 = vadd.f32 %v2808, %v2809
        %2862 = vadd.xlane.f32.xlu0 %v2861
        %v2863 = vpop.xlane.xlu0 %2862
        %v2864 = vadd.f32 %v2810, %v2811
        %2865 = vadd.xlane.f32.xlu0 %v2864
        %v2866 = vpop.xlane.xlu0 %2865
        %v2867 = vadd.f32 %v2812, %v2813
        %2868 = vadd.xlane.f32.xlu0 %v2867
        %v2869 = vpop.xlane.xlu0 %2868
        %v2870 = vadd.f32 %v2814, %v2815
        %2871 = vadd.xlane.f32.xlu0 %v2870
        %v2872 = vpop.xlane.xlu0 %2871
        %v2873 = vadd.f32 %v2816, %v2817
        %2874 = vadd.xlane.f32.xlu0 %v2873
        %v2875 = vpop.xlane.xlu0 %2874
        %v2876 = vadd.f32 %v2818, %v2819
        %2877 = vadd.xlane.f32.xlu0 %v2876
        %v2878 = vpop.xlane.xlu0 %2877
        %v2879 = vadd.f32 %v2820, %v2821
        %2880 = vadd.xlane.f32.xlu0 %v2879
        %v2881 = vpop.xlane.xlu0 %2880
        %v2882 = vadd.f32 %v2822, %v2823
        %2883 = vadd.xlane.f32.xlu0 %v2882
        %v2884 = vpop.xlane.xlu0 %2883
        %v2885 = vadd.f32 %v2824, %v2825
        %2886 = vadd.xlane.f32.xlu0 %v2885
        %v2887 = vpop.xlane.xlu0 %2886
        %v2888 = vadd.f32 %v2826, %v2827
        %2889 = vadd.xlane.f32.xlu0 %v2888
        %v2890 = vpop.xlane.xlu0 %2889
        %v2891 = vadd.f32 %v2828, %v2829
        %2892 = vadd.xlane.f32.xlu0 %v2891
        %v2893 = vpop.xlane.xlu0 %2892
        %v2894 = vadd.f32 %v2830, %v2831
        %2895 = vadd.xlane.f32.xlu0 %v2894
        %v2896 = vpop.xlane.xlu0 %2895
        %v2897 = vadd.f32 %v2832, %v2833
        %2898 = vadd.xlane.f32.xlu0 %v2897
        %v2899 = vpop.xlane.xlu0 %2898
        %v2900 = vadd.f32 %v2834, %v2835
        %2901 = vadd.xlane.f32.xlu0 %v2900
        %v2902 = vpop.xlane.xlu0 %2901
        %v2903 = vadd.f32 %v2836, %v2837
        %2904 = vadd.xlane.f32.xlu0 %v2903
        %v2905 = vpop.xlane.xlu0 %2904
        %v2906 = vadd.f32 %v2838, %v2839
        %2907 = vadd.xlane.f32.xlu0 %v2906
        %v2908 = vpop.xlane.xlu0 %2907
        %v2909 = vadd.f32 %v2840, %v2841
        %2910 = vadd.xlane.f32.xlu0 %v2909
        %v2911 = vpop.xlane.xlu0 %2910
        %v2912 = vadd.f32 %v2842, %v2843
        %2913 = vadd.xlane.f32.xlu0 %v2912
        %v2914 = vpop.xlane.xlu0 %2913
        %v2915 = vadd.f32 %v2844, %v2845
        %2916 = vadd.xlane.f32.xlu0 %v2915
        %v2917 = vpop.xlane.xlu0 %2916
        %v2918 = vmul.f32 %v2728, 0.00390625
        %v2919 = vmul.f32 %v2731, 0.00390625
        %v2920 = vmul.f32 %v2734, 0.00390625
        %v2921 = vmul.f32 %v2737, 0.00390625
        %v2922 = vmul.f32 %v2740, 0.00390625
        %v2923 = vmul.f32 %v2743, 0.00390625
        %v2924 = vmul.f32 %v2746, 0.00390625
        %v2925 = vmul.f32 %v2749, 0.00390625
        %v2926 = vmul.f32 %v2752, 0.00390625
        %v2927 = vmul.f32 %v2755, 0.00390625
        %v2928 = vmul.f32 %v2758, 0.00390625
        %v2929 = vmul.f32 %v2761, 0.00390625
        %v2930 = vmul.f32 %v2764, 0.00390625
        %v2931 = vmul.f32 %v2767, 0.00390625
        %v2932 = vmul.f32 %v2770, 0.00390625
        %v2933 = vmul.f32 %v2773, 0.00390625
        %v2934 = vmul.f32 %v2776, 0.00390625
        %v2935 = vmul.f32 %v2779, 0.00390625
        %v2936 = vmul.f32 %v2782, 0.00390625
        %v2937 = vmul.f32 %v2785, 0.00390625
        %v2938 = vmul.f32 %v2788, 0.00390625
        %v2939 = vmul.f32 %v2791, 0.00390625
        %v2940 = vmul.f32 %v2794, 0.00390625
        %v2941 = vmul.f32 %v2797, 0.00390625
        %v2942 = vmul.f32 %v2848, 0.00390625
        %v2943 = vmul.f32 %v2851, 0.00390625
        %v2944 = vmul.f32 %v2854, 0.00390625
        %v2945 = vmul.f32 %v2857, 0.00390625
        %v2946 = vmul.f32 %v2860, 0.00390625
        %v2947 = vmul.f32 %v2863, 0.00390625
        %v2948 = vmul.f32 %v2866, 0.00390625
        %v2949 = vmul.f32 %v2869, 0.00390625
        %v2950 = vmul.f32 %v2872, 0.00390625
        %v2951 = vmul.f32 %v2875, 0.00390625
        %v2952 = vmul.f32 %v2878, 0.00390625
        %v2953 = vmul.f32 %v2881, 0.00390625
        %v2954 = vmul.f32 %v2884, 0.00390625
        %v2955 = vmul.f32 %v2887, 0.00390625
        %v2956 = vmul.f32 %v2890, 0.00390625
        %v2957 = vmul.f32 %v2893, 0.00390625
        %v2958 = vmul.f32 %v2896, 0.00390625
        %v2959 = vmul.f32 %v2899, 0.00390625
        %v2960 = vmul.f32 %v2902, 0.00390625
        %v2961 = vmul.f32 %v2905, 0.00390625
        %v2962 = vmul.f32 %v2908, 0.00390625
        %v2963 = vmul.f32 %v2911, 0.00390625
        %v2964 = vmul.f32 %v2914, 0.00390625
        %v2965 = vmul.f32 %v2917, 0.00390625
        %v2966 = vmul.f32 %v2918, %v2918
        %v2967 = vmul.f32 %v2919, %v2919
        %v2968 = vmul.f32 %v2920, %v2920
        %v2969 = vmul.f32 %v2921, %v2921
        %v2970 = vmul.f32 %v2922, %v2922
        %v2971 = vmul.f32 %v2923, %v2923
        %v2972 = vmul.f32 %v2924, %v2924
        %v2973 = vmul.f32 %v2925, %v2925
        %v2974 = vmul.f32 %v2926, %v2926
        %v2975 = vmul.f32 %v2927, %v2927
        %v2976 = vmul.f32 %v2928, %v2928
        %v2977 = vmul.f32 %v2929, %v2929
        %v2978 = vmul.f32 %v2930, %v2930
        %v2979 = vmul.f32 %v2931, %v2931
        %v2980 = vmul.f32 %v2932, %v2932
        %v2981 = vmul.f32 %v2933, %v2933
        %v2982 = vmul.f32 %v2934, %v2934
        %v2983 = vmul.f32 %v2935, %v2935
        %v2984 = vmul.f32 %v2936, %v2936
        %v2985 = vmul.f32 %v2937, %v2937
        %v2986 = vmul.f32 %v2938, %v2938
        %v2987 = vmul.f32 %v2939, %v2939
        %v2988 = vmul.f32 %v2940, %v2940
        %v2989 = vmul.f32 %v2941, %v2941
        %v2990 = vsub.f32 %v2942, %v2966
        %v2991 = vsub.f32 %v2943, %v2967
        %v2992 = vsub.f32 %v2944, %v2968
        %v2993 = vsub.f32 %v2945, %v2969
        %v2994 = vsub.f32 %v2946, %v2970
        %v2995 = vsub.f32 %v2947, %v2971
        %v2996 = vsub.f32 %v2948, %v2972
        %v2997 = vsub.f32 %v2949, %v2973
        %v2998 = vsub.f32 %v2950, %v2974
        %v2999 = vsub.f32 %v2951, %v2975
        %v3000 = vsub.f32 %v2952, %v2976
        %v3001 = vsub.f32 %v2953, %v2977
        %v3002 = vsub.f32 %v2954, %v2978
        %v3003 = vsub.f32 %v2955, %v2979
        %v3004 = vsub.f32 %v2956, %v2980
        %v3005 = vsub.f32 %v2957, %v2981
        %v3006 = vsub.f32 %v2958, %v2982
        %v3007 = vsub.f32 %v2959, %v2983
        %v3008 = vsub.f32 %v2960, %v2984
        %v3009 = vsub.f32 %v2961, %v2985
        %v3010 = vsub.f32 %v2962, %v2986
        %v3011 = vsub.f32 %v2963, %v2987
        %v3012 = vsub.f32 %v2964, %v2988
        %v3013 = vsub.f32 %v2965, %v2989
        %v3014 = vmax.f32 %v2990, 0.0
        %v3015 = vmax.f32 %v2991, 0.0
        %v3016 = vmax.f32 %v2992, 0.0
        %v3017 = vmax.f32 %v2993, 0.0
        %v3018 = vmax.f32 %v2994, 0.0
        %v3019 = vmax.f32 %v2995, 0.0
        %v3020 = vmax.f32 %v2996, 0.0
        %v3021 = vmax.f32 %v2997, 0.0
        %v3022 = vmax.f32 %v2998, 0.0
        %v3023 = vmax.f32 %v2999, 0.0
        %v3024 = vmax.f32 %v3000, 0.0
        %v3025 = vmax.f32 %v3001, 0.0
        %v3026 = vmax.f32 %v3002, 0.0
        %v3027 = vmax.f32 %v3003, 0.0
        %v3028 = vmax.f32 %v3004, 0.0
        %v3029 = vmax.f32 %v3005, 0.0
        %v3030 = vmax.f32 %v3006, 0.0
        %v3031 = vmax.f32 %v3007, 0.0
        %v3032 = vmax.f32 %v3008, 0.0
        %v3033 = vmax.f32 %v3009, 0.0
        %v3034 = vmax.f32 %v3010, 0.0
        %v3035 = vmax.f32 %v3011, 0.0
        %v3036 = vmax.f32 %v3012, 0.0
        %v3037 = vmax.f32 %v3013, 0.0
        %v3038 = vsub.f32 %v2678, %v2918
        %v3039 = vsub.f32 %v2679, %v2918
        %v3040 = vsub.f32 %v2680, %v2919
        %v3041 = vsub.f32 %v2681, %v2919
        %v3042 = vsub.f32 %v2682, %v2920
        %v3043 = vsub.f32 %v2683, %v2920
        %v3044 = vsub.f32 %v2684, %v2921
        %v3045 = vsub.f32 %v2685, %v2921
        %v3046 = vsub.f32 %v2686, %v2922
        %v3047 = vsub.f32 %v2687, %v2922
        %v3048 = vsub.f32 %v2688, %v2923
        %v3049 = vsub.f32 %v2689, %v2923
        %v3050 = vsub.f32 %v2690, %v2924
        %v3051 = vsub.f32 %v2691, %v2924
        %v3052 = vsub.f32 %v2692, %v2925
        %v3053 = vsub.f32 %v2693, %v2925
        %v3054 = vsub.f32 %v2694, %v2926
        %v3055 = vsub.f32 %v2695, %v2926
        %v3056 = vsub.f32 %v2696, %v2927
        %v3057 = vsub.f32 %v2697, %v2927
        %v3058 = vsub.f32 %v2698, %v2928
        %v3059 = vsub.f32 %v2699, %v2928
        %v3060 = vsub.f32 %v2700, %v2929
        %v3061 = vsub.f32 %v2701, %v2929
        %v3062 = vsub.f32 %v2702, %v2930
        %v3063 = vsub.f32 %v2703, %v2930
        %v3064 = vsub.f32 %v2704, %v2931
        %v3065 = vsub.f32 %v2705, %v2931
        %v3066 = vsub.f32 %v2706, %v2932
        %v3067 = vsub.f32 %v2707, %v2932
        %v3068 = vsub.f32 %v2708, %v2933
        %v3069 = vsub.f32 %v2709, %v2933
        %v3070 = vsub.f32 %v2710, %v2934
        %v3071 = vsub.f32 %v2711, %v2934
        %v3072 = vsub.f32 %v2712, %v2935
        %v3073 = vsub.f32 %v2713, %v2935
        %v3074 = vsub.f32 %v2714, %v2936
        %v3075 = vsub.f32 %v2715, %v2936
        %v3076 = vsub.f32 %v2716, %v2937
        %v3077 = vsub.f32 %v2717, %v2937
        %v3078 = vsub.f32 %v2718, %v2938
        %v3079 = vsub.f32 %v2719, %v2938
        %v3080 = vsub.f32 %v2720, %v2939
        %v3081 = vsub.f32 %v2721, %v2939
        %v3082 = vsub.f32 %v2722, %v2940
        %v3083 = vsub.f32 %v2723, %v2940
        %v3084 = vsub.f32 %v2724, %v2941
        %v3085 = vsub.f32 %v2725, %v2941
        %v3086 = vadd.f32 %v3014, 1e-12
        %v3087 = vadd.f32 %v3015, 1e-12
        %v3088 = vadd.f32 %v3016, 1e-12
        %v3089 = vadd.f32 %v3017, 1e-12
        %v3090 = vadd.f32 %v3018, 1e-12
        %v3091 = vadd.f32 %v3019, 1e-12
        %v3092 = vadd.f32 %v3020, 1e-12
        %v3093 = vadd.f32 %v3021, 1e-12
        %v3094 = vadd.f32 %v3022, 1e-12
        %v3095 = vadd.f32 %v3023, 1e-12
        %v3096 = vadd.f32 %v3024, 1e-12
        %v3097 = vadd.f32 %v3025, 1e-12
        %v3098 = vadd.f32 %v3026, 1e-12
        %v3099 = vadd.f32 %v3027, 1e-12
        %v3100 = vadd.f32 %v3028, 1e-12
        %v3101 = vadd.f32 %v3029, 1e-12
        %v3102 = vadd.f32 %v3030, 1e-12
        %v3103 = vadd.f32 %v3031, 1e-12
        %v3104 = vadd.f32 %v3032, 1e-12
        %v3105 = vadd.f32 %v3033, 1e-12
        %v3106 = vadd.f32 %v3034, 1e-12
        %v3107 = vadd.f32 %v3035, 1e-12
        %v3108 = vadd.f32 %v3036, 1e-12
        %v3109 = vadd.f32 %v3037, 1e-12
        %v3110 = vrsqrt.pop %v3086
        %v3111 = vmul.f32 %v3110, %v3086
        %v3112 = vmul.f32 %v3111, %v3110
        %v3113 = vmul.f32 0.5, %v3112
        %v3114 = vsub.f32 1.5, %v3113
        %v3115 = vmul.f32 %v3110, %v3114
        %vm3116 = vweird.f32 %v3086
        %vm3117 = vweird.f32 %v3110
        %vm3118 = vmor %vm3116, %vm3117
        %v3119 = vsel %vm3118, %v3110, %v3115
        %v3120 = vrsqrt.pop %v3087
        %v3121 = vmul.f32 %v3120, %v3087
        %v3122 = vmul.f32 %v3121, %v3120
        %v3123 = vmul.f32 0.5, %v3122
        %v3124 = vsub.f32 1.5, %v3123
        %v3125 = vmul.f32 %v3120, %v3124
        %vm3126 = vweird.f32 %v3087
        %vm3127 = vweird.f32 %v3120
        %vm3128 = vmor %vm3126, %vm3127
        %v3129 = vsel %vm3128, %v3120, %v3125
        %v3130 = vrsqrt.pop %v3088
        %v3131 = vmul.f32 %v3130, %v3088
        %v3132 = vmul.f32 %v3131, %v3130
        %v3133 = vmul.f32 0.5, %v3132
        %v3134 = vsub.f32 1.5, %v3133
        %v3135 = vmul.f32 %v3130, %v3134
        %vm3136 = vweird.f32 %v3088
        %vm3137 = vweird.f32 %v3130
        %vm3138 = vmor %vm3136, %vm3137
        %v3139 = vsel %vm3138, %v3130, %v3135
        %v3140 = vrsqrt.pop %v3089
        %v3141 = vmul.f32 %v3140, %v3089
        %v3142 = vmul.f32 %v3141, %v3140
        %v3143 = vmul.f32 0.5, %v3142
        %v3144 = vsub.f32 1.5, %v3143
        %v3145 = vmul.f32 %v3140, %v3144
        %vm3146 = vweird.f32 %v3089
        %vm3147 = vweird.f32 %v3140
        %vm3148 = vmor %vm3146, %vm3147
        %v3149 = vsel %vm3148, %v3140, %v3145
        %v3150 = vrsqrt.pop %v3090
        %v3151 = vmul.f32 %v3150, %v3090
        %v3152 = vmul.f32 %v3151, %v3150
        %v3153 = vmul.f32 0.5, %v3152
        %v3154 = vsub.f32 1.5, %v3153
        %v3155 = vmul.f32 %v3150, %v3154
        %vm3156 = vweird.f32 %v3090
        %vm3157 = vweird.f32 %v3150
        %vm3158 = vmor %vm3156, %vm3157
        %v3159 = vsel %vm3158, %v3150, %v3155
        %v3160 = vrsqrt.pop %v3091
        %v3161 = vmul.f32 %v3160, %v3091
        %v3162 = vmul.f32 %v3161, %v3160
        %v3163 = vmul.f32 0.5, %v3162
        %v3164 = vsub.f32 1.5, %v3163
        %v3165 = vmul.f32 %v3160, %v3164
        %vm3166 = vweird.f32 %v3091
        %vm3167 = vweird.f32 %v3160
        %vm3168 = vmor %vm3166, %vm3167
        %v3169 = vsel %vm3168, %v3160, %v3165
        %v3170 = vrsqrt.pop %v3092
        %v3171 = vmul.f32 %v3170, %v3092
        %v3172 = vmul.f32 %v3171, %v3170
        %v3173 = vmul.f32 0.5, %v3172
        %v3174 = vsub.f32 1.5, %v3173
        %v3175 = vmul.f32 %v3170, %v3174
        %vm3176 = vweird.f32 %v3092
        %vm3177 = vweird.f32 %v3170
        %vm3178 = vmor %vm3176, %vm3177
        %v3179 = vsel %vm3178, %v3170, %v3175
        %v3180 = vrsqrt.pop %v3093
        %v3181 = vmul.f32 %v3180, %v3093
        %v3182 = vmul.f32 %v3181, %v3180
        %v3183 = vmul.f32 0.5, %v3182
        %v3184 = vsub.f32 1.5, %v3183
        %v3185 = vmul.f32 %v3180, %v3184
        %vm3186 = vweird.f32 %v3093
        %vm3187 = vweird.f32 %v3180
        %vm3188 = vmor %vm3186, %vm3187
        %v3189 = vsel %vm3188, %v3180, %v3185
        %v3190 = vrsqrt.pop %v3094
        %v3191 = vmul.f32 %v3190, %v3094
        %v3192 = vmul.f32 %v3191, %v3190
        %v3193 = vmul.f32 0.5, %v3192
        %v3194 = vsub.f32 1.5, %v3193
        %v3195 = vmul.f32 %v3190, %v3194
        %vm3196 = vweird.f32 %v3094
        %vm3197 = vweird.f32 %v3190
        %vm3198 = vmor %vm3196, %vm3197
        %v3199 = vsel %vm3198, %v3190, %v3195
        %v3200 = vrsqrt.pop %v3095
        %v3201 = vmul.f32 %v3200, %v3095
        %v3202 = vmul.f32 %v3201, %v3200
        %v3203 = vmul.f32 0.5, %v3202
        %v3204 = vsub.f32 1.5, %v3203
        %v3205 = vmul.f32 %v3200, %v3204
        %vm3206 = vweird.f32 %v3095
        %vm3207 = vweird.f32 %v3200
        %vm3208 = vmor %vm3206, %vm3207
        %v3209 = vsel %vm3208, %v3200, %v3205
        %v3210 = vrsqrt.pop %v3096
        %v3211 = vmul.f32 %v3210, %v3096
        %v3212 = vmul.f32 %v3211, %v3210
        %v3213 = vmul.f32 0.5, %v3212
        %v3214 = vsub.f32 1.5, %v3213
        %v3215 = vmul.f32 %v3210, %v3214
        %vm3216 = vweird.f32 %v3096
        %vm3217 = vweird.f32 %v3210
        %vm3218 = vmor %vm3216, %vm3217
        %v3219 = vsel %vm3218, %v3210, %v3215
        %v3220 = vrsqrt.pop %v3097
        %v3221 = vmul.f32 %v3220, %v3097
        %v3222 = vmul.f32 %v3221, %v3220
        %v3223 = vmul.f32 0.5, %v3222
        %v3224 = vsub.f32 1.5, %v3223
        %v3225 = vmul.f32 %v3220, %v3224
        %vm3226 = vweird.f32 %v3097
        %vm3227 = vweird.f32 %v3220
        %vm3228 = vmor %vm3226, %vm3227
        %v3229 = vsel %vm3228, %v3220, %v3225
        %v3230 = vrsqrt.pop %v3098
        %v3231 = vmul.f32 %v3230, %v3098
        %v3232 = vmul.f32 %v3231, %v3230
        %v3233 = vmul.f32 0.5, %v3232
        %v3234 = vsub.f32 1.5, %v3233
        %v3235 = vmul.f32 %v3230, %v3234
        %vm3236 = vweird.f32 %v3098
        %vm3237 = vweird.f32 %v3230
        %vm3238 = vmor %vm3236, %vm3237
        %v3239 = vsel %vm3238, %v3230, %v3235
        %v3240 = vrsqrt.pop %v3099
        %v3241 = vmul.f32 %v3240, %v3099
        %v3242 = vmul.f32 %v3241, %v3240
        %v3243 = vmul.f32 0.5, %v3242
        %v3244 = vsub.f32 1.5, %v3243
        %v3245 = vmul.f32 %v3240, %v3244
        %vm3246 = vweird.f32 %v3099
        %vm3247 = vweird.f32 %v3240
        %vm3248 = vmor %vm3246, %vm3247
        %v3249 = vsel %vm3248, %v3240, %v3245
        %v3250 = vrsqrt.pop %v3100
        %v3251 = vmul.f32 %v3250, %v3100
        %v3252 = vmul.f32 %v3251, %v3250
        %v3253 = vmul.f32 0.5, %v3252
        %v3254 = vsub.f32 1.5, %v3253
        %v3255 = vmul.f32 %v3250, %v3254
        %vm3256 = vweird.f32 %v3100
        %vm3257 = vweird.f32 %v3250
        %vm3258 = vmor %vm3256, %vm3257
        %v3259 = vsel %vm3258, %v3250, %v3255
        %v3260 = vrsqrt.pop %v3101
        %v3261 = vmul.f32 %v3260, %v3101
        %v3262 = vmul.f32 %v3261, %v3260
        %v3263 = vmul.f32 0.5, %v3262
        %v3264 = vsub.f32 1.5, %v3263
        %v3265 = vmul.f32 %v3260, %v3264
        %vm3266 = vweird.f32 %v3101
        %vm3267 = vweird.f32 %v3260
        %vm3268 = vmor %vm3266, %vm3267
        %v3269 = vsel %vm3268, %v3260, %v3265
        %v3270 = vrsqrt.pop %v3102
        %v3271 = vmul.f32 %v3270, %v3102
        %v3272 = vmul.f32 %v3271, %v3270
        %v3273 = vmul.f32 0.5, %v3272
        %v3274 = vsub.f32 1.5, %v3273
        %v3275 = vmul.f32 %v3270, %v3274
        %vm3276 = vweird.f32 %v3102
        %vm3277 = vweird.f32 %v3270
        %vm3278 = vmor %vm3276, %vm3277
        %v3279 = vsel %vm3278, %v3270, %v3275
        %v3280 = vrsqrt.pop %v3103
        %v3281 = vmul.f32 %v3280, %v3103
        %v3282 = vmul.f32 %v3281, %v3280
        %v3283 = vmul.f32 0.5, %v3282
        %v3284 = vsub.f32 1.5, %v3283
        %v3285 = vmul.f32 %v3280, %v3284
        %vm3286 = vweird.f32 %v3103
        %vm3287 = vweird.f32 %v3280
        %vm3288 = vmor %vm3286, %vm3287
        %v3289 = vsel %vm3288, %v3280, %v3285
        %v3290 = vrsqrt.pop %v3104
        %v3291 = vmul.f32 %v3290, %v3104
        %v3292 = vmul.f32 %v3291, %v3290
        %v3293 = vmul.f32 0.5, %v3292
        %v3294 = vsub.f32 1.5, %v3293
        %v3295 = vmul.f32 %v3290, %v3294
        %vm3296 = vweird.f32 %v3104
        %vm3297 = vweird.f32 %v3290
        %vm3298 = vmor %vm3296, %vm3297
        %v3299 = vsel %vm3298, %v3290, %v3295
        %v3300 = vrsqrt.pop %v3105
        %v3301 = vmul.f32 %v3300, %v3105
        %v3302 = vmul.f32 %v3301, %v3300
        %v3303 = vmul.f32 0.5, %v3302
        %v3304 = vsub.f32 1.5, %v3303
        %v3305 = vmul.f32 %v3300, %v3304
        %vm3306 = vweird.f32 %v3105
        %vm3307 = vweird.f32 %v3300
        %vm3308 = vmor %vm3306, %vm3307
        %v3309 = vsel %vm3308, %v3300, %v3305
        %v3310 = vrsqrt.pop %v3106
        %v3311 = vmul.f32 %v3310, %v3106
        %v3312 = vmul.f32 %v3311, %v3310
        %v3313 = vmul.f32 0.5, %v3312
        %v3314 = vsub.f32 1.5, %v3313
        %v3315 = vmul.f32 %v3310, %v3314
        %vm3316 = vweird.f32 %v3106
        %vm3317 = vweird.f32 %v3310
        %vm3318 = vmor %vm3316, %vm3317
        %v3319 = vsel %vm3318, %v3310, %v3315
        %v3320 = vrsqrt.pop %v3107
        %v3321 = vmul.f32 %v3320, %v3107
        %v3322 = vmul.f32 %v3321, %v3320
        %v3323 = vmul.f32 0.5, %v3322
        %v3324 = vsub.f32 1.5, %v3323
        %v3325 = vmul.f32 %v3320, %v3324
        %vm3326 = vweird.f32 %v3107
        %vm3327 = vweird.f32 %v3320
        %vm3328 = vmor %vm3326, %vm3327
        %v3329 = vsel %vm3328, %v3320, %v3325
        %v3330 = vrsqrt.pop %v3108
        %v3331 = vmul.f32 %v3330, %v3108
        %v3332 = vmul.f32 %v3331, %v3330
        %v3333 = vmul.f32 0.5, %v3332
        %v3334 = vsub.f32 1.5, %v3333
        %v3335 = vmul.f32 %v3330, %v3334
        %vm3336 = vweird.f32 %v3108
        %vm3337 = vweird.f32 %v3330
        %vm3338 = vmor %vm3336, %vm3337
        %v3339 = vsel %vm3338, %v3330, %v3335
        %v3340 = vrsqrt.pop %v3109
        %v3341 = vmul.f32 %v3340, %v3109
        %v3342 = vmul.f32 %v3341, %v3340
        %v3343 = vmul.f32 0.5, %v3342
        %v3344 = vsub.f32 1.5, %v3343
        %v3345 = vmul.f32 %v3340, %v3344
        %vm3346 = vweird.f32 %v3109
        %vm3347 = vweird.f32 %v3340
        %vm3348 = vmor %vm3346, %vm3347
        %v3349 = vsel %vm3348, %v3340, %v3345
        %v3350 = vmul.f32 %v3038, %v3119
        %v3351 = vmul.f32 %v3039, %v3119
        %v3352 = vmul.f32 %v3040, %v3129
        %v3353 = vmul.f32 %v3041, %v3129
        %v3354 = vmul.f32 %v3042, %v3139
        %v3355 = vmul.f32 %v3043, %v3139
        %v3356 = vmul.f32 %v3044, %v3149
        %v3357 = vmul.f32 %v3045, %v3149
        %v3358 = vmul.f32 %v3046, %v3159
        %v3359 = vmul.f32 %v3047, %v3159
        %v3360 = vmul.f32 %v3048, %v3169
        %v3361 = vmul.f32 %v3049, %v3169
        %v3362 = vmul.f32 %v3050, %v3179
        %v3363 = vmul.f32 %v3051, %v3179
        %v3364 = vmul.f32 %v3052, %v3189
        %v3365 = vmul.f32 %v3053, %v3189
        %v3366 = vmul.f32 %v3054, %v3199
        %v3367 = vmul.f32 %v3055, %v3199
        %v3368 = vmul.f32 %v3056, %v3209
        %v3369 = vmul.f32 %v3057, %v3209
        %v3370 = vmul.f32 %v3058, %v3219
        %v3371 = vmul.f32 %v3059, %v3219
        %v3372 = vmul.f32 %v3060, %v3229
        %v3373 = vmul.f32 %v3061, %v3229
        %v3374 = vmul.f32 %v3062, %v3239
        %v3375 = vmul.f32 %v3063, %v3239
        %v3376 = vmul.f32 %v3064, %v3249
        %v3377 = vmul.f32 %v3065, %v3249
        %v3378 = vmul.f32 %v3066, %v3259
        %v3379 = vmul.f32 %v3067, %v3259
        %v3380 = vmul.f32 %v3068, %v3269
        %v3381 = vmul.f32 %v3069, %v3269
        %v3382 = vmul.f32 %v3070, %v3279
        %v3383 = vmul.f32 %v3071, %v3279
        %v3384 = vmul.f32 %v3072, %v3289
        %v3385 = vmul.f32 %v3073, %v3289
        %v3386 = vmul.f32 %v3074, %v3299
        %v3387 = vmul.f32 %v3075, %v3299
        %v3388 = vmul.f32 %v3076, %v3309
        %v3389 = vmul.f32 %v3077, %v3309
        %v3390 = vmul.f32 %v3078, %v3319
        %v3391 = vmul.f32 %v3079, %v3319
        %v3392 = vmul.f32 %v3080, %v3329
        %v3393 = vmul.f32 %v3081, %v3329
        %v3394 = vmul.f32 %v3082, %v3339
        %v3395 = vmul.f32 %v3083, %v3339
        %v3396 = vmul.f32 %v3084, %v3349
        %v3397 = vmul.f32 %v3085, %v3349
        %v3398 = vld [vmem:[#allocation10] sm:$0x3]
        %v3400 = vperm.slane %v3398, 0
        %v3401 = vperm.slane %v3398, 1
        %v3404 = vmul.f32 %v3350, %v3400
        %v3405 = vmul.f32 %v3351, %v3401
        %v3406 = vmul.f32 %v3352, %v3400
        %v3407 = vmul.f32 %v3353, %v3401
        %v3408 = vmul.f32 %v3354, %v3400
        %v3409 = vmul.f32 %v3355, %v3401
        %v3410 = vmul.f32 %v3356, %v3400
        %v3411 = vmul.f32 %v3357, %v3401
        %v3412 = vmul.f32 %v3358, %v3400
        %v3413 = vmul.f32 %v3359, %v3401
        %v3414 = vmul.f32 %v3360, %v3400
        %v3415 = vmul.f32 %v3361, %v3401
        %v3416 = vmul.f32 %v3362, %v3400
        %v3417 = vmul.f32 %v3363, %v3401
        %v3418 = vmul.f32 %v3364, %v3400
        %v3419 = vmul.f32 %v3365, %v3401
        %v3420 = vmul.f32 %v3366, %v3400
        %v3421 = vmul.f32 %v3367, %v3401
        %v3422 = vmul.f32 %v3368, %v3400
        %v3423 = vmul.f32 %v3369, %v3401
        %v3424 = vmul.f32 %v3370, %v3400
        %v3425 = vmul.f32 %v3371, %v3401
        %v3426 = vmul.f32 %v3372, %v3400
        %v3427 = vmul.f32 %v3373, %v3401
        %v3428 = vmul.f32 %v3374, %v3400
        %v3429 = vmul.f32 %v3375, %v3401
        %v3430 = vmul.f32 %v3376, %v3400
        %v3431 = vmul.f32 %v3377, %v3401
        %v3432 = vmul.f32 %v3378, %v3400
        %v3433 = vmul.f32 %v3379, %v3401
        %v3434 = vmul.f32 %v3380, %v3400
        %v3435 = vmul.f32 %v3381, %v3401
        %v3436 = vmul.f32 %v3382, %v3400
        %v3437 = vmul.f32 %v3383, %v3401
        %v3438 = vmul.f32 %v3384, %v3400
        %v3439 = vmul.f32 %v3385, %v3401
        %v3440 = vmul.f32 %v3386, %v3400
        %v3441 = vmul.f32 %v3387, %v3401
        %v3442 = vmul.f32 %v3388, %v3400
        %v3443 = vmul.f32 %v3389, %v3401
        %v3444 = vmul.f32 %v3390, %v3400
        %v3445 = vmul.f32 %v3391, %v3401
        %v3446 = vmul.f32 %v3392, %v3400
        %v3447 = vmul.f32 %v3393, %v3401
        %v3448 = vmul.f32 %v3394, %v3400
        %v3449 = vmul.f32 %v3395, %v3401
        %v3450 = vmul.f32 %v3396, %v3400
        %v3451 = vmul.f32 %v3397, %v3401
        %v3452 = vld [vmem:[#allocation11] sm:$0x3]
        %v3454 = vperm.slane %v3452, 0
        %v3455 = vperm.slane %v3452, 1
        %v3458 = vadd.f32 %v3404, %v3454
        %v3459 = vadd.f32 %v3405, %v3455
        %v3460 = vadd.f32 %v3406, %v3454
        %v3461 = vadd.f32 %v3407, %v3455
        %v3462 = vadd.f32 %v3408, %v3454
        %v3463 = vadd.f32 %v3409, %v3455
        %v3464 = vadd.f32 %v3410, %v3454
        %v3465 = vadd.f32 %v3411, %v3455
        %v3466 = vadd.f32 %v3412, %v3454
        %v3467 = vadd.f32 %v3413, %v3455
        %v3468 = vadd.f32 %v3414, %v3454
        %v3469 = vadd.f32 %v3415, %v3455
        %v3470 = vadd.f32 %v3416, %v3454
        %v3471 = vadd.f32 %v3417, %v3455
        %v3472 = vadd.f32 %v3418, %v3454
        %v3473 = vadd.f32 %v3419, %v3455
        %v3474 = vadd.f32 %v3420, %v3454
        %v3475 = vadd.f32 %v3421, %v3455
        %v3476 = vadd.f32 %v3422, %v3454
        %v3477 = vadd.f32 %v3423, %v3455
        %v3478 = vadd.f32 %v3424, %v3454
        %v3479 = vadd.f32 %v3425, %v3455
        %v3480 = vadd.f32 %v3426, %v3454
        %v3481 = vadd.f32 %v3427, %v3455
        %v3482 = vadd.f32 %v3428, %v3454
        %v3483 = vadd.f32 %v3429, %v3455
        %v3484 = vadd.f32 %v3430, %v3454
        %v3485 = vadd.f32 %v3431, %v3455
        %v3486 = vadd.f32 %v3432, %v3454
        %v3487 = vadd.f32 %v3433, %v3455
        %v3488 = vadd.f32 %v3434, %v3454
        %v3489 = vadd.f32 %v3435, %v3455
        %v3490 = vadd.f32 %v3436, %v3454
        %v3491 = vadd.f32 %v3437, %v3455
        %v3492 = vadd.f32 %v3438, %v3454
        %v3493 = vadd.f32 %v3439, %v3455
        %v3494 = vadd.f32 %v3440, %v3454
        %v3495 = vadd.f32 %v3441, %v3455
        %v3496 = vadd.f32 %v3442, %v3454
        %v3497 = vadd.f32 %v3443, %v3455
        %v3498 = vadd.f32 %v3444, %v3454
        %v3499 = vadd.f32 %v3445, %v3455
        %v3500 = vadd.f32 %v3446, %v3454
        %v3501 = vadd.f32 %v3447, %v3455
        %v3502 = vadd.f32 %v3448, %v3454
        %v3503 = vadd.f32 %v3449, %v3455
        %v3504 = vadd.f32 %v3450, %v3454
        %v3505 = vadd.f32 %v3451, %v3455
        %v3506 = vpack.c.bf16 %v3460, %v3458
        %v3507 = vpack.c.bf16 %v3461, %v3459
        %v3508 = vpack.c.bf16 %v3464, %v3462
        %v3509 = vpack.c.bf16 %v3465, %v3463
        %v3510 = vpack.c.bf16 %v3468, %v3466
        %v3511 = vpack.c.bf16 %v3469, %v3467
        %v3512 = vpack.c.bf16 %v3472, %v3470
        %v3513 = vpack.c.bf16 %v3473, %v3471
        %v3514 = vpack.c.bf16 %v3476, %v3474
        %v3515 = vpack.c.bf16 %v3477, %v3475
        %v3516 = vpack.c.bf16 %v3480, %v3478
        %v3517 = vpack.c.bf16 %v3481, %v3479
        %v3518 = vpack.c.bf16 %v3484, %v3482
        %v3519 = vpack.c.bf16 %v3485, %v3483
        %v3520 = vpack.c.bf16 %v3488, %v3486
        %v3521 = vpack.c.bf16 %v3489, %v3487
        %v3522 = vpack.c.bf16 %v3492, %v3490
        %v3523 = vpack.c.bf16 %v3493, %v3491
        %v3524 = vpack.c.bf16 %v3496, %v3494
        %v3525 = vpack.c.bf16 %v3497, %v3495
        %v3526 = vpack.c.bf16 %v3500, %v3498
        %v3527 = vpack.c.bf16 %v3501, %v3499
        %v3528 = vpack.c.bf16 %v3504, %v3502
        %v3529 = vpack.c.bf16 %v3505, %v3503
        %v3530 = vld [vmem:[#allocation13] sm:$0xff]
        %v3531 = vld [vmem:[#allocation13 + $0x8] sm:$0xff]
        %v3532 = vld [vmem:[#allocation13 + $0x10] sm:$0xff]
        %v3533 = vld [vmem:[#allocation13 + $0x18] sm:$0xff]
        %v3534 = vld [vmem:[#allocation13 + $0x20] sm:$0xff]
        %v3535 = vld [vmem:[#allocation13 + $0x28] sm:$0xff]
        %v3536 = vld [vmem:[#allocation13 + $0x30] sm:$0xff]
        %v3537 = vld [vmem:[#allocation13 + $0x38] sm:$0xff]
        %v3538 = vld [vmem:[#allocation13 + $0x40] sm:$0xff]
        %v3539 = vld [vmem:[#allocation13 + $0x48] sm:$0xff]
        %v3540 = vld [vmem:[#allocation13 + $0x50] sm:$0xff]
        %v3541 = vld [vmem:[#allocation13 + $0x58] sm:$0xff]
        %v3542 = vld [vmem:[#allocation13 + $0x60] sm:$0xff]
        %v3543 = vld [vmem:[#allocation13 + $0x68] sm:$0xff]
        %v3544 = vld [vmem:[#allocation13 + $0x70] sm:$0xff]
        %v3545 = vld [vmem:[#allocation13 + $0x78] sm:$0xff]
        %v3546 = vld [vmem:[#allocation13 + $0x80] sm:$0xff]
        %v3547 = vld [vmem:[#allocation13 + $0x88] sm:$0xff]
        %v3548 = vld [vmem:[#allocation13 + $0x90] sm:$0xff]
        %v3549 = vld [vmem:[#allocation13 + $0x98] sm:$0xff]
        %v3550 = vld [vmem:[#allocation13 + $0xa0] sm:$0xff]
        %v3551 = vld [vmem:[#allocation13 + $0xa8] sm:$0xff]
        %v3552 = vld [vmem:[#allocation13 + $0xb0] sm:$0xff]
        %v3553 = vld [vmem:[#allocation13 + $0xb8] sm:$0xff]
        %v3554 = vld [vmem:[#allocation13 + $0xc0] sm:$0xff]
        %v3555 = vld [vmem:[#allocation13 + $0xc8] sm:$0xff]
        %v3556 = vld [vmem:[#allocation13 + $0xd0] sm:$0xff]
        %v3557 = vld [vmem:[#allocation13 + $0xd8] sm:$0xff]
        %v3558 = vld [vmem:[#allocation13 + $0xe0] sm:$0xff]
        %v3559 = vld [vmem:[#allocation13 + $0xe8] sm:$0xff]
        %v3560 = vld [vmem:[#allocation13 + $0xf0] sm:$0xff]
        %v3561 = vld [vmem:[#allocation13 + $0xf8] sm:$0xff]
        %v3562 = vld [vmem:[#allocation14] sm:$0x3]
        %v3564 = vperm.slane %v3562, 0
        %v3565 = vperm.slane %v3562, 1
        %v3600 = vunpack.c.l.b16 %v3530
        %v3601 = vunpack.c.h.b16 %v3530
        %v3602 = vunpack.c.l.b16 %v3531
        %v3603 = vunpack.c.h.b16 %v3531
        %v3604 = vunpack.c.l.b16 %v3532
        %v3605 = vunpack.c.h.b16 %v3532
        %v3606 = vunpack.c.l.b16 %v3533
        %v3607 = vunpack.c.h.b16 %v3533
        %v3608 = vunpack.c.l.b16 %v3534
        %v3609 = vunpack.c.h.b16 %v3534
        %v3610 = vunpack.c.l.b16 %v3535
        %v3611 = vunpack.c.h.b16 %v3535
        %v3612 = vunpack.c.l.b16 %v3536
        %v3613 = vunpack.c.h.b16 %v3536
        %v3614 = vunpack.c.l.b16 %v3537
        %v3615 = vunpack.c.h.b16 %v3537
        %v3616 = vunpack.c.l.b16 %v3538
        %v3617 = vunpack.c.h.b16 %v3538
        %v3618 = vunpack.c.l.b16 %v3539
        %v3619 = vunpack.c.h.b16 %v3539
        %v3620 = vunpack.c.l.b16 %v3540
        %v3621 = vunpack.c.h.b16 %v3540
        %v3622 = vunpack.c.l.b16 %v3541
        %v3623 = vunpack.c.h.b16 %v3541
        %v3624 = vunpack.c.l.b16 %v3542
        %v3625 = vunpack.c.h.b16 %v3542
        %v3626 = vunpack.c.l.b16 %v3543
        %v3627 = vunpack.c.h.b16 %v3543
        %v3628 = vunpack.c.l.b16 %v3544
        %v3629 = vunpack.c.h.b16 %v3544
        %v3630 = vunpack.c.l.b16 %v3545
        %v3631 = vunpack.c.h.b16 %v3545
        %v3632 = vunpack.c.l.b16 %v3546
        %v3633 = vunpack.c.h.b16 %v3546
        %v3634 = vunpack.c.l.b16 %v3547
        %v3635 = vunpack.c.h.b16 %v3547
        %v3636 = vunpack.c.l.b16 %v3548
        %v3637 = vunpack.c.h.b16 %v3548
        %v3638 = vunpack.c.l.b16 %v3549
        %v3639 = vunpack.c.h.b16 %v3549
        %v3640 = vunpack.c.l.b16 %v3550
        %v3641 = vunpack.c.h.b16 %v3550
        %v3642 = vunpack.c.l.b16 %v3551
        %v3643 = vunpack.c.h.b16 %v3551
        %v3644 = vunpack.c.l.b16 %v3552
        %v3645 = vunpack.c.h.b16 %v3552
        %v3646 = vunpack.c.l.b16 %v3553
        %v3647 = vunpack.c.h.b16 %v3553
        %v3648 = vunpack.c.l.b16 %v3554
        %v3649 = vunpack.c.h.b16 %v3554
        %v3650 = vunpack.c.l.b16 %v3555
        %v3651 = vunpack.c.h.b16 %v3555
        %v3652 = vunpack.c.l.b16 %v3556
        %v3653 = vunpack.c.h.b16 %v3556
        %v3654 = vunpack.c.l.b16 %v3557
        %v3655 = vunpack.c.h.b16 %v3557
        %v3656 = vunpack.c.l.b16 %v3558
        %v3657 = vunpack.c.h.b16 %v3558
        %v3658 = vunpack.c.l.b16 %v3559
        %v3659 = vunpack.c.h.b16 %v3559
        %v3660 = vunpack.c.l.b16 %v3560
        %v3661 = vunpack.c.h.b16 %v3560
        %v3662 = vunpack.c.l.b16 %v3561
        %v3663 = vunpack.c.h.b16 %v3561
        %v3664 = vpack.c.b16 %v3602, %v3600
        %v3665 = vpack.c.b16 %v3603, %v3601
        %v3666 = vpack.c.b16 %v3606, %v3604
        %v3667 = vpack.c.b16 %v3607, %v3605
        %v3668 = vpack.c.b16 %v3610, %v3608
        %v3669 = vpack.c.b16 %v3611, %v3609
        %v3670 = vpack.c.b16 %v3614, %v3612
        %v3671 = vpack.c.b16 %v3615, %v3613
        %v3672 = vpack.c.b16 %v3618, %v3616
        %v3673 = vpack.c.b16 %v3619, %v3617
        %v3674 = vpack.c.b16 %v3622, %v3620
        %v3675 = vpack.c.b16 %v3623, %v3621
        %v3676 = vpack.c.b16 %v3626, %v3624
        %v3677 = vpack.c.b16 %v3627, %v3625
        %v3678 = vpack.c.b16 %v3630, %v3628
        %v3679 = vpack.c.b16 %v3631, %v3629
        %v3680 = vpack.c.b16 %v3634, %v3632
        %v3681 = vpack.c.b16 %v3635, %v3633
        %v3682 = vpack.c.b16 %v3638, %v3636
        %v3683 = vpack.c.b16 %v3639, %v3637
        %v3684 = vpack.c.b16 %v3642, %v3640
        %v3685 = vpack.c.b16 %v3643, %v3641
        %v3686 = vpack.c.b16 %v3646, %v3644
        %v3687 = vpack.c.b16 %v3647, %v3645
        %v3688 = vpack.c.b16 %v3650, %v3648
        %v3689 = vpack.c.b16 %v3651, %v3649
        %v3690 = vpack.c.b16 %v3654, %v3652
        %v3691 = vpack.c.b16 %v3655, %v3653
        %v3692 = vpack.c.b16 %v3658, %v3656
        %v3693 = vpack.c.b16 %v3659, %v3657
        %v3694 = vpack.c.b16 %v3662, %v3660
        %v3695 = vpack.c.b16 %v3663, %v3661
        %3728 = vmatpush.bf16.msra.mxu0 %v3678
        %3729 = vmatpush.bf16.msra.mxu0 %v3676
        %3730 = vmatpush.bf16.msra.mxu0 %v3674
        %3731 = vmatpush.bf16.msra.mxu0 %v3672
        %3732 = vmatpush.bf16.msra.mxu0 %v3670
        %3733 = vmatpush.bf16.msra.mxu0 %v3668
        %3734 = vmatpush.bf16.msra.mxu0 %v3666
        %3735 = vmatpush.bf16.msra.mxu0 %v3664
        %3736 = vmatmul.bf16.gmra.mxu0 %v3506
        %v3737 = vpop.f32.mrf.mxu0
        %v3738 = vadd.f32 %v3564, %v3737
        %v3739 = vpop.f32.mrf.mxu0
        %v3740 = vadd.f32 %v3564, %v3739
        %3741 = vmatmul.bf16.gmra.mxu0 %v3508
        %v3742 = vpop.f32.mrf.mxu0
        %v3743 = vadd.f32 %v3564, %v3742
        %v3744 = vpop.f32.mrf.mxu0
        %v3745 = vadd.f32 %v3564, %v3744
        %3746 = vmatmul.bf16.gmra.mxu0 %v3510
        %v3747 = vpop.f32.mrf.mxu0
        %v3748 = vadd.f32 %v3564, %v3747
        %v3749 = vpop.f32.mrf.mxu0
        %v3750 = vadd.f32 %v3564, %v3749
        %3751 = vmatmul.bf16.gmra.mxu0 %v3512
        %v3752 = vpop.f32.mrf.mxu0
        %v3753 = vadd.f32 %v3564, %v3752
        %v3754 = vpop.f32.mrf.mxu0
        %v3755 = vadd.f32 %v3564, %v3754
        %3756 = vmatmul.bf16.gmra.mxu0 %v3514
        %v3757 = vpop.f32.mrf.mxu0
        %v3758 = vadd.f32 %v3564, %v3757
        %v3759 = vpop.f32.mrf.mxu0
        %v3760 = vadd.f32 %v3564, %v3759
        %3761 = vmatmul.bf16.gmra.mxu0 %v3516
        %v3762 = vpop.f32.mrf.mxu0
        %v3763 = vadd.f32 %v3564, %v3762
        %v3764 = vpop.f32.mrf.mxu0
        %v3765 = vadd.f32 %v3564, %v3764
        %3766 = vmatmul.bf16.gmra.mxu0 %v3518
        %v3767 = vpop.f32.mrf.mxu0
        %v3768 = vadd.f32 %v3564, %v3767
        %v3769 = vpop.f32.mrf.mxu0
        %v3770 = vadd.f32 %v3564, %v3769
        %3771 = vmatmul.bf16.gmra.mxu0 %v3520
        %v3772 = vpop.f32.mrf.mxu0
        %v3773 = vadd.f32 %v3564, %v3772
        %v3774 = vpop.f32.mrf.mxu0
        %v3775 = vadd.f32 %v3564, %v3774
        %3776 = vmatmul.bf16.gmra.mxu0 %v3522
        %v3777 = vpop.f32.mrf.mxu0
        %v3778 = vadd.f32 %v3564, %v3777
        %v3779 = vpop.f32.mrf.mxu0
        %v3780 = vadd.f32 %v3564, %v3779
        %3781 = vmatmul.bf16.gmra.mxu0 %v3524
        %v3782 = vpop.f32.mrf.mxu0
        %v3783 = vadd.f32 %v3564, %v3782
        %v3784 = vpop.f32.mrf.mxu0
        %v3785 = vadd.f32 %v3564, %v3784
        %3786 = vmatmul.bf16.gmra.mxu0 %v3526
        %v3787 = vpop.f32.mrf.mxu0
        %v3788 = vadd.f32 %v3564, %v3787
        %v3789 = vpop.f32.mrf.mxu0
        %v3790 = vadd.f32 %v3564, %v3789
        %3791 = vmatmul.bf16.gmra.mxu0 %v3528
        %v3792 = vpop.f32.mrf.mxu0
        %v3793 = vadd.f32 %v3564, %v3792
        %v3794 = vpop.f32.mrf.mxu0
        %v3795 = vadd.f32 %v3564, %v3794
        %3796 = vdwg.mxu0
        %3797 = vmatpush.bf16.msra.mxu0 %v3694
        %3798 = vmatpush.bf16.msra.mxu0 %v3692
        %3799 = vmatpush.bf16.msra.mxu0 %v3690
        %3800 = vmatpush.bf16.msra.mxu0 %v3688
        %3801 = vmatpush.bf16.msra.mxu0 %v3686
        %3802 = vmatpush.bf16.msra.mxu0 %v3684
        %3803 = vmatpush.bf16.msra.mxu0 %v3682
        %3804 = vmatpush.bf16.msra.mxu0 %v3680
        %3805 = vmatmul.bf16.gmra.mxu0 %v3507
        %v3806 = vpop.f32.mrf.mxu0
        %v3807 = vadd.f32 %v3738, %v3806
        %v3808 = vpop.f32.mrf.mxu0
        %v3809 = vadd.f32 %v3740, %v3808
        %3810 = vmatmul.bf16.gmra.mxu0 %v3509
        %v3811 = vpop.f32.mrf.mxu0
        %v3812 = vadd.f32 %v3743, %v3811
        %v3813 = vpop.f32.mrf.mxu0
        %v3814 = vadd.f32 %v3745, %v3813
        %3815 = vmatmul.bf16.gmra.mxu0 %v3511
        %v3816 = vpop.f32.mrf.mxu0
        %v3817 = vadd.f32 %v3748, %v3816
        %v3818 = vpop.f32.mrf.mxu0
        %v3819 = vadd.f32 %v3750, %v3818
        %3820 = vmatmul.bf16.gmra.mxu0 %v3513
        %v3821 = vpop.f32.mrf.mxu0
        %v3822 = vadd.f32 %v3753, %v3821
        %v3823 = vpop.f32.mrf.mxu0
        %v3824 = vadd.f32 %v3755, %v3823
        %3825 = vmatmul.bf16.gmra.mxu0 %v3515
        %v3826 = vpop.f32.mrf.mxu0
        %v3827 = vadd.f32 %v3758, %v3826
        %v3828 = vpop.f32.mrf.mxu0
        %v3829 = vadd.f32 %v3760, %v3828
        %3830 = vmatmul.bf16.gmra.mxu0 %v3517
        %v3831 = vpop.f32.mrf.mxu0
        %v3832 = vadd.f32 %v3763, %v3831
        %v3833 = vpop.f32.mrf.mxu0
        %v3834 = vadd.f32 %v3765, %v3833
        %3835 = vmatmul.bf16.gmra.mxu0 %v3519
        %v3836 = vpop.f32.mrf.mxu0
        %v3837 = vadd.f32 %v3768, %v3836
        %v3838 = vpop.f32.mrf.mxu0
        %v3839 = vadd.f32 %v3770, %v3838
        %3840 = vmatmul.bf16.gmra.mxu0 %v3521
        %v3841 = vpop.f32.mrf.mxu0
        %v3842 = vadd.f32 %v3773, %v3841
        %v3843 = vpop.f32.mrf.mxu0
        %v3844 = vadd.f32 %v3775, %v3843
        %3845 = vmatmul.bf16.gmra.mxu0 %v3523
        %v3846 = vpop.f32.mrf.mxu0
        %v3847 = vadd.f32 %v3778, %v3846
        %v3848 = vpop.f32.mrf.mxu0
        %v3849 = vadd.f32 %v3780, %v3848
        %3850 = vmatmul.bf16.gmra.mxu0 %v3525
        %v3851 = vpop.f32.mrf.mxu0
        %v3852 = vadd.f32 %v3783, %v3851
        %v3853 = vpop.f32.mrf.mxu0
        %v3854 = vadd.f32 %v3785, %v3853
        %3855 = vmatmul.bf16.gmra.mxu0 %v3527
        %v3856 = vpop.f32.mrf.mxu0
        %v3857 = vadd.f32 %v3788, %v3856
        %v3858 = vpop.f32.mrf.mxu0
        %v3859 = vadd.f32 %v3790, %v3858
        %3860 = vmatmul.bf16.gmra.mxu0 %v3529
        %v3861 = vpop.f32.mrf.mxu0
        %v3862 = vadd.f32 %v3793, %v3861
        %v3863 = vpop.f32.mrf.mxu0
        %v3864 = vadd.f32 %v3795, %v3863
        %3865 = vdwg.mxu0
        %3866 = vmatpush.bf16.msra.mxu0 %v3679
        %3867 = vmatpush.bf16.msra.mxu0 %v3677
        %3868 = vmatpush.bf16.msra.mxu0 %v3675
        %3869 = vmatpush.bf16.msra.mxu0 %v3673
        %3870 = vmatpush.bf16.msra.mxu0 %v3671
        %3871 = vmatpush.bf16.msra.mxu0 %v3669
        %3872 = vmatpush.bf16.msra.mxu0 %v3667
        %3873 = vmatpush.bf16.msra.mxu0 %v3665
        %3874 = vmatmul.bf16.gmra.mxu0 %v3506
        %v3875 = vpop.f32.mrf.mxu0
        %v3876 = vadd.f32 %v3565, %v3875
        %v3877 = vpop.f32.mrf.mxu0
        %v3878 = vadd.f32 %v3565, %v3877
        %3879 = vmatmul.bf16.gmra.mxu0 %v3508
        %v3880 = vpop.f32.mrf.mxu0
        %v3881 = vadd.f32 %v3565, %v3880
        %v3882 = vpop.f32.mrf.mxu0
        %v3883 = vadd.f32 %v3565, %v3882
        %3884 = vmatmul.bf16.gmra.mxu0 %v3510
        %v3885 = vpop.f32.mrf.mxu0
        %v3886 = vadd.f32 %v3565, %v3885
        %v3887 = vpop.f32.mrf.mxu0
        %v3888 = vadd.f32 %v3565, %v3887
        %3889 = vmatmul.bf16.gmra.mxu0 %v3512
        %v3890 = vpop.f32.mrf.mxu0
        %v3891 = vadd.f32 %v3565, %v3890
        %v3892 = vpop.f32.mrf.mxu0
        %v3893 = vadd.f32 %v3565, %v3892
        %3894 = vmatmul.bf16.gmra.mxu0 %v3514
        %v3895 = vpop.f32.mrf.mxu0
        %v3896 = vadd.f32 %v3565, %v3895
        %v3897 = vpop.f32.mrf.mxu0
        %v3898 = vadd.f32 %v3565, %v3897
        %3899 = vmatmul.bf16.gmra.mxu0 %v3516
        %v3900 = vpop.f32.mrf.mxu0
        %v3901 = vadd.f32 %v3565, %v3900
        %v3902 = vpop.f32.mrf.mxu0
        %v3903 = vadd.f32 %v3565, %v3902
        %3904 = vmatmul.bf16.gmra.mxu0 %v3518
        %v3905 = vpop.f32.mrf.mxu0
        %v3906 = vadd.f32 %v3565, %v3905
        %v3907 = vpop.f32.mrf.mxu0
        %v3908 = vadd.f32 %v3565, %v3907
        %3909 = vmatmul.bf16.gmra.mxu0 %v3520
        %v3910 = vpop.f32.mrf.mxu0
        %v3911 = vadd.f32 %v3565, %v3910
        %v3912 = vpop.f32.mrf.mxu0
        %v3913 = vadd.f32 %v3565, %v3912
        %3914 = vmatmul.bf16.gmra.mxu0 %v3522
        %v3915 = vpop.f32.mrf.mxu0
        %v3916 = vadd.f32 %v3565, %v3915
        %v3917 = vpop.f32.mrf.mxu0
        %v3918 = vadd.f32 %v3565, %v3917
        %3919 = vmatmul.bf16.gmra.mxu0 %v3524
        %v3920 = vpop.f32.mrf.mxu0
        %v3921 = vadd.f32 %v3565, %v3920
        %v3922 = vpop.f32.mrf.mxu0
        %v3923 = vadd.f32 %v3565, %v3922
        %3924 = vmatmul.bf16.gmra.mxu0 %v3526
        %v3925 = vpop.f32.mrf.mxu0
        %v3926 = vadd.f32 %v3565, %v3925
        %v3927 = vpop.f32.mrf.mxu0
        %v3928 = vadd.f32 %v3565, %v3927
        %3929 = vmatmul.bf16.gmra.mxu0 %v3528
        %v3930 = vpop.f32.mrf.mxu0
        %v3931 = vadd.f32 %v3565, %v3930
        %v3932 = vpop.f32.mrf.mxu0
        %v3933 = vadd.f32 %v3565, %v3932
        %3934 = vdwg.mxu0
        %3935 = vmatpush.bf16.msra.mxu0 %v3695
        %3936 = vmatpush.bf16.msra.mxu0 %v3693
        %3937 = vmatpush.bf16.msra.mxu0 %v3691
        %3938 = vmatpush.bf16.msra.mxu0 %v3689
        %3939 = vmatpush.bf16.msra.mxu0 %v3687
        %3940 = vmatpush.bf16.msra.mxu0 %v3685
        %3941 = vmatpush.bf16.msra.mxu0 %v3683
        %3942 = vmatpush.bf16.msra.mxu0 %v3681
        %3943 = vmatmul.bf16.gmra.mxu0 %v3507
        %v3944 = vpop.f32.mrf.mxu0
        %v3945 = vadd.f32 %v3876, %v3944
        %v3946 = vpop.f32.mrf.mxu0
        %v3947 = vadd.f32 %v3878, %v3946
        %3948 = vmatmul.bf16.gmra.mxu0 %v3509
        %v3949 = vpop.f32.mrf.mxu0
        %v3950 = vadd.f32 %v3881, %v3949
        %v3951 = vpop.f32.mrf.mxu0
        %v3952 = vadd.f32 %v3883, %v3951
        %3953 = vmatmul.bf16.gmra.mxu0 %v3511
        %v3954 = vpop.f32.mrf.mxu0
        %v3955 = vadd.f32 %v3886, %v3954
        %v3956 = vpop.f32.mrf.mxu0
        %v3957 = vadd.f32 %v3888, %v3956
        %3958 = vmatmul.bf16.gmra.mxu0 %v3513
        %v3959 = vpop.f32.mrf.mxu0
        %v3960 = vadd.f32 %v3891, %v3959
        %v3961 = vpop.f32.mrf.mxu0
        %v3962 = vadd.f32 %v3893, %v3961
        %3963 = vmatmul.bf16.gmra.mxu0 %v3515
        %v3964 = vpop.f32.mrf.mxu0
        %v3965 = vadd.f32 %v3896, %v3964
        %v3966 = vpop.f32.mrf.mxu0
        %v3967 = vadd.f32 %v3898, %v3966
        %3968 = vmatmul.bf16.gmra.mxu0 %v3517
        %v3969 = vpop.f32.mrf.mxu0
        %v3970 = vadd.f32 %v3901, %v3969
        %v3971 = vpop.f32.mrf.mxu0
        %v3972 = vadd.f32 %v3903, %v3971
        %3973 = vmatmul.bf16.gmra.mxu0 %v3519
        %v3974 = vpop.f32.mrf.mxu0
        %v3975 = vadd.f32 %v3906, %v3974
        %v3976 = vpop.f32.mrf.mxu0
        %v3977 = vadd.f32 %v3908, %v3976
        %3978 = vmatmul.bf16.gmra.mxu0 %v3521
        %v3979 = vpop.f32.mrf.mxu0
        %v3980 = vadd.f32 %v3911, %v3979
        %v3981 = vpop.f32.mrf.mxu0
        %v3982 = vadd.f32 %v3913, %v3981
        %3983 = vmatmul.bf16.gmra.mxu0 %v3523
        %v3984 = vpop.f32.mrf.mxu0
        %v3985 = vadd.f32 %v3916, %v3984
        %v3986 = vpop.f32.mrf.mxu0
        %v3987 = vadd.f32 %v3918, %v3986
        %3988 = vmatmul.bf16.gmra.mxu0 %v3525
        %v3989 = vpop.f32.mrf.mxu0
        %v3990 = vadd.f32 %v3921, %v3989
        %v3991 = vpop.f32.mrf.mxu0
        %v3992 = vadd.f32 %v3923, %v3991
        %3993 = vmatmul.bf16.gmra.mxu0 %v3527
        %v3994 = vpop.f32.mrf.mxu0
        %v3995 = vadd.f32 %v3926, %v3994
        %v3996 = vpop.f32.mrf.mxu0
        %v3997 = vadd.f32 %v3928, %v3996
        %3998 = vmatmul.bf16.gmra.mxu0 %v3529
        %v3999 = vpop.f32.mrf.mxu0
        %v4000 = vadd.f32 %v3931, %v3999
        %v4001 = vpop.f32.mrf.mxu0
        %v4002 = vadd.f32 %v3933, %v4001
        %4003 = vdwg.mxu0
        %4004 = vst [vmem:[%s460] sm:$0xff] %v3807
        %4005 = vst [vmem:[%s460 + $0x8] sm:$0xff] %v3945
        %4006 = vst [vmem:[%s460 + $0x10] sm:$0xff] %v3809
        %4007 = vst [vmem:[%s460 + $0x18] sm:$0xff] %v3947
        %4008 = vst [vmem:[%s460 + $0x20] sm:$0xff] %v3812
        %4009 = vst [vmem:[%s460 + $0x28] sm:$0xff] %v3950
        %4010 = vst [vmem:[%s460 + $0x30] sm:$0xff] %v3814
        %4011 = vst [vmem:[%s460 + $0x38] sm:$0xff] %v3952
        %4012 = vst [vmem:[%s460 + $0x40] sm:$0xff] %v3817
        %4013 = vst [vmem:[%s460 + $0x48] sm:$0xff] %v3955
        %4014 = vst [vmem:[%s460 + $0x50] sm:$0xff] %v3819
        %4015 = vst [vmem:[%s460 + $0x58] sm:$0xff] %v3957
        %4016 = vst [vmem:[%s460 + $0x60] sm:$0xff] %v3822
        %4017 = vst [vmem:[%s460 + $0x68] sm:$0xff] %v3960
        %4018 = vst [vmem:[%s460 + $0x70] sm:$0xff] %v3824
        %4019 = vst [vmem:[%s460 + $0x78] sm:$0xff] %v3962
        %4020 = vst [vmem:[%s460 + $0x80] sm:$0xff] %v3827
        %4021 = vst [vmem:[%s460 + $0x88] sm:$0xff] %v3965
        %4022 = vst [vmem:[%s460 + $0x90] sm:$0xff] %v3829
        %4023 = vst [vmem:[%s460 + $0x98] sm:$0xff] %v3967
        %4024 = vst [vmem:[%s460 + $0xa0] sm:$0xff] %v3832
        %4025 = vst [vmem:[%s460 + $0xa8] sm:$0xff] %v3970
        %4026 = vst [vmem:[%s460 + $0xb0] sm:$0xff] %v3834
        %4027 = vst [vmem:[%s460 + $0xb8] sm:$0xff] %v3972
        %4028 = vst [vmem:[%s460 + $0xc0] sm:$0xff] %v3837
        %4029 = vst [vmem:[%s460 + $0xc8] sm:$0xff] %v3975
        %4030 = vst [vmem:[%s460 + $0xd0] sm:$0xff] %v3839
        %4031 = vst [vmem:[%s460 + $0xd8] sm:$0xff] %v3977
        %4032 = vst [vmem:[%s460 + $0xe0] sm:$0xff] %v3842
        %4033 = vst [vmem:[%s460 + $0xe8] sm:$0xff] %v3980
        %4034 = vst [vmem:[%s460 + $0xf0] sm:$0xff] %v3844
        %4035 = vst [vmem:[%s460 + $0xf8] sm:$0xff] %v3982
        %4036 = vst [vmem:[%s460 + $0x100] sm:$0xff] %v3847
        %4037 = vst [vmem:[%s460 + $0x108] sm:$0xff] %v3985
        %4038 = vst [vmem:[%s460 + $0x110] sm:$0xff] %v3849
        %4039 = vst [vmem:[%s460 + $0x118] sm:$0xff] %v3987
        %4040 = vst [vmem:[%s460 + $0x120] sm:$0xff] %v3852
        %4041 = vst [vmem:[%s460 + $0x128] sm:$0xff] %v3990
        %4042 = vst [vmem:[%s460 + $0x130] sm:$0xff] %v3854
        %4043 = vst [vmem:[%s460 + $0x138] sm:$0xff] %v3992
        %4044 = vst [vmem:[%s460 + $0x140] sm:$0xff] %v3857
        %4045 = vst [vmem:[%s460 + $0x148] sm:$0xff] %v3995
        %4046 = vst [vmem:[%s460 + $0x150] sm:$0xff] %v3859
        %4047 = vst [vmem:[%s460 + $0x158] sm:$0xff] %v3997
        %4048 = vst [vmem:[%s460 + $0x160] sm:$0xff] %v3862
        %4049 = vst [vmem:[%s460 + $0x168] sm:$0xff] %v4000
        %4050 = vst [vmem:[%s460 + $0x170] sm:$0xff] %v3864
        %4051 = vst [vmem:[%s460 + $0x178] sm:$0xff] %v4002
        %s4052 = sand.u32 %s217, 1
        %s4053 = scalar_lea.sflag [#allocation4], %s4052
        %s4054 = sand.u32 %s217, 1
        %s4055 = smul.addr %s4054, 384
        %s4056 = scalar_lea.vmem [#allocation16], %s4055
        // Predicated region
        $region85: #{fused_forward.1} parent=51 // pred_check
          %p4057 = pneg %p227
        $region86: #{fused_forward.1} parent=51 // pred_check_branch
          %4059 = sbr.rel (%p4057) target = $region88
        $region87: #{fused_forward.1} parent=51 // pred_region
          %s4060 = smul.u32 24, %s31
          %4062 = vsyncadd %s4053, 0
          %s4063 = smul.addr %s4060, 2
          %s4064 = smul.addr %s4063, 8
          %s4065 = scalar_lea.hbm %s8, %s4064
          %s4066 = sshll.u32 %s4056, 4
          %s4067 = int_to_ptr.vmem [resolvable:$true] %s4066
          %s4068 = sshll.u32 %s4065, 4
          %s4069 = int_to_ptr.hbm [resolvable:$true] %s4068
          %4074 = dma.vmem_to_hbm [thread:$0]  %s4067, 6144, %s4069, %s4053, 256, 256, 16
        $region88: #{fused_forward.1} parent=51 // pred_fallthru
          _
      $region52: #{fused_forward.1} parent=5 // pred_fallthru
        _
      %p4075 = scmp.le.s32.totalorder 2, %s26
      // Predicated region
      $region89: #{fused_forward.1} parent=5 // pred_check
        %p4076 = pneg %p4075
      $region90: #{fused_forward.1} parent=5 // pred_check_branch
        %4078 = sbr.rel (%p4076) target = $region92
      $region91: #{fused_forward.1} parent=5 // pred_region
        %s4079 = ssub.s32 %s26, 2
        // Predicated region
        $region93: #{fused_forward.1} parent=91 // pred_check
          %p4080 = pneg %p233
        $region94: #{fused_forward.1} parent=91 // pred_check_branch
          %4082 = sbr.rel (%p4080) target = $region96
        $region95: #{fused_forward.1} parent=91 // pred_region
          %s4083 = sand.u32 %s218, 1
          %s4084 = scalar_lea.sflag [#allocation4], %s4083
          %s4085 = sand.u32 %s218, 1
          %s4086 = smul.addr %s4085, 384
          %s4087 = scalar_lea.vmem [#allocation16], %s4086
          %4089 = dma.done %s4084, 6144
        $region96: #{fused_forward.1} parent=91 // pred_fallthru
          _
      $region92: #{fused_forward.1} parent=5 // pred_fallthru
        _
    $region6: #{fused_forward.1} parent=1 // loop_footer
      %s30 = sadd.s32 1, %s26
    $region7: #{fused_forward.1} parent=1 // loop_footer_branch
      %25 = sbr.rel target = $region3
    $region8: #{fused_forward.1} parent=1 // loop_exit
      _
    %4090 = vsyncpa [#allocation3], 1
    %s4091 = scalar_lea.sflag [#allocation3], 1
    %4092 = vsyncpa %s4091, 1
    %4093 = vsyncpa [#allocation6], 1
    %4094 = vsyncpa [#allocation9], 1
    %s4095 = scalar_lea.sflag [#allocation9], 1
    %4096 = vsyncpa %s4095, 1
    %4097 = vsyncpa [#allocation12], 1
    %4098 = vsyncpa [#allocation15], 1
    %4099 = vsyncpa [#allocation4], 1
    %s4100 = scalar_lea.sflag [#allocation4], 1
    %4101 = vsyncpa %s4100, 1

</llo_original>
